<compile_context>
chip_gen: v7x
topology: tpu7x:2x2x1
jax: 0.10.0
libtpu: 0.0.40
codegen_flags: <defaults>
</compile_context>

<pallas_src>
import jax
import jax.numpy as jnp
from jax import lax
from jax.experimental import pallas as pl
from jax.experimental.pallas import tpu as pltpu


def _full_spec(shape):
    nd = len(shape)
    return pl.BlockSpec(shape, lambda *_: (0,) * nd)


# ---------------------------------------------------------------------------
# Single fused kernel: BN -> Linear+ReLU -> LSTM -> Linear -> segmented Softmax
# ---------------------------------------------------------------------------
def _make_actor_kernel(Bp, T, H, A, K, AK, n_real_rows):
    def kernel(x_ref, gamma_ref, beta_ref, w1_ref, b1_ref,
               wih_ref, whh_ref, bl_ref, w2_ref, b2_ref,
               h0_ref, c0_ref,
               probs_ref, hn_ref, cn_ref,
               xw_scr, hseq_scr):
        f32 = jnp.float32
        AKp = w2_ref.shape[1]

        # ---- 1) BatchNorm1d, training-mode batch stats over the REAL rows ----
        # Padded batch rows are zero, so plain sums with a fixed divisor are
        # exactly the statistics over the B*T real rows (biased variance).
        x = x_ref[...]                                           # (T*Bp, D)
        inv_n = 1.0 / float(n_real_rows)
        mean = jnp.sum(x, axis=0, keepdims=True) * inv_n
        ex2 = jnp.sum(x * x, axis=0, keepdims=True) * inv_n
        var = ex2 - mean * mean
        xn = (x - mean) * lax.rsqrt(var + 1e-5) * gamma_ref[...] + beta_ref[...]

        # ---- 2) Linear(obs -> fc_hidden) + ReLU ----
        h1 = jnp.maximum(
            jnp.dot(xn, w1_ref[...], preferred_element_type=f32) + b1_ref[...],
            0.0)                                                 # (T*Bp, Hf)

        # ---- 3) LSTM input projection hoisted out of the time loop ----
        xw_scr[...] = (jnp.dot(h1, wih_ref[...], preferred_element_type=f32)
                       + bl_ref[...])                            # (T*Bp, 4H)

        # ---- 4) LSTM recurrence; gate column order is [i, f, o, g] ----
        whh = whh_ref[...]                                       # (H, 4H)

        def step(t, carry):
            h, c = carry
            off = pl.multiple_of(t * Bp, Bp)
            xw_t = xw_scr[pl.ds(off, Bp), :]                     # one dense read
            gates = xw_t + jnp.dot(h, whh, preferred_element_type=f32)  # (Bp,4H)
            sig = jax.nn.sigmoid(gates[:, :3 * H])               # i, f, o at once
            i_g = sig[:, 0 * H:1 * H]
            f_g = sig[:, 1 * H:2 * H]
            o_g = sig[:, 2 * H:3 * H]
            g_g = jnp.tanh(gates[:, 3 * H:4 * H])
            c = f_g * c + i_g * g_g
            h = o_g * jnp.tanh(c)
            hseq_scr[pl.ds(off, Bp), :] = h                      # one dense store
            return h, c

        h, c = lax.fori_loop(0, T, step, (h0_ref[...], c0_ref[...]), unroll=True)
        hn_ref[...] = h
        cn_ref[...] = c

        # ---- 5) Output Linear over all padded rows, lane-padded to AKp ----
        logits = (jnp.dot(hseq_scr[...], w2_ref[...], preferred_element_type=f32)
                  + b2_ref[...])                                 # (T*Bp, AKp)

        # ---- 6) Segmented softmax (per K-wide action group), lane-dense ----
        # Per-segment max (not the global row max) so a segment far below the
        # row max cannot underflow to an all-zero sum (0/0 -> NaN).
        cols = lax.broadcasted_iota(jnp.int32, (1, AKp), 1)
        segmax = jnp.zeros_like(logits)
        for a in range(A):
            in_seg = (cols >= a * K) & (cols < (a + 1) * K)
            m_a = jnp.max(jnp.where(in_seg, logits, -1e30),
                          axis=-1, keepdims=True)
            segmax = jnp.where(in_seg, m_a, segmax)
        e = jnp.exp(logits - segmax)
        ssum = jnp.zeros_like(logits)
        for a in range(A):
            in_seg = (cols >= a * K) & (cols < (a + 1) * K)
            s_a = jnp.sum(jnp.where(in_seg, e, 0.0), axis=-1, keepdims=True)
            ssum = jnp.where(in_seg, s_a, ssum)
        probs_ref[...] = e * pl.reciprocal(jnp.where(ssum > 0.0, ssum, 1.0),
                                           approx=False)

    return kernel


# ---------------------------------------------------------------------------
# Wrapper: Actor.forward
# ---------------------------------------------------------------------------
def actor_forward(x, params, hidden_state=None):
    f32 = jnp.float32
    B, T, D = x.shape
    Hf = params["w1"].shape[1]
    H = params["whh"].shape[0]
    A, K = params["out_dim"]
    AK = A * K
    AKp = ((AK + 127) // 128) * 128        # 220 -> 256, lane-dense output head
    Bp = ((B + 7) // 8) * 8                # pad batch to a full sublane tile
    R = T * Bp

    # Time-major layout, batch zero-padded to Bp rows.
    x_tm = jnp.transpose(x.astype(f32), (1, 0, 2))               # (T, B, D)
    x_tm = jnp.pad(x_tm, ((0, 0), (0, Bp - B), (0, 0))).reshape(R, D)

    if hidden_state is None:               # PyTorch default: zeros
        h0 = jnp.zeros((Bp, H), f32)
        c0 = jnp.zeros((Bp, H), f32)
    else:
        h0 = jnp.pad(hidden_state[0].reshape(B, H).astype(f32),
                     ((0, Bp - B), (0, 0)))
        c0 = jnp.pad(hidden_state[1].reshape(B, H).astype(f32),
                     ((0, Bp - B), (0, 0)))

    # Permute LSTM gate columns from PyTorch order [i,f,g,o] to [i,f,o,g] so the
    # kernel applies sigmoid to one contiguous 3H slice and tanh to one H slice.
    perm = jnp.concatenate([jnp.arange(0, 2 * H),
                            jnp.arange(3 * H, 4 * H),
                            jnp.arange(2 * H, 3 * H)])
    wih_p = params["wih"][:, perm]
    whh_p = params["whh"][:, perm]
    bl_p = params["blstm"][:, perm]

    # Zero-pad the output head to a full lane tile.
    w2p = jnp.pad(params["w2"], ((0, 0), (0, AKp - AK)))
    b2p = jnp.pad(params["b2"], ((0, 0), (0, AKp - AK)))

    kernel = _make_actor_kernel(Bp, T, H, A, K, AK, B * T)
    probs, h_n, c_n = pl.pallas_call(
        kernel,
        out_shape=(jax.ShapeDtypeStruct((R, AKp), f32),
                   jax.ShapeDtypeStruct((Bp, H), f32),
                   jax.ShapeDtypeStruct((Bp, H), f32)),
        grid=(1,),
        in_specs=[_full_spec((R, D)), _full_spec((1, D)), _full_spec((1, D)),
                  _full_spec((D, Hf)), _full_spec((1, Hf)),
                  _full_spec((Hf, 4 * H)), _full_spec((H, 4 * H)),
                  _full_spec((1, 4 * H)),
                  _full_spec((H, AKp)), _full_spec((1, AKp)),
                  _full_spec((Bp, H)), _full_spec((Bp, H))],
        out_specs=(_full_spec((R, AKp)), _full_spec((Bp, H)), _full_spec((Bp, H))),
        scratch_shapes=[pltpu.VMEM((R, 4 * H), f32),   # xw, time-major
                        pltpu.VMEM((R, H), f32)],      # h sequence, time-major
        compiler_params=pltpu.CompilerParams(dimension_semantics=("arbitrary",)),
    )(x_tm, params["gamma"], params["beta"], params["w1"], params["b1"],
      wih_p, whh_p, bl_p, w2p, b2p, h0, c0)

    # Undo the time-major / padded layout with cheap reshapes + one transpose.
    probs = probs.reshape(T, Bp, AKp)[:, :B, :AK]
    action_dist = jnp.transpose(probs, (1, 0, 2)).reshape(B, T, A, K)
    hidden_out = (h_n[:B].reshape(1, B, H), c_n[:B].reshape(1, B, H))
    return action_dist, hidden_out


# ---------------------------------------------------------------------------
# Pure-JAX reference (PyTorch semantics) for correctness checking
# ---------------------------------------------------------------------------
def actor_forward_ref(x, params, hidden_state=None):
    hi = lax.Precision.HIGHEST
    B, T, D = x.shape
    H = params["whh"].shape[0]
    A, K = params["out_dim"]
    xf = x.reshape(B * T, D).astype(jnp.float32)
    mean = jnp.mean(xf, axis=0, keepdims=True)
    var = jnp.mean((xf - mean) ** 2, axis=0, keepdims=True)
    xn = (xf - mean) * lax.rsqrt(var + 1e-5) * params["gamma"] + params["beta"]
    h1 = jnp.maximum(jnp.dot(xn, params["w1"], precision=hi) + params["b1"], 0.0)
    h1 = h1.reshape(B, T, -1)
    if hidden_state is None:
        h = jnp.zeros((B, H), jnp.float32)
        c = jnp.zeros((B, H), jnp.float32)
    else:
        h = hidden_state[0].reshape(B, H).astype(jnp.float32)
        c = hidden_state[1].reshape(B, H).astype(jnp.float32)
    hs = []
    for t in range(T):
        gates = (jnp.dot(h1[:, t], params["wih"], precision=hi)
                 + jnp.dot(h, params["whh"], precision=hi) + params["blstm"])
        i_g = jax.nn.sigmoid(gates[:, 0 * H:1 * H])
        f_g = jax.nn.sigmoid(gates[:, 1 * H:2 * H])
        g_g = jnp.tanh(gates[:, 2 * H:3 * H])
        o_g = jax.nn.sigmoid(gates[:, 3 * H:4 * H])
        c = f_g * c + i_g * g_g
        h = o_g * jnp.tanh(c)
        hs.append(h)
    hs = jnp.stack(hs, axis=1)                                   # (B, T, H)
    logits = jnp.dot(hs, params["w2"], precision=hi) + params["b2"]
    probs = jax.nn.softmax(logits.reshape(B, T, A, K), axis=-1)
    return probs, (h[None], c[None])


# ---------------------------------------------------------------------------
# Deterministic parameter init (synthetic; no checkpoint loading)
# ---------------------------------------------------------------------------
def make_params(key, obs_dim, fc_hidden, lstm_hidden, out_dim=(20, 11)):
    A, K = out_dim
    ks = jax.random.split(key, 7)

    def init(k, shape, scale=0.1):
        return (scale * jax.random.normal(k, shape)).astype(jnp.float32)

    return {
        "gamma": jnp.ones((1, obs_dim), jnp.float32),      # BatchNorm1d weight
        "beta": jnp.zeros((1, obs_dim), jnp.float32),      # BatchNorm1d bias
        "w1": init(ks[0], (obs_dim, fc_hidden)),           # Linear (in x out)
        "b1": init(ks[1], (1, fc_hidden)),
        "wih": init(ks[2], (fc_hidden, 4 * lstm_hidden)),  # LSTM W_ih^T [i,f,g,o]
        "whh": init(ks[3], (lstm_hidden, 4 * lstm_hidden)),
        "blstm": init(ks[4], (1, 4 * lstm_hidden)),        # b_ih + b_hh combined
        "w2": init(ks[5], (lstm_hidden, A * K)),
        "b2": init(ks[6], (1, A * K)),
        "out_dim": (A, K),
    }


if __name__ == "__main__":
    B, T = 2, 8
    obs_dim, fc_hidden, lstm_hidden = 32, 64, 32

    key = jax.random.PRNGKey(0)
    k_x, k_p = jax.random.split(key)
    x = jax.random.normal(k_x, (B, T, obs_dim), dtype=jnp.float32)
    params = make_params(k_p, obs_dim, fc_hidden, lstm_hidden)

    action_dist, (h_n, c_n) = actor_forward(x, params, hidden_state=None)
    jax.block_until_ready(action_dist)
    jax.block_until_ready(h_n)
    jax.block_until_ready(c_n)

    assert action_dist.shape == (B, T, 20, 11)
    assert h_n.shape == (1, B, lstm_hidden) and c_n.shape == (1, B, lstm_hidden)
    # softmax rows must sum to 1 and be strictly positive
    assert bool(jnp.allclose(jnp.sum(action_dist, axis=-1), 1.0, atol=1e-5))
    assert bool(jnp.all(action_dist > 0.0))

    # compare against the pure-JAX reference of the PyTorch module
    ref_probs, (ref_h, ref_c) = actor_forward_ref(x, params, hidden_state=None)
    assert bool(jnp.allclose(action_dist, ref_probs, atol=2e-3, rtol=2e-3))
    assert bool(jnp.allclose(h_n, ref_h, atol=2e-3, rtol=2e-3))
    assert bool(jnp.allclose(c_n, ref_c, atol=2e-3, rtol=2e-3))

    print("KERNEL_OK")
</pallas_src>

<mosaic_0001>
module attributes {stable_mosaic.version = 11 : i64} {
  func.func @kernel(%arg0: i32, %arg1: memref<64x32xf32, #tpu.memory_space<vmem>>, %arg2: memref<1x32xf32, #tpu.memory_space<vmem>>, %arg3: memref<1x32xf32, #tpu.memory_space<vmem>>, %arg4: memref<32x64xf32, #tpu.memory_space<vmem>>, %arg5: memref<1x64xf32, #tpu.memory_space<vmem>>, %arg6: memref<64x128xf32, #tpu.memory_space<vmem>>, %arg7: memref<32x128xf32, #tpu.memory_space<vmem>>, %arg8: memref<1x128xf32, #tpu.memory_space<vmem>>, %arg9: memref<32x256xf32, #tpu.memory_space<vmem>>, %arg10: memref<1x256xf32, #tpu.memory_space<vmem>>, %arg11: memref<8x32xf32, #tpu.memory_space<vmem>>, %arg12: memref<8x32xf32, #tpu.memory_space<vmem>>, %arg13: memref<64x256xf32, #tpu.memory_space<vmem>>, %arg14: memref<8x32xf32, #tpu.memory_space<vmem>>, %arg15: memref<8x32xf32, #tpu.memory_space<vmem>>, %arg16: memref<64x128xf32, #tpu.memory_space<vmem>>, %arg17: memref<64x32xf32, #tpu.memory_space<vmem>>) attributes {dimension_semantics = [#tpu.dimension_semantics<arbitrary>], iteration_bounds = array<i64: 1>, scalar_prefetch = 0 : i64, scratch_operands = 2 : i64, tpu.core_type = #tpu.core_type<tc>, window_params = [{pipeline_mode = #tpu.pipeline_mode<synchronous>, transform_indices = @transform_0, window_bounds = array<i64: 64, 32>}, {pipeline_mode = #tpu.pipeline_mode<synchronous>, transform_indices = @transform_1, window_bounds = array<i64: 1, 32>}, {pipeline_mode = #tpu.pipeline_mode<synchronous>, transform_indices = @transform_2, window_bounds = array<i64: 1, 32>}, {pipeline_mode = #tpu.pipeline_mode<synchronous>, transform_indices = @transform_3, window_bounds = array<i64: 32, 64>}, {pipeline_mode = #tpu.pipeline_mode<synchronous>, transform_indices = @transform_4, window_bounds = array<i64: 1, 64>}, {pipeline_mode = #tpu.pipeline_mode<synchronous>, transform_indices = @transform_5, window_bounds = array<i64: 64, 128>}, {pipeline_mode = #tpu.pipeline_mode<synchronous>, transform_indices = @transform_6, window_bounds = array<i64: 32, 128>}, {pipeline_mode = #tpu.pipeline_mode<synchronous>, transform_indices = @transform_7, window_bounds = array<i64: 1, 128>}, {pipeline_mode = #tpu.pipeline_mode<synchronous>, transform_indices = @transform_8, window_bounds = array<i64: 32, 256>}, {pipeline_mode = #tpu.pipeline_mode<synchronous>, transform_indices = @transform_9, window_bounds = array<i64: 1, 256>}, {pipeline_mode = #tpu.pipeline_mode<synchronous>, transform_indices = @transform_10, window_bounds = array<i64: 8, 32>}, {pipeline_mode = #tpu.pipeline_mode<synchronous>, transform_indices = @transform_11, window_bounds = array<i64: 8, 32>}, {pipeline_mode = #tpu.pipeline_mode<synchronous>, transform_indices = @transform_12, window_bounds = array<i64: 64, 256>}, {pipeline_mode = #tpu.pipeline_mode<synchronous>, transform_indices = @transform_13, window_bounds = array<i64: 8, 32>}, {pipeline_mode = #tpu.pipeline_mode<synchronous>, transform_indices = @transform_14, window_bounds = array<i64: 8, 32>}]} {
    %c0 = arith.constant 0 : index
    %c0_0 = arith.constant 0 : index
    %0 = vector.load %arg1[%c0, %c0_0] : memref<64x32xf32, #tpu.memory_space<vmem>>, vector<64x32xf32>
    %cst = arith.constant dense<0.000000e+00> : vector<32xf32>
    %1 = vector.multi_reduction <add>, %0, %cst [0] : vector<64x32xf32> to vector<32xf32>
    %2 = vector.shape_cast %1 : vector<32xf32> to vector<1x32xf32>
    %cst_1 = arith.constant 6.250000e-02 : f32
    %3 = vector.broadcast %cst_1 : f32 to vector<1x32xf32>
    %4 = arith.mulf %2, %3 : vector<1x32xf32>
    %5 = arith.mulf %0, %0 : vector<64x32xf32>
    %cst_2 = arith.constant dense<0.000000e+00> : vector<32xf32>
    %6 = vector.multi_reduction <add>, %5, %cst_2 [0] : vector<64x32xf32> to vector<32xf32>
    %7 = vector.shape_cast %6 : vector<32xf32> to vector<1x32xf32>
    %cst_3 = arith.constant 6.250000e-02 : f32
    %8 = vector.broadcast %cst_3 : f32 to vector<1x32xf32>
    %9 = arith.mulf %7, %8 : vector<1x32xf32>
    %10 = arith.mulf %4, %4 : vector<1x32xf32>
    %11 = arith.subf %9, %10 : vector<1x32xf32>
    %12 = vector.broadcast %4 : vector<1x32xf32> to vector<64x32xf32>
    %13 = arith.subf %0, %12 : vector<64x32xf32>
    %cst_4 = arith.constant 9.99999974E-6 : f32
    %14 = vector.broadcast %cst_4 : f32 to vector<1x32xf32>
    %15 = arith.addf %11, %14 : vector<1x32xf32>
    %16 = math.rsqrt %15 : vector<1x32xf32>
    %17 = vector.broadcast %16 : vector<1x32xf32> to vector<64x32xf32>
    %18 = arith.mulf %13, %17 : vector<64x32xf32>
    %c0_5 = arith.constant 0 : index
    %c0_6 = arith.constant 0 : index
    %19 = vector.load %arg2[%c0_5, %c0_6] : memref<1x32xf32, #tpu.memory_space<vmem>>, vector<1x32xf32>
    %20 = vector.broadcast %19 : vector<1x32xf32> to vector<64x32xf32>
    %21 = arith.mulf %18, %20 : vector<64x32xf32>
    %c0_7 = arith.constant 0 : index
    %c0_8 = arith.constant 0 : index
    %22 = vector.load %arg3[%c0_7, %c0_8] : memref<1x32xf32, #tpu.memory_space<vmem>>, vector<1x32xf32>
    %23 = vector.broadcast %22 : vector<1x32xf32> to vector<64x32xf32>
    %24 = arith.addf %21, %23 : vector<64x32xf32>
    %c0_9 = arith.constant 0 : index
    %c0_10 = arith.constant 0 : index
    %25 = vector.load %arg4[%c0_9, %c0_10] : memref<32x64xf32, #tpu.memory_space<vmem>>, vector<32x64xf32>
    %cst_11 = arith.constant dense<0.000000e+00> : vector<64x64xf32>
    %26 = tpu.matmul %24, %25, %cst_11 {dimension_numbers = #tpu.dot_dimension_numbers<[1], [0], [0], [1], [0, 0, 1, 1], [], []>} : vector<64x32xf32>, vector<32x64xf32>, vector<64x64xf32> -> vector<64x64xf32>
    %c0_12 = arith.constant 0 : index
    %c0_13 = arith.constant 0 : index
    %27 = vector.load %arg5[%c0_12, %c0_13] : memref<1x64xf32, #tpu.memory_space<vmem>>, vector<1x64xf32>
    %28 = vector.broadcast %27 : vector<1x64xf32> to vector<64x64xf32>
    %29 = arith.addf %26, %28 : vector<64x64xf32>
    %cst_14 = arith.constant 0.000000e+00 : f32
    %30 = vector.broadcast %cst_14 : f32 to vector<64x64xf32>
    %31 = arith.maximumf %29, %30 : vector<64x64xf32>
    %c0_15 = arith.constant 0 : index
    %c0_16 = arith.constant 0 : index
    %32 = vector.load %arg6[%c0_15, %c0_16] : memref<64x128xf32, #tpu.memory_space<vmem>>, vector<64x128xf32>
    %cst_17 = arith.constant dense<0.000000e+00> : vector<64x128xf32>
    %33 = tpu.matmul %31, %32, %cst_17 {dimension_numbers = #tpu.dot_dimension_numbers<[1], [0], [0], [1], [0, 0, 1, 1], [], []>} : vector<64x64xf32>, vector<64x128xf32>, vector<64x128xf32> -> vector<64x128xf32>
    %c0_18 = arith.constant 0 : index
    %c0_19 = arith.constant 0 : index
    %34 = vector.load %arg8[%c0_18, %c0_19] : memref<1x128xf32, #tpu.memory_space<vmem>>, vector<1x128xf32>
    %35 = vector.broadcast %34 : vector<1x128xf32> to vector<64x128xf32>
    %36 = arith.addf %33, %35 : vector<64x128xf32>
    %c0_20 = arith.constant 0 : index
    %c0_21 = arith.constant 0 : index
    %37 = vector.load %arg16[%c0_20, %c0_21] : memref<64x128xf32, #tpu.memory_space<vmem>>, vector<64x128xf32>
    tpu.vector_store %arg16[%c0_20, %c0_21], %36 {strides = array<i32>} : memref<64x128xf32, #tpu.memory_space<vmem>>, vector<64x128xf32>,
    %c0_22 = arith.constant 0 : index
    %c0_23 = arith.constant 0 : index
    %38 = vector.load %arg7[%c0_22, %c0_23] : memref<32x128xf32, #tpu.memory_space<vmem>>, vector<32x128xf32>
    %c0_24 = arith.constant 0 : index
    %c0_25 = arith.constant 0 : index
    %39 = vector.load %arg11[%c0_24, %c0_25] : memref<8x32xf32, #tpu.memory_space<vmem>>, vector<8x32xf32>
    %c0_26 = arith.constant 0 : index
    %c0_27 = arith.constant 0 : index
    %40 = vector.load %arg12[%c0_26, %c0_27] : memref<8x32xf32, #tpu.memory_space<vmem>>, vector<8x32xf32>
    %c0_i32 = arith.constant 0 : i32
    %c8_i32 = arith.constant 8 : i32
    %41 = arith.muli %c0_i32, %c8_i32 : i32
    %42 = tpu.assume_multiple %41, 8 : i32
    %43 = arith.index_cast %42 : i32 to index
    %c0_28 = arith.constant 0 : index
    %44 = vector.load %arg16[%43, %c0_28] : memref<64x128xf32, #tpu.memory_space<vmem>>, vector<8x128xf32>
    %cst_29 = arith.constant dense<0.000000e+00> : vector<8x128xf32>
    %45 = tpu.matmul %39, %38, %cst_29 {dimension_numbers = #tpu.dot_dimension_numbers<[1], [0], [0], [1], [0, 0, 1, 1], [], []>} : vector<8x32xf32>, vector<32x128xf32>, vector<8x128xf32> -> vector<8x128xf32>
    %46 = arith.addf %44, %45 : vector<8x128xf32>
    %47 = vector.extract_strided_slice %46 {offsets = [0, 0], sizes = [8, 96], strides = [1, 1]} : vector<8x128xf32> to vector<8x96xf32>
    %48 = arith.negf %47 : vector<8x96xf32>
    %49 = math.exp %48 : vector<8x96xf32>
    %cst_30 = arith.constant 1.000000e+00 : f32
    %50 = vector.broadcast %cst_30 : f32 to vector<8x96xf32>
    %51 = arith.addf %50, %49 : vector<8x96xf32>
    %52 = arith.divf %50, %51 : vector<8x96xf32>
    %53 = vector.extract_strided_slice %52 {offsets = [0, 0], sizes = [8, 32], strides = [1, 1]} : vector<8x96xf32> to vector<8x32xf32>
    %54 = vector.extract_strided_slice %52 {offsets = [0, 32], sizes = [8, 32], strides = [1, 1]} : vector<8x96xf32> to vector<8x32xf32>
    %55 = vector.extract_strided_slice %52 {offsets = [0, 64], sizes = [8, 32], strides = [1, 1]} : vector<8x96xf32> to vector<8x32xf32>
    %56 = vector.extract_strided_slice %46 {offsets = [0, 96], sizes = [8, 32], strides = [1, 1]} : vector<8x128xf32> to vector<8x32xf32>
    %57 = math.tanh %56 : vector<8x32xf32>
    %58 = arith.mulf %54, %40 : vector<8x32xf32>
    %59 = arith.mulf %53, %57 : vector<8x32xf32>
    %60 = arith.addf %58, %59 : vector<8x32xf32>
    %61 = math.tanh %60 : vector<8x32xf32>
    %62 = arith.mulf %55, %61 : vector<8x32xf32>
    %63 = arith.index_cast %42 : i32 to index
    %c0_31 = arith.constant 0 : index
    %64 = vector.load %arg17[%63, %c0_31] : memref<64x32xf32, #tpu.memory_space<vmem>>, vector<8x32xf32>
    tpu.vector_store %arg17[%63, %c0_31], %62 {strides = array<i32>} : memref<64x32xf32, #tpu.memory_space<vmem>>, vector<8x32xf32>,
    %c1_i32 = arith.constant 1 : i32
    %c8_i32_32 = arith.constant 8 : i32
    %65 = arith.muli %c1_i32, %c8_i32_32 : i32
    %66 = tpu.assume_multiple %65, 8 : i32
    %67 = arith.index_cast %66 : i32 to index
    %c0_33 = arith.constant 0 : index
    %68 = vector.load %arg16[%67, %c0_33] : memref<64x128xf32, #tpu.memory_space<vmem>>, vector<8x128xf32>
    %cst_34 = arith.constant dense<0.000000e+00> : vector<8x128xf32>
    %69 = tpu.matmul %62, %38, %cst_34 {dimension_numbers = #tpu.dot_dimension_numbers<[1], [0], [0], [1], [0, 0, 1, 1], [], []>} : vector<8x32xf32>, vector<32x128xf32>, vector<8x128xf32> -> vector<8x128xf32>
    %70 = arith.addf %68, %69 : vector<8x128xf32>
    %71 = vector.extract_strided_slice %70 {offsets = [0, 0], sizes = [8, 96], strides = [1, 1]} : vector<8x128xf32> to vector<8x96xf32>
    %72 = arith.negf %71 : vector<8x96xf32>
    %73 = math.exp %72 : vector<8x96xf32>
    %cst_35 = arith.constant 1.000000e+00 : f32
    %74 = vector.broadcast %cst_35 : f32 to vector<8x96xf32>
    %75 = arith.addf %74, %73 : vector<8x96xf32>
    %76 = arith.divf %74, %75 : vector<8x96xf32>
    %77 = vector.extract_strided_slice %76 {offsets = [0, 0], sizes = [8, 32], strides = [1, 1]} : vector<8x96xf32> to vector<8x32xf32>
    %78 = vector.extract_strided_slice %76 {offsets = [0, 32], sizes = [8, 32], strides = [1, 1]} : vector<8x96xf32> to vector<8x32xf32>
    %79 = vector.extract_strided_slice %76 {offsets = [0, 64], sizes = [8, 32], strides = [1, 1]} : vector<8x96xf32> to vector<8x32xf32>
    %80 = vector.extract_strided_slice %70 {offsets = [0, 96], sizes = [8, 32], strides = [1, 1]} : vector<8x128xf32> to vector<8x32xf32>
    %81 = math.tanh %80 : vector<8x32xf32>
    %82 = arith.mulf %78, %60 : vector<8x32xf32>
    %83 = arith.mulf %77, %81 : vector<8x32xf32>
    %84 = arith.addf %82, %83 : vector<8x32xf32>
    %85 = math.tanh %84 : vector<8x32xf32>
    %86 = arith.mulf %79, %85 : vector<8x32xf32>
    %87 = arith.index_cast %66 : i32 to index
    %c0_36 = arith.constant 0 : index
    %88 = vector.load %arg17[%87, %c0_36] : memref<64x32xf32, #tpu.memory_space<vmem>>, vector<8x32xf32>
    tpu.vector_store %arg17[%87, %c0_36], %86 {strides = array<i32>} : memref<64x32xf32, #tpu.memory_space<vmem>>, vector<8x32xf32>,
    %c2_i32 = arith.constant 2 : i32
    %c8_i32_37 = arith.constant 8 : i32
    %89 = arith.muli %c2_i32, %c8_i32_37 : i32
    %90 = tpu.assume_multiple %89, 8 : i32
    %91 = arith.index_cast %90 : i32 to index
    %c0_38 = arith.constant 0 : index
    %92 = vector.load %arg16[%91, %c0_38] : memref<64x128xf32, #tpu.memory_space<vmem>>, vector<8x128xf32>
    %cst_39 = arith.constant dense<0.000000e+00> : vector<8x128xf32>
    %93 = tpu.matmul %86, %38, %cst_39 {dimension_numbers = #tpu.dot_dimension_numbers<[1], [0], [0], [1], [0, 0, 1, 1], [], []>} : vector<8x32xf32>, vector<32x128xf32>, vector<8x128xf32> -> vector<8x128xf32>
    %94 = arith.addf %92, %93 : vector<8x128xf32>
    %95 = vector.extract_strided_slice %94 {offsets = [0, 0], sizes = [8, 96], strides = [1, 1]} : vector<8x128xf32> to vector<8x96xf32>
    %96 = arith.negf %95 : vector<8x96xf32>
    %97 = math.exp %96 : vector<8x96xf32>
    %cst_40 = arith.constant 1.000000e+00 : f32
    %98 = vector.broadcast %cst_40 : f32 to vector<8x96xf32>
    %99 = arith.addf %98, %97 : vector<8x96xf32>
    %100 = arith.divf %98, %99 : vector<8x96xf32>
    %101 = vector.extract_strided_slice %100 {offsets = [0, 0], sizes = [8, 32], strides = [1, 1]} : vector<8x96xf32> to vector<8x32xf32>
    %102 = vector.extract_strided_slice %100 {offsets = [0, 32], sizes = [8, 32], strides = [1, 1]} : vector<8x96xf32> to vector<8x32xf32>
    %103 = vector.extract_strided_slice %100 {offsets = [0, 64], sizes = [8, 32], strides = [1, 1]} : vector<8x96xf32> to vector<8x32xf32>
    %104 = vector.extract_strided_slice %94 {offsets = [0, 96], sizes = [8, 32], strides = [1, 1]} : vector<8x128xf32> to vector<8x32xf32>
    %105 = math.tanh %104 : vector<8x32xf32>
    %106 = arith.mulf %102, %84 : vector<8x32xf32>
    %107 = arith.mulf %101, %105 : vector<8x32xf32>
    %108 = arith.addf %106, %107 : vector<8x32xf32>
    %109 = math.tanh %108 : vector<8x32xf32>
    %110 = arith.mulf %103, %109 : vector<8x32xf32>
    %111 = arith.index_cast %90 : i32 to index
    %c0_41 = arith.constant 0 : index
    %112 = vector.load %arg17[%111, %c0_41] : memref<64x32xf32, #tpu.memory_space<vmem>>, vector<8x32xf32>
    tpu.vector_store %arg17[%111, %c0_41], %110 {strides = array<i32>} : memref<64x32xf32, #tpu.memory_space<vmem>>, vector<8x32xf32>,
    %c3_i32 = arith.constant 3 : i32
    %c8_i32_42 = arith.constant 8 : i32
    %113 = arith.muli %c3_i32, %c8_i32_42 : i32
    %114 = tpu.assume_multiple %113, 8 : i32
    %115 = arith.index_cast %114 : i32 to index
    %c0_43 = arith.constant 0 : index
    %116 = vector.load %arg16[%115, %c0_43] : memref<64x128xf32, #tpu.memory_space<vmem>>, vector<8x128xf32>
    %cst_44 = arith.constant dense<0.000000e+00> : vector<8x128xf32>
    %117 = tpu.matmul %110, %38, %cst_44 {dimension_numbers = #tpu.dot_dimension_numbers<[1], [0], [0], [1], [0, 0, 1, 1], [], []>} : vector<8x32xf32>, vector<32x128xf32>, vector<8x128xf32> -> vector<8x128xf32>
    %118 = arith.addf %116, %117 : vector<8x128xf32>
    %119 = vector.extract_strided_slice %118 {offsets = [0, 0], sizes = [8, 96], strides = [1, 1]} : vector<8x128xf32> to vector<8x96xf32>
    %120 = arith.negf %119 : vector<8x96xf32>
    %121 = math.exp %120 : vector<8x96xf32>
    %cst_45 = arith.constant 1.000000e+00 : f32
    %122 = vector.broadcast %cst_45 : f32 to vector<8x96xf32>
    %123 = arith.addf %122, %121 : vector<8x96xf32>
    %124 = arith.divf %122, %123 : vector<8x96xf32>
    %125 = vector.extract_strided_slice %124 {offsets = [0, 0], sizes = [8, 32], strides = [1, 1]} : vector<8x96xf32> to vector<8x32xf32>
    %126 = vector.extract_strided_slice %124 {offsets = [0, 32], sizes = [8, 32], strides = [1, 1]} : vector<8x96xf32> to vector<8x32xf32>
    %127 = vector.extract_strided_slice %124 {offsets = [0, 64], sizes = [8, 32], strides = [1, 1]} : vector<8x96xf32> to vector<8x32xf32>
    %128 = vector.extract_strided_slice %118 {offsets = [0, 96], sizes = [8, 32], strides = [1, 1]} : vector<8x128xf32> to vector<8x32xf32>
    %129 = math.tanh %128 : vector<8x32xf32>
    %130 = arith.mulf %126, %108 : vector<8x32xf32>
    %131 = arith.mulf %125, %129 : vector<8x32xf32>
    %132 = arith.addf %130, %131 : vector<8x32xf32>
    %133 = math.tanh %132 : vector<8x32xf32>
    %134 = arith.mulf %127, %133 : vector<8x32xf32>
    %135 = arith.index_cast %114 : i32 to index
    %c0_46 = arith.constant 0 : index
    %136 = vector.load %arg17[%135, %c0_46] : memref<64x32xf32, #tpu.memory_space<vmem>>, vector<8x32xf32>
    tpu.vector_store %arg17[%135, %c0_46], %134 {strides = array<i32>} : memref<64x32xf32, #tpu.memory_space<vmem>>, vector<8x32xf32>,
    %c4_i32 = arith.constant 4 : i32
    %c8_i32_47 = arith.constant 8 : i32
    %137 = arith.muli %c4_i32, %c8_i32_47 : i32
    %138 = tpu.assume_multiple %137, 8 : i32
    %139 = arith.index_cast %138 : i32 to index
    %c0_48 = arith.constant 0 : index
    %140 = vector.load %arg16[%139, %c0_48] : memref<64x128xf32, #tpu.memory_space<vmem>>, vector<8x128xf32>
    %cst_49 = arith.constant dense<0.000000e+00> : vector<8x128xf32>
    %141 = tpu.matmul %134, %38, %cst_49 {dimension_numbers = #tpu.dot_dimension_numbers<[1], [0], [0], [1], [0, 0, 1, 1], [], []>} : vector<8x32xf32>, vector<32x128xf32>, vector<8x128xf32> -> vector<8x128xf32>
    %142 = arith.addf %140, %141 : vector<8x128xf32>
    %143 = vector.extract_strided_slice %142 {offsets = [0, 0], sizes = [8, 96], strides = [1, 1]} : vector<8x128xf32> to vector<8x96xf32>
    %144 = arith.negf %143 : vector<8x96xf32>
    %145 = math.exp %144 : vector<8x96xf32>
    %cst_50 = arith.constant 1.000000e+00 : f32
    %146 = vector.broadcast %cst_50 : f32 to vector<8x96xf32>
    %147 = arith.addf %146, %145 : vector<8x96xf32>
    %148 = arith.divf %146, %147 : vector<8x96xf32>
    %149 = vector.extract_strided_slice %148 {offsets = [0, 0], sizes = [8, 32], strides = [1, 1]} : vector<8x96xf32> to vector<8x32xf32>
    %150 = vector.extract_strided_slice %148 {offsets = [0, 32], sizes = [8, 32], strides = [1, 1]} : vector<8x96xf32> to vector<8x32xf32>
    %151 = vector.extract_strided_slice %148 {offsets = [0, 64], sizes = [8, 32], strides = [1, 1]} : vector<8x96xf32> to vector<8x32xf32>
    %152 = vector.extract_strided_slice %142 {offsets = [0, 96], sizes = [8, 32], strides = [1, 1]} : vector<8x128xf32> to vector<8x32xf32>
    %153 = math.tanh %152 : vector<8x32xf32>
    %154 = arith.mulf %150, %132 : vector<8x32xf32>
    %155 = arith.mulf %149, %153 : vector<8x32xf32>
    %156 = arith.addf %154, %155 : vector<8x32xf32>
    %157 = math.tanh %156 : vector<8x32xf32>
    %158 = arith.mulf %151, %157 : vector<8x32xf32>
    %159 = arith.index_cast %138 : i32 to index
    %c0_51 = arith.constant 0 : index
    %160 = vector.load %arg17[%159, %c0_51] : memref<64x32xf32, #tpu.memory_space<vmem>>, vector<8x32xf32>
    tpu.vector_store %arg17[%159, %c0_51], %158 {strides = array<i32>} : memref<64x32xf32, #tpu.memory_space<vmem>>, vector<8x32xf32>,
    %c5_i32 = arith.constant 5 : i32
    %c8_i32_52 = arith.constant 8 : i32
    %161 = arith.muli %c5_i32, %c8_i32_52 : i32
    %162 = tpu.assume_multiple %161, 8 : i32
    %163 = arith.index_cast %162 : i32 to index
    %c0_53 = arith.constant 0 : index
    %164 = vector.load %arg16[%163, %c0_53] : memref<64x128xf32, #tpu.memory_space<vmem>>, vector<8x128xf32>
    %cst_54 = arith.constant dense<0.000000e+00> : vector<8x128xf32>
    %165 = tpu.matmul %158, %38, %cst_54 {dimension_numbers = #tpu.dot_dimension_numbers<[1], [0], [0], [1], [0, 0, 1, 1], [], []>} : vector<8x32xf32>, vector<32x128xf32>, vector<8x128xf32> -> vector<8x128xf32>
    %166 = arith.addf %164, %165 : vector<8x128xf32>
    %167 = vector.extract_strided_slice %166 {offsets = [0, 0], sizes = [8, 96], strides = [1, 1]} : vector<8x128xf32> to vector<8x96xf32>
    %168 = arith.negf %167 : vector<8x96xf32>
    %169 = math.exp %168 : vector<8x96xf32>
    %cst_55 = arith.constant 1.000000e+00 : f32
    %170 = vector.broadcast %cst_55 : f32 to vector<8x96xf32>
    %171 = arith.addf %170, %169 : vector<8x96xf32>
    %172 = arith.divf %170, %171 : vector<8x96xf32>
    %173 = vector.extract_strided_slice %172 {offsets = [0, 0], sizes = [8, 32], strides = [1, 1]} : vector<8x96xf32> to vector<8x32xf32>
    %174 = vector.extract_strided_slice %172 {offsets = [0, 32], sizes = [8, 32], strides = [1, 1]} : vector<8x96xf32> to vector<8x32xf32>
    %175 = vector.extract_strided_slice %172 {offsets = [0, 64], sizes = [8, 32], strides = [1, 1]} : vector<8x96xf32> to vector<8x32xf32>
    %176 = vector.extract_strided_slice %166 {offsets = [0, 96], sizes = [8, 32], strides = [1, 1]} : vector<8x128xf32> to vector<8x32xf32>
    %177 = math.tanh %176 : vector<8x32xf32>
    %178 = arith.mulf %174, %156 : vector<8x32xf32>
    %179 = arith.mulf %173, %177 : vector<8x32xf32>
    %180 = arith.addf %178, %179 : vector<8x32xf32>
    %181 = math.tanh %180 : vector<8x32xf32>
    %182 = arith.mulf %175, %181 : vector<8x32xf32>
    %183 = arith.index_cast %162 : i32 to index
    %c0_56 = arith.constant 0 : index
    %184 = vector.load %arg17[%183, %c0_56] : memref<64x32xf32, #tpu.memory_space<vmem>>, vector<8x32xf32>
    tpu.vector_store %arg17[%183, %c0_56], %182 {strides = array<i32>} : memref<64x32xf32, #tpu.memory_space<vmem>>, vector<8x32xf32>,
    %c6_i32 = arith.constant 6 : i32
    %c8_i32_57 = arith.constant 8 : i32
    %185 = arith.muli %c6_i32, %c8_i32_57 : i32
    %186 = tpu.assume_multiple %185, 8 : i32
    %187 = arith.index_cast %186 : i32 to index
    %c0_58 = arith.constant 0 : index
    %188 = vector.load %arg16[%187, %c0_58] : memref<64x128xf32, #tpu.memory_space<vmem>>, vector<8x128xf32>
    %cst_59 = arith.constant dense<0.000000e+00> : vector<8x128xf32>
    %189 = tpu.matmul %182, %38, %cst_59 {dimension_numbers = #tpu.dot_dimension_numbers<[1], [0], [0], [1], [0, 0, 1, 1], [], []>} : vector<8x32xf32>, vector<32x128xf32>, vector<8x128xf32> -> vector<8x128xf32>
    %190 = arith.addf %188, %189 : vector<8x128xf32>
    %191 = vector.extract_strided_slice %190 {offsets = [0, 0], sizes = [8, 96], strides = [1, 1]} : vector<8x128xf32> to vector<8x96xf32>
    %192 = arith.negf %191 : vector<8x96xf32>
    %193 = math.exp %192 : vector<8x96xf32>
    %cst_60 = arith.constant 1.000000e+00 : f32
    %194 = vector.broadcast %cst_60 : f32 to vector<8x96xf32>
    %195 = arith.addf %194, %193 : vector<8x96xf32>
    %196 = arith.divf %194, %195 : vector<8x96xf32>
    %197 = vector.extract_strided_slice %196 {offsets = [0, 0], sizes = [8, 32], strides = [1, 1]} : vector<8x96xf32> to vector<8x32xf32>
    %198 = vector.extract_strided_slice %196 {offsets = [0, 32], sizes = [8, 32], strides = [1, 1]} : vector<8x96xf32> to vector<8x32xf32>
    %199 = vector.extract_strided_slice %196 {offsets = [0, 64], sizes = [8, 32], strides = [1, 1]} : vector<8x96xf32> to vector<8x32xf32>
    %200 = vector.extract_strided_slice %190 {offsets = [0, 96], sizes = [8, 32], strides = [1, 1]} : vector<8x128xf32> to vector<8x32xf32>
    %201 = math.tanh %200 : vector<8x32xf32>
    %202 = arith.mulf %198, %180 : vector<8x32xf32>
    %203 = arith.mulf %197, %201 : vector<8x32xf32>
    %204 = arith.addf %202, %203 : vector<8x32xf32>
    %205 = math.tanh %204 : vector<8x32xf32>
    %206 = arith.mulf %199, %205 : vector<8x32xf32>
    %207 = arith.index_cast %186 : i32 to index
    %c0_61 = arith.constant 0 : index
    %208 = vector.load %arg17[%207, %c0_61] : memref<64x32xf32, #tpu.memory_space<vmem>>, vector<8x32xf32>
    tpu.vector_store %arg17[%207, %c0_61], %206 {strides = array<i32>} : memref<64x32xf32, #tpu.memory_space<vmem>>, vector<8x32xf32>,
    %c7_i32 = arith.constant 7 : i32
    %c8_i32_62 = arith.constant 8 : i32
    %209 = arith.muli %c7_i32, %c8_i32_62 : i32
    %210 = tpu.assume_multiple %209, 8 : i32
    %211 = arith.index_cast %210 : i32 to index
    %c0_63 = arith.constant 0 : index
    %212 = vector.load %arg16[%211, %c0_63] : memref<64x128xf32, #tpu.memory_space<vmem>>, vector<8x128xf32>
    %cst_64 = arith.constant dense<0.000000e+00> : vector<8x128xf32>
    %213 = tpu.matmul %206, %38, %cst_64 {dimension_numbers = #tpu.dot_dimension_numbers<[1], [0], [0], [1], [0, 0, 1, 1], [], []>} : vector<8x32xf32>, vector<32x128xf32>, vector<8x128xf32> -> vector<8x128xf32>
    %214 = arith.addf %212, %213 : vector<8x128xf32>
    %215 = vector.extract_strided_slice %214 {offsets = [0, 0], sizes = [8, 96], strides = [1, 1]} : vector<8x128xf32> to vector<8x96xf32>
    %216 = arith.negf %215 : vector<8x96xf32>
    %217 = math.exp %216 : vector<8x96xf32>
    %cst_65 = arith.constant 1.000000e+00 : f32
    %218 = vector.broadcast %cst_65 : f32 to vector<8x96xf32>
    %219 = arith.addf %218, %217 : vector<8x96xf32>
    %220 = arith.divf %218, %219 : vector<8x96xf32>
    %221 = vector.extract_strided_slice %220 {offsets = [0, 0], sizes = [8, 32], strides = [1, 1]} : vector<8x96xf32> to vector<8x32xf32>
    %222 = vector.extract_strided_slice %220 {offsets = [0, 32], sizes = [8, 32], strides = [1, 1]} : vector<8x96xf32> to vector<8x32xf32>
    %223 = vector.extract_strided_slice %220 {offsets = [0, 64], sizes = [8, 32], strides = [1, 1]} : vector<8x96xf32> to vector<8x32xf32>
    %224 = vector.extract_strided_slice %214 {offsets = [0, 96], sizes = [8, 32], strides = [1, 1]} : vector<8x128xf32> to vector<8x32xf32>
    %225 = math.tanh %224 : vector<8x32xf32>
    %226 = arith.mulf %222, %204 : vector<8x32xf32>
    %227 = arith.mulf %221, %225 : vector<8x32xf32>
    %228 = arith.addf %226, %227 : vector<8x32xf32>
    %229 = math.tanh %228 : vector<8x32xf32>
    %230 = arith.mulf %223, %229 : vector<8x32xf32>
    %231 = arith.index_cast %210 : i32 to index
    %c0_66 = arith.constant 0 : index
    %232 = vector.load %arg17[%231, %c0_66] : memref<64x32xf32, #tpu.memory_space<vmem>>, vector<8x32xf32>
    tpu.vector_store %arg17[%231, %c0_66], %230 {strides = array<i32>} : memref<64x32xf32, #tpu.memory_space<vmem>>, vector<8x32xf32>,
    %c8_i32_67 = arith.constant 8 : i32
    %c0_68 = arith.constant 0 : index
    %c0_69 = arith.constant 0 : index
    %233 = vector.load %arg14[%c0_68, %c0_69] : memref<8x32xf32, #tpu.memory_space<vmem>>, vector<8x32xf32>
    tpu.vector_store %arg14[%c0_68, %c0_69], %230 {strides = array<i32>} : memref<8x32xf32, #tpu.memory_space<vmem>>, vector<8x32xf32>,
    %c0_70 = arith.constant 0 : index
    %c0_71 = arith.constant 0 : index
    %234 = vector.load %arg15[%c0_70, %c0_71] : memref<8x32xf32, #tpu.memory_space<vmem>>, vector<8x32xf32>
    tpu.vector_store %arg15[%c0_70, %c0_71], %228 {strides = array<i32>} : memref<8x32xf32, #tpu.memory_space<vmem>>, vector<8x32xf32>,
    %c0_72 = arith.constant 0 : index
    %c0_73 = arith.constant 0 : index
    %235 = vector.load %arg17[%c0_72, %c0_73] : memref<64x32xf32, #tpu.memory_space<vmem>>, vector<64x32xf32>
    %c0_74 = arith.constant 0 : index
    %c0_75 = arith.constant 0 : index
    %236 = vector.load %arg9[%c0_74, %c0_75] : memref<32x256xf32, #tpu.memory_space<vmem>>, vector<32x256xf32>
    %cst_76 = arith.constant dense<0.000000e+00> : vector<64x256xf32>
    %237 = tpu.matmul %235, %236, %cst_76 {dimension_numbers = #tpu.dot_dimension_numbers<[1], [0], [0], [1], [0, 0, 1, 1], [], []>} : vector<64x32xf32>, vector<32x256xf32>, vector<64x256xf32> -> vector<64x256xf32>
    %c0_77 = arith.constant 0 : index
    %c0_78 = arith.constant 0 : index
    %238 = vector.load %arg10[%c0_77, %c0_78] : memref<1x256xf32, #tpu.memory_space<vmem>>, vector<1x256xf32>
    %239 = vector.broadcast %238 : vector<1x256xf32> to vector<64x256xf32>
    %240 = arith.addf %237, %239 : vector<64x256xf32>
    %241 = tpu.iota {dimensions = array<i32: 1>} : vector<1x256xi32>
    %cst_79 = arith.constant 0.000000e+00 : f32
    %242 = vector.broadcast %cst_79 : f32 to vector<64x256xf32>
    %c0_i32_80 = arith.constant 0 : i32
    %243 = vector.broadcast %c0_i32_80 : i32 to vector<1x256xi32>
    %244 = arith.cmpi sge, %241, %243 : vector<1x256xi32>
    %c11_i32 = arith.constant 11 : i32
    %245 = vector.broadcast %c11_i32 : i32 to vector<1x256xi32>
    %246 = arith.cmpi slt, %241, %245 : vector<1x256xi32>
    %247 = arith.andi %244, %246 : vector<1x256xi1>
    %cst_81 = arith.constant -1.000000e+30 : f32
    %248 = vector.shape_cast %247 : vector<1x256xi1> to vector<1x256xi1>
    %249 = vector.broadcast %248 : vector<1x256xi1> to vector<64x256xi1>
    %250 = vector.broadcast %cst_81 : f32 to vector<64x256xf32>
    %251 = arith.select %249, %240, %250 : vector<64x256xi1>, vector<64x256xf32>
    %cst_82 = arith.constant dense<0xFF800000> : vector<64xf32>
    %252 = vector.multi_reduction <maximumf>, %251, %cst_82 [1] : vector<64x256xf32> to vector<64xf32>
    %253 = vector.shape_cast %252 : vector<64xf32> to vector<64x1xf32>
    %254 = vector.shape_cast %247 : vector<1x256xi1> to vector<1x256xi1>
    %255 = vector.broadcast %254 : vector<1x256xi1> to vector<64x256xi1>
    %256 = vector.shape_cast %253 : vector<64x1xf32> to vector<64x1xf32>
    %257 = vector.broadcast %256 : vector<64x1xf32> to vector<64x256xf32>
    %258 = arith.select %255, %257, %242 : vector<64x256xi1>, vector<64x256xf32>
    %c11_i32_83 = arith.constant 11 : i32
    %259 = vector.broadcast %c11_i32_83 : i32 to vector<1x256xi32>
    %260 = arith.cmpi sge, %241, %259 : vector<1x256xi32>
    %c22_i32 = arith.constant 22 : i32
    %261 = vector.broadcast %c22_i32 : i32 to vector<1x256xi32>
    %262 = arith.cmpi slt, %241, %261 : vector<1x256xi32>
    %263 = arith.andi %260, %262 : vector<1x256xi1>
    %cst_84 = arith.constant -1.000000e+30 : f32
    %264 = vector.shape_cast %263 : vector<1x256xi1> to vector<1x256xi1>
    %265 = vector.broadcast %264 : vector<1x256xi1> to vector<64x256xi1>
    %266 = vector.broadcast %cst_84 : f32 to vector<64x256xf32>
    %267 = arith.select %265, %240, %266 : vector<64x256xi1>, vector<64x256xf32>
    %cst_85 = arith.constant dense<0xFF800000> : vector<64xf32>
    %268 = vector.multi_reduction <maximumf>, %267, %cst_85 [1] : vector<64x256xf32> to vector<64xf32>
    %269 = vector.shape_cast %268 : vector<64xf32> to vector<64x1xf32>
    %270 = vector.shape_cast %263 : vector<1x256xi1> to vector<1x256xi1>
    %271 = vector.broadcast %270 : vector<1x256xi1> to vector<64x256xi1>
    %272 = vector.shape_cast %269 : vector<64x1xf32> to vector<64x1xf32>
    %273 = vector.broadcast %272 : vector<64x1xf32> to vector<64x256xf32>
    %274 = arith.select %271, %273, %258 : vector<64x256xi1>, vector<64x256xf32>
    %c22_i32_86 = arith.constant 22 : i32
    %275 = vector.broadcast %c22_i32_86 : i32 to vector<1x256xi32>
    %276 = arith.cmpi sge, %241, %275 : vector<1x256xi32>
    %c33_i32 = arith.constant 33 : i32
    %277 = vector.broadcast %c33_i32 : i32 to vector<1x256xi32>
    %278 = arith.cmpi slt, %241, %277 : vector<1x256xi32>
    %279 = arith.andi %276, %278 : vector<1x256xi1>
    %cst_87 = arith.constant -1.000000e+30 : f32
    %280 = vector.shape_cast %279 : vector<1x256xi1> to vector<1x256xi1>
    %281 = vector.broadcast %280 : vector<1x256xi1> to vector<64x256xi1>
    %282 = vector.broadcast %cst_87 : f32 to vector<64x256xf32>
    %283 = arith.select %281, %240, %282 : vector<64x256xi1>, vector<64x256xf32>
    %cst_88 = arith.constant dense<0xFF800000> : vector<64xf32>
    %284 = vector.multi_reduction <maximumf>, %283, %cst_88 [1] : vector<64x256xf32> to vector<64xf32>
    %285 = vector.shape_cast %284 : vector<64xf32> to vector<64x1xf32>
    %286 = vector.shape_cast %279 : vector<1x256xi1> to vector<1x256xi1>
    %287 = vector.broadcast %286 : vector<1x256xi1> to vector<64x256xi1>
    %288 = vector.shape_cast %285 : vector<64x1xf32> to vector<64x1xf32>
    %289 = vector.broadcast %288 : vector<64x1xf32> to vector<64x256xf32>
    %290 = arith.select %287, %289, %274 : vector<64x256xi1>, vector<64x256xf32>
    %c33_i32_89 = arith.constant 33 : i32
    %291 = vector.broadcast %c33_i32_89 : i32 to vector<1x256xi32>
    %292 = arith.cmpi sge, %241, %291 : vector<1x256xi32>
    %c44_i32 = arith.constant 44 : i32
    %293 = vector.broadcast %c44_i32 : i32 to vector<1x256xi32>
    %294 = arith.cmpi slt, %241, %293 : vector<1x256xi32>
    %295 = arith.andi %292, %294 : vector<1x256xi1>
    %cst_90 = arith.constant -1.000000e+30 : f32
    %296 = vector.shape_cast %295 : vector<1x256xi1> to vector<1x256xi1>
    %297 = vector.broadcast %296 : vector<1x256xi1> to vector<64x256xi1>
    %298 = vector.broadcast %cst_90 : f32 to vector<64x256xf32>
    %299 = arith.select %297, %240, %298 : vector<64x256xi1>, vector<64x256xf32>
    %cst_91 = arith.constant dense<0xFF800000> : vector<64xf32>
    %300 = vector.multi_reduction <maximumf>, %299, %cst_91 [1] : vector<64x256xf32> to vector<64xf32>
    %301 = vector.shape_cast %300 : vector<64xf32> to vector<64x1xf32>
    %302 = vector.shape_cast %295 : vector<1x256xi1> to vector<1x256xi1>
    %303 = vector.broadcast %302 : vector<1x256xi1> to vector<64x256xi1>
    %304 = vector.shape_cast %301 : vector<64x1xf32> to vector<64x1xf32>
    %305 = vector.broadcast %304 : vector<64x1xf32> to vector<64x256xf32>
    %306 = arith.select %303, %305, %290 : vector<64x256xi1>, vector<64x256xf32>
    %c44_i32_92 = arith.constant 44 : i32
    %307 = vector.broadcast %c44_i32_92 : i32 to vector<1x256xi32>
    %308 = arith.cmpi sge, %241, %307 : vector<1x256xi32>
    %c55_i32 = arith.constant 55 : i32
    %309 = vector.broadcast %c55_i32 : i32 to vector<1x256xi32>
    %310 = arith.cmpi slt, %241, %309 : vector<1x256xi32>
    %311 = arith.andi %308, %310 : vector<1x256xi1>
    %cst_93 = arith.constant -1.000000e+30 : f32
    %312 = vector.shape_cast %311 : vector<1x256xi1> to vector<1x256xi1>
    %313 = vector.broadcast %312 : vector<1x256xi1> to vector<64x256xi1>
    %314 = vector.broadcast %cst_93 : f32 to vector<64x256xf32>
    %315 = arith.select %313, %240, %314 : vector<64x256xi1>, vector<64x256xf32>
    %cst_94 = arith.constant dense<0xFF800000> : vector<64xf32>
    %316 = vector.multi_reduction <maximumf>, %315, %cst_94 [1] : vector<64x256xf32> to vector<64xf32>
    %317 = vector.shape_cast %316 : vector<64xf32> to vector<64x1xf32>
    %318 = vector.shape_cast %311 : vector<1x256xi1> to vector<1x256xi1>
    %319 = vector.broadcast %318 : vector<1x256xi1> to vector<64x256xi1>
    %320 = vector.shape_cast %317 : vector<64x1xf32> to vector<64x1xf32>
    %321 = vector.broadcast %320 : vector<64x1xf32> to vector<64x256xf32>
    %322 = arith.select %319, %321, %306 : vector<64x256xi1>, vector<64x256xf32>
    %c55_i32_95 = arith.constant 55 : i32
    %323 = vector.broadcast %c55_i32_95 : i32 to vector<1x256xi32>
    %324 = arith.cmpi sge, %241, %323 : vector<1x256xi32>
    %c66_i32 = arith.constant 66 : i32
    %325 = vector.broadcast %c66_i32 : i32 to vector<1x256xi32>
    %326 = arith.cmpi slt, %241, %325 : vector<1x256xi32>
    %327 = arith.andi %324, %326 : vector<1x256xi1>
    %cst_96 = arith.constant -1.000000e+30 : f32
    %328 = vector.shape_cast %327 : vector<1x256xi1> to vector<1x256xi1>
    %329 = vector.broadcast %328 : vector<1x256xi1> to vector<64x256xi1>
    %330 = vector.broadcast %cst_96 : f32 to vector<64x256xf32>
    %331 = arith.select %329, %240, %330 : vector<64x256xi1>, vector<64x256xf32>
    %cst_97 = arith.constant dense<0xFF800000> : vector<64xf32>
    %332 = vector.multi_reduction <maximumf>, %331, %cst_97 [1] : vector<64x256xf32> to vector<64xf32>
    %333 = vector.shape_cast %332 : vector<64xf32> to vector<64x1xf32>
    %334 = vector.shape_cast %327 : vector<1x256xi1> to vector<1x256xi1>
    %335 = vector.broadcast %334 : vector<1x256xi1> to vector<64x256xi1>
    %336 = vector.shape_cast %333 : vector<64x1xf32> to vector<64x1xf32>
    %337 = vector.broadcast %336 : vector<64x1xf32> to vector<64x256xf32>
    %338 = arith.select %335, %337, %322 : vector<64x256xi1>, vector<64x256xf32>
    %c66_i32_98 = arith.constant 66 : i32
    %339 = vector.broadcast %c66_i32_98 : i32 to vector<1x256xi32>
    %340 = arith.cmpi sge, %241, %339 : vector<1x256xi32>
    %c77_i32 = arith.constant 77 : i32
    %341 = vector.broadcast %c77_i32 : i32 to vector<1x256xi32>
    %342 = arith.cmpi slt, %241, %341 : vector<1x256xi32>
    %343 = arith.andi %340, %342 : vector<1x256xi1>
    %cst_99 = arith.constant -1.000000e+30 : f32
    %344 = vector.shape_cast %343 : vector<1x256xi1> to vector<1x256xi1>
    %345 = vector.broadcast %344 : vector<1x256xi1> to vector<64x256xi1>
    %346 = vector.broadcast %cst_99 : f32 to vector<64x256xf32>
    %347 = arith.select %345, %240, %346 : vector<64x256xi1>, vector<64x256xf32>
    %cst_100 = arith.constant dense<0xFF800000> : vector<64xf32>
    %348 = vector.multi_reduction <maximumf>, %347, %cst_100 [1] : vector<64x256xf32> to vector<64xf32>
    %349 = vector.shape_cast %348 : vector<64xf32> to vector<64x1xf32>
    %350 = vector.shape_cast %343 : vector<1x256xi1> to vector<1x256xi1>
    %351 = vector.broadcast %350 : vector<1x256xi1> to vector<64x256xi1>
    %352 = vector.shape_cast %349 : vector<64x1xf32> to vector<64x1xf32>
    %353 = vector.broadcast %352 : vector<64x1xf32> to vector<64x256xf32>
    %354 = arith.select %351, %353, %338 : vector<64x256xi1>, vector<64x256xf32>
    %c77_i32_101 = arith.constant 77 : i32
    %355 = vector.broadcast %c77_i32_101 : i32 to vector<1x256xi32>
    %356 = arith.cmpi sge, %241, %355 : vector<1x256xi32>
    %c88_i32 = arith.constant 88 : i32
    %357 = vector.broadcast %c88_i32 : i32 to vector<1x256xi32>
    %358 = arith.cmpi slt, %241, %357 : vector<1x256xi32>
    %359 = arith.andi %356, %358 : vector<1x256xi1>
    %cst_102 = arith.constant -1.000000e+30 : f32
    %360 = vector.shape_cast %359 : vector<1x256xi1> to vector<1x256xi1>
    %361 = vector.broadcast %360 : vector<1x256xi1> to vector<64x256xi1>
    %362 = vector.broadcast %cst_102 : f32 to vector<64x256xf32>
    %363 = arith.select %361, %240, %362 : vector<64x256xi1>, vector<64x256xf32>
    %cst_103 = arith.constant dense<0xFF800000> : vector<64xf32>
    %364 = vector.multi_reduction <maximumf>, %363, %cst_103 [1] : vector<64x256xf32> to vector<64xf32>
    %365 = vector.shape_cast %364 : vector<64xf32> to vector<64x1xf32>
    %366 = vector.shape_cast %359 : vector<1x256xi1> to vector<1x256xi1>
    %367 = vector.broadcast %366 : vector<1x256xi1> to vector<64x256xi1>
    %368 = vector.shape_cast %365 : vector<64x1xf32> to vector<64x1xf32>
    %369 = vector.broadcast %368 : vector<64x1xf32> to vector<64x256xf32>
    %370 = arith.select %367, %369, %354 : vector<64x256xi1>, vector<64x256xf32>
    %c88_i32_104 = arith.constant 88 : i32
    %371 = vector.broadcast %c88_i32_104 : i32 to vector<1x256xi32>
    %372 = arith.cmpi sge, %241, %371 : vector<1x256xi32>
    %c99_i32 = arith.constant 99 : i32
    %373 = vector.broadcast %c99_i32 : i32 to vector<1x256xi32>
    %374 = arith.cmpi slt, %241, %373 : vector<1x256xi32>
    %375 = arith.andi %372, %374 : vector<1x256xi1>
    %cst_105 = arith.constant -1.000000e+30 : f32
    %376 = vector.shape_cast %375 : vector<1x256xi1> to vector<1x256xi1>
    %377 = vector.broadcast %376 : vector<1x256xi1> to vector<64x256xi1>
    %378 = vector.broadcast %cst_105 : f32 to vector<64x256xf32>
    %379 = arith.select %377, %240, %378 : vector<64x256xi1>, vector<64x256xf32>
    %cst_106 = arith.constant dense<0xFF800000> : vector<64xf32>
    %380 = vector.multi_reduction <maximumf>, %379, %cst_106 [1] : vector<64x256xf32> to vector<64xf32>
    %381 = vector.shape_cast %380 : vector<64xf32> to vector<64x1xf32>
    %382 = vector.shape_cast %375 : vector<1x256xi1> to vector<1x256xi1>
    %383 = vector.broadcast %382 : vector<1x256xi1> to vector<64x256xi1>
    %384 = vector.shape_cast %381 : vector<64x1xf32> to vector<64x1xf32>
    %385 = vector.broadcast %384 : vector<64x1xf32> to vector<64x256xf32>
    %386 = arith.select %383, %385, %370 : vector<64x256xi1>, vector<64x256xf32>
    %c99_i32_107 = arith.constant 99 : i32
    %387 = vector.broadcast %c99_i32_107 : i32 to vector<1x256xi32>
    %388 = arith.cmpi sge, %241, %387 : vector<1x256xi32>
    %c110_i32 = arith.constant 110 : i32
    %389 = vector.broadcast %c110_i32 : i32 to vector<1x256xi32>
    %390 = arith.cmpi slt, %241, %389 : vector<1x256xi32>
    %391 = arith.andi %388, %390 : vector<1x256xi1>
    %cst_108 = arith.constant -1.000000e+30 : f32
    %392 = vector.shape_cast %391 : vector<1x256xi1> to vector<1x256xi1>
    %393 = vector.broadcast %392 : vector<1x256xi1> to vector<64x256xi1>
    %394 = vector.broadcast %cst_108 : f32 to vector<64x256xf32>
    %395 = arith.select %393, %240, %394 : vector<64x256xi1>, vector<64x256xf32>
    %cst_109 = arith.constant dense<0xFF800000> : vector<64xf32>
    %396 = vector.multi_reduction <maximumf>, %395, %cst_109 [1] : vector<64x256xf32> to vector<64xf32>
    %397 = vector.shape_cast %396 : vector<64xf32> to vector<64x1xf32>
    %398 = vector.shape_cast %391 : vector<1x256xi1> to vector<1x256xi1>
    %399 = vector.broadcast %398 : vector<1x256xi1> to vector<64x256xi1>
    %400 = vector.shape_cast %397 : vector<64x1xf32> to vector<64x1xf32>
    %401 = vector.broadcast %400 : vector<64x1xf32> to vector<64x256xf32>
    %402 = arith.select %399, %401, %386 : vector<64x256xi1>, vector<64x256xf32>
    %c110_i32_110 = arith.constant 110 : i32
    %403 = vector.broadcast %c110_i32_110 : i32 to vector<1x256xi32>
    %404 = arith.cmpi sge, %241, %403 : vector<1x256xi32>
    %c121_i32 = arith.constant 121 : i32
    %405 = vector.broadcast %c121_i32 : i32 to vector<1x256xi32>
    %406 = arith.cmpi slt, %241, %405 : vector<1x256xi32>
    %407 = arith.andi %404, %406 : vector<1x256xi1>
    %cst_111 = arith.constant -1.000000e+30 : f32
    %408 = vector.shape_cast %407 : vector<1x256xi1> to vector<1x256xi1>
    %409 = vector.broadcast %408 : vector<1x256xi1> to vector<64x256xi1>
    %410 = vector.broadcast %cst_111 : f32 to vector<64x256xf32>
    %411 = arith.select %409, %240, %410 : vector<64x256xi1>, vector<64x256xf32>
    %cst_112 = arith.constant dense<0xFF800000> : vector<64xf32>
    %412 = vector.multi_reduction <maximumf>, %411, %cst_112 [1] : vector<64x256xf32> to vector<64xf32>
    %413 = vector.shape_cast %412 : vector<64xf32> to vector<64x1xf32>
    %414 = vector.shape_cast %407 : vector<1x256xi1> to vector<1x256xi1>
    %415 = vector.broadcast %414 : vector<1x256xi1> to vector<64x256xi1>
    %416 = vector.shape_cast %413 : vector<64x1xf32> to vector<64x1xf32>
    %417 = vector.broadcast %416 : vector<64x1xf32> to vector<64x256xf32>
    %418 = arith.select %415, %417, %402 : vector<64x256xi1>, vector<64x256xf32>
    %c121_i32_113 = arith.constant 121 : i32
    %419 = vector.broadcast %c121_i32_113 : i32 to vector<1x256xi32>
    %420 = arith.cmpi sge, %241, %419 : vector<1x256xi32>
    %c132_i32 = arith.constant 132 : i32
    %421 = vector.broadcast %c132_i32 : i32 to vector<1x256xi32>
    %422 = arith.cmpi slt, %241, %421 : vector<1x256xi32>
    %423 = arith.andi %420, %422 : vector<1x256xi1>
    %cst_114 = arith.constant -1.000000e+30 : f32
    %424 = vector.shape_cast %423 : vector<1x256xi1> to vector<1x256xi1>
    %425 = vector.broadcast %424 : vector<1x256xi1> to vector<64x256xi1>
    %426 = vector.broadcast %cst_114 : f32 to vector<64x256xf32>
    %427 = arith.select %425, %240, %426 : vector<64x256xi1>, vector<64x256xf32>
    %cst_115 = arith.constant dense<0xFF800000> : vector<64xf32>
    %428 = vector.multi_reduction <maximumf>, %427, %cst_115 [1] : vector<64x256xf32> to vector<64xf32>
    %429 = vector.shape_cast %428 : vector<64xf32> to vector<64x1xf32>
    %430 = vector.shape_cast %423 : vector<1x256xi1> to vector<1x256xi1>
    %431 = vector.broadcast %430 : vector<1x256xi1> to vector<64x256xi1>
    %432 = vector.shape_cast %429 : vector<64x1xf32> to vector<64x1xf32>
    %433 = vector.broadcast %432 : vector<64x1xf32> to vector<64x256xf32>
    %434 = arith.select %431, %433, %418 : vector<64x256xi1>, vector<64x256xf32>
    %c132_i32_116 = arith.constant 132 : i32
    %435 = vector.broadcast %c132_i32_116 : i32 to vector<1x256xi32>
    %436 = arith.cmpi sge, %241, %435 : vector<1x256xi32>
    %c143_i32 = arith.constant 143 : i32
    %437 = vector.broadcast %c143_i32 : i32 to vector<1x256xi32>
    %438 = arith.cmpi slt, %241, %437 : vector<1x256xi32>
    %439 = arith.andi %436, %438 : vector<1x256xi1>
    %cst_117 = arith.constant -1.000000e+30 : f32
    %440 = vector.shape_cast %439 : vector<1x256xi1> to vector<1x256xi1>
    %441 = vector.broadcast %440 : vector<1x256xi1> to vector<64x256xi1>
    %442 = vector.broadcast %cst_117 : f32 to vector<64x256xf32>
    %443 = arith.select %441, %240, %442 : vector<64x256xi1>, vector<64x256xf32>
    %cst_118 = arith.constant dense<0xFF800000> : vector<64xf32>
    %444 = vector.multi_reduction <maximumf>, %443, %cst_118 [1] : vector<64x256xf32> to vector<64xf32>
    %445 = vector.shape_cast %444 : vector<64xf32> to vector<64x1xf32>
    %446 = vector.shape_cast %439 : vector<1x256xi1> to vector<1x256xi1>
    %447 = vector.broadcast %446 : vector<1x256xi1> to vector<64x256xi1>
    %448 = vector.shape_cast %445 : vector<64x1xf32> to vector<64x1xf32>
    %449 = vector.broadcast %448 : vector<64x1xf32> to vector<64x256xf32>
    %450 = arith.select %447, %449, %434 : vector<64x256xi1>, vector<64x256xf32>
    %c143_i32_119 = arith.constant 143 : i32
    %451 = vector.broadcast %c143_i32_119 : i32 to vector<1x256xi32>
    %452 = arith.cmpi sge, %241, %451 : vector<1x256xi32>
    %c154_i32 = arith.constant 154 : i32
    %453 = vector.broadcast %c154_i32 : i32 to vector<1x256xi32>
    %454 = arith.cmpi slt, %241, %453 : vector<1x256xi32>
    %455 = arith.andi %452, %454 : vector<1x256xi1>
    %cst_120 = arith.constant -1.000000e+30 : f32
    %456 = vector.shape_cast %455 : vector<1x256xi1> to vector<1x256xi1>
    %457 = vector.broadcast %456 : vector<1x256xi1> to vector<64x256xi1>
    %458 = vector.broadcast %cst_120 : f32 to vector<64x256xf32>
    %459 = arith.select %457, %240, %458 : vector<64x256xi1>, vector<64x256xf32>
    %cst_121 = arith.constant dense<0xFF800000> : vector<64xf32>
    %460 = vector.multi_reduction <maximumf>, %459, %cst_121 [1] : vector<64x256xf32> to vector<64xf32>
    %461 = vector.shape_cast %460 : vector<64xf32> to vector<64x1xf32>
    %462 = vector.shape_cast %455 : vector<1x256xi1> to vector<1x256xi1>
    %463 = vector.broadcast %462 : vector<1x256xi1> to vector<64x256xi1>
    %464 = vector.shape_cast %461 : vector<64x1xf32> to vector<64x1xf32>
    %465 = vector.broadcast %464 : vector<64x1xf32> to vector<64x256xf32>
    %466 = arith.select %463, %465, %450 : vector<64x256xi1>, vector<64x256xf32>
    %c154_i32_122 = arith.constant 154 : i32
    %467 = vector.broadcast %c154_i32_122 : i32 to vector<1x256xi32>
    %468 = arith.cmpi sge, %241, %467 : vector<1x256xi32>
    %c165_i32 = arith.constant 165 : i32
    %469 = vector.broadcast %c165_i32 : i32 to vector<1x256xi32>
    %470 = arith.cmpi slt, %241, %469 : vector<1x256xi32>
    %471 = arith.andi %468, %470 : vector<1x256xi1>
    %cst_123 = arith.constant -1.000000e+30 : f32
    %472 = vector.shape_cast %471 : vector<1x256xi1> to vector<1x256xi1>
    %473 = vector.broadcast %472 : vector<1x256xi1> to vector<64x256xi1>
    %474 = vector.broadcast %cst_123 : f32 to vector<64x256xf32>
    %475 = arith.select %473, %240, %474 : vector<64x256xi1>, vector<64x256xf32>
    %cst_124 = arith.constant dense<0xFF800000> : vector<64xf32>
    %476 = vector.multi_reduction <maximumf>, %475, %cst_124 [1] : vector<64x256xf32> to vector<64xf32>
    %477 = vector.shape_cast %476 : vector<64xf32> to vector<64x1xf32>
    %478 = vector.shape_cast %471 : vector<1x256xi1> to vector<1x256xi1>
    %479 = vector.broadcast %478 : vector<1x256xi1> to vector<64x256xi1>
    %480 = vector.shape_cast %477 : vector<64x1xf32> to vector<64x1xf32>
    %481 = vector.broadcast %480 : vector<64x1xf32> to vector<64x256xf32>
    %482 = arith.select %479, %481, %466 : vector<64x256xi1>, vector<64x256xf32>
    %c165_i32_125 = arith.constant 165 : i32
    %483 = vector.broadcast %c165_i32_125 : i32 to vector<1x256xi32>
    %484 = arith.cmpi sge, %241, %483 : vector<1x256xi32>
    %c176_i32 = arith.constant 176 : i32
    %485 = vector.broadcast %c176_i32 : i32 to vector<1x256xi32>
    %486 = arith.cmpi slt, %241, %485 : vector<1x256xi32>
    %487 = arith.andi %484, %486 : vector<1x256xi1>
    %cst_126 = arith.constant -1.000000e+30 : f32
    %488 = vector.shape_cast %487 : vector<1x256xi1> to vector<1x256xi1>
    %489 = vector.broadcast %488 : vector<1x256xi1> to vector<64x256xi1>
    %490 = vector.broadcast %cst_126 : f32 to vector<64x256xf32>
    %491 = arith.select %489, %240, %490 : vector<64x256xi1>, vector<64x256xf32>
    %cst_127 = arith.constant dense<0xFF800000> : vector<64xf32>
    %492 = vector.multi_reduction <maximumf>, %491, %cst_127 [1] : vector<64x256xf32> to vector<64xf32>
    %493 = vector.shape_cast %492 : vector<64xf32> to vector<64x1xf32>
    %494 = vector.shape_cast %487 : vector<1x256xi1> to vector<1x256xi1>
    %495 = vector.broadcast %494 : vector<1x256xi1> to vector<64x256xi1>
    %496 = vector.shape_cast %493 : vector<64x1xf32> to vector<64x1xf32>
    %497 = vector.broadcast %496 : vector<64x1xf32> to vector<64x256xf32>
    %498 = arith.select %495, %497, %482 : vector<64x256xi1>, vector<64x256xf32>
    %c176_i32_128 = arith.constant 176 : i32
    %499 = vector.broadcast %c176_i32_128 : i32 to vector<1x256xi32>
    %500 = arith.cmpi sge, %241, %499 : vector<1x256xi32>
    %c187_i32 = arith.constant 187 : i32
    %501 = vector.broadcast %c187_i32 : i32 to vector<1x256xi32>
    %502 = arith.cmpi slt, %241, %501 : vector<1x256xi32>
    %503 = arith.andi %500, %502 : vector<1x256xi1>
    %cst_129 = arith.constant -1.000000e+30 : f32
    %504 = vector.shape_cast %503 : vector<1x256xi1> to vector<1x256xi1>
    %505 = vector.broadcast %504 : vector<1x256xi1> to vector<64x256xi1>
    %506 = vector.broadcast %cst_129 : f32 to vector<64x256xf32>
    %507 = arith.select %505, %240, %506 : vector<64x256xi1>, vector<64x256xf32>
    %cst_130 = arith.constant dense<0xFF800000> : vector<64xf32>
    %508 = vector.multi_reduction <maximumf>, %507, %cst_130 [1] : vector<64x256xf32> to vector<64xf32>
    %509 = vector.shape_cast %508 : vector<64xf32> to vector<64x1xf32>
    %510 = vector.shape_cast %503 : vector<1x256xi1> to vector<1x256xi1>
    %511 = vector.broadcast %510 : vector<1x256xi1> to vector<64x256xi1>
    %512 = vector.shape_cast %509 : vector<64x1xf32> to vector<64x1xf32>
    %513 = vector.broadcast %512 : vector<64x1xf32> to vector<64x256xf32>
    %514 = arith.select %511, %513, %498 : vector<64x256xi1>, vector<64x256xf32>
    %c187_i32_131 = arith.constant 187 : i32
    %515 = vector.broadcast %c187_i32_131 : i32 to vector<1x256xi32>
    %516 = arith.cmpi sge, %241, %515 : vector<1x256xi32>
    %c198_i32 = arith.constant 198 : i32
    %517 = vector.broadcast %c198_i32 : i32 to vector<1x256xi32>
    %518 = arith.cmpi slt, %241, %517 : vector<1x256xi32>
    %519 = arith.andi %516, %518 : vector<1x256xi1>
    %cst_132 = arith.constant -1.000000e+30 : f32
    %520 = vector.shape_cast %519 : vector<1x256xi1> to vector<1x256xi1>
    %521 = vector.broadcast %520 : vector<1x256xi1> to vector<64x256xi1>
    %522 = vector.broadcast %cst_132 : f32 to vector<64x256xf32>
    %523 = arith.select %521, %240, %522 : vector<64x256xi1>, vector<64x256xf32>
    %cst_133 = arith.constant dense<0xFF800000> : vector<64xf32>
    %524 = vector.multi_reduction <maximumf>, %523, %cst_133 [1] : vector<64x256xf32> to vector<64xf32>
    %525 = vector.shape_cast %524 : vector<64xf32> to vector<64x1xf32>
    %526 = vector.shape_cast %519 : vector<1x256xi1> to vector<1x256xi1>
    %527 = vector.broadcast %526 : vector<1x256xi1> to vector<64x256xi1>
    %528 = vector.shape_cast %525 : vector<64x1xf32> to vector<64x1xf32>
    %529 = vector.broadcast %528 : vector<64x1xf32> to vector<64x256xf32>
    %530 = arith.select %527, %529, %514 : vector<64x256xi1>, vector<64x256xf32>
    %c198_i32_134 = arith.constant 198 : i32
    %531 = vector.broadcast %c198_i32_134 : i32 to vector<1x256xi32>
    %532 = arith.cmpi sge, %241, %531 : vector<1x256xi32>
    %c209_i32 = arith.constant 209 : i32
    %533 = vector.broadcast %c209_i32 : i32 to vector<1x256xi32>
    %534 = arith.cmpi slt, %241, %533 : vector<1x256xi32>
    %535 = arith.andi %532, %534 : vector<1x256xi1>
    %cst_135 = arith.constant -1.000000e+30 : f32
    %536 = vector.shape_cast %535 : vector<1x256xi1> to vector<1x256xi1>
    %537 = vector.broadcast %536 : vector<1x256xi1> to vector<64x256xi1>
    %538 = vector.broadcast %cst_135 : f32 to vector<64x256xf32>
    %539 = arith.select %537, %240, %538 : vector<64x256xi1>, vector<64x256xf32>
    %cst_136 = arith.constant dense<0xFF800000> : vector<64xf32>
    %540 = vector.multi_reduction <maximumf>, %539, %cst_136 [1] : vector<64x256xf32> to vector<64xf32>
    %541 = vector.shape_cast %540 : vector<64xf32> to vector<64x1xf32>
    %542 = vector.shape_cast %535 : vector<1x256xi1> to vector<1x256xi1>
    %543 = vector.broadcast %542 : vector<1x256xi1> to vector<64x256xi1>
    %544 = vector.shape_cast %541 : vector<64x1xf32> to vector<64x1xf32>
    %545 = vector.broadcast %544 : vector<64x1xf32> to vector<64x256xf32>
    %546 = arith.select %543, %545, %530 : vector<64x256xi1>, vector<64x256xf32>
    %c209_i32_137 = arith.constant 209 : i32
    %547 = vector.broadcast %c209_i32_137 : i32 to vector<1x256xi32>
    %548 = arith.cmpi sge, %241, %547 : vector<1x256xi32>
    %c220_i32 = arith.constant 220 : i32
    %549 = vector.broadcast %c220_i32 : i32 to vector<1x256xi32>
    %550 = arith.cmpi slt, %241, %549 : vector<1x256xi32>
    %551 = arith.andi %548, %550 : vector<1x256xi1>
    %cst_138 = arith.constant -1.000000e+30 : f32
    %552 = vector.shape_cast %551 : vector<1x256xi1> to vector<1x256xi1>
    %553 = vector.broadcast %552 : vector<1x256xi1> to vector<64x256xi1>
    %554 = vector.broadcast %cst_138 : f32 to vector<64x256xf32>
    %555 = arith.select %553, %240, %554 : vector<64x256xi1>, vector<64x256xf32>
    %cst_139 = arith.constant dense<0xFF800000> : vector<64xf32>
    %556 = vector.multi_reduction <maximumf>, %555, %cst_139 [1] : vector<64x256xf32> to vector<64xf32>
    %557 = vector.shape_cast %556 : vector<64xf32> to vector<64x1xf32>
    %558 = vector.shape_cast %551 : vector<1x256xi1> to vector<1x256xi1>
    %559 = vector.broadcast %558 : vector<1x256xi1> to vector<64x256xi1>
    %560 = vector.shape_cast %557 : vector<64x1xf32> to vector<64x1xf32>
    %561 = vector.broadcast %560 : vector<64x1xf32> to vector<64x256xf32>
    %562 = arith.select %559, %561, %546 : vector<64x256xi1>, vector<64x256xf32>
    %563 = arith.subf %240, %562 : vector<64x256xf32>
    %564 = math.exp %563 : vector<64x256xf32>
    %cst_140 = arith.constant 0.000000e+00 : f32
    %565 = vector.broadcast %cst_140 : f32 to vector<64x256xf32>
    %c0_i32_141 = arith.constant 0 : i32
    %566 = vector.broadcast %c0_i32_141 : i32 to vector<1x256xi32>
    %567 = arith.cmpi sge, %241, %566 : vector<1x256xi32>
    %c11_i32_142 = arith.constant 11 : i32
    %568 = vector.broadcast %c11_i32_142 : i32 to vector<1x256xi32>
    %569 = arith.cmpi slt, %241, %568 : vector<1x256xi32>
    %570 = arith.andi %567, %569 : vector<1x256xi1>
    %cst_143 = arith.constant 0.000000e+00 : f32
    %571 = vector.shape_cast %570 : vector<1x256xi1> to vector<1x256xi1>
    %572 = vector.broadcast %571 : vector<1x256xi1> to vector<64x256xi1>
    %573 = vector.broadcast %cst_143 : f32 to vector<64x256xf32>
    %574 = arith.select %572, %564, %573 : vector<64x256xi1>, vector<64x256xf32>
    %cst_144 = arith.constant dense<0.000000e+00> : vector<64xf32>
    %575 = vector.multi_reduction <add>, %574, %cst_144 [1] : vector<64x256xf32> to vector<64xf32>
    %576 = vector.shape_cast %575 : vector<64xf32> to vector<64x1xf32>
    %577 = vector.shape_cast %570 : vector<1x256xi1> to vector<1x256xi1>
    %578 = vector.broadcast %577 : vector<1x256xi1> to vector<64x256xi1>
    %579 = vector.shape_cast %576 : vector<64x1xf32> to vector<64x1xf32>
    %580 = vector.broadcast %579 : vector<64x1xf32> to vector<64x256xf32>
    %581 = arith.select %578, %580, %565 : vector<64x256xi1>, vector<64x256xf32>
    %c11_i32_145 = arith.constant 11 : i32
    %582 = vector.broadcast %c11_i32_145 : i32 to vector<1x256xi32>
    %583 = arith.cmpi sge, %241, %582 : vector<1x256xi32>
    %c22_i32_146 = arith.constant 22 : i32
    %584 = vector.broadcast %c22_i32_146 : i32 to vector<1x256xi32>
    %585 = arith.cmpi slt, %241, %584 : vector<1x256xi32>
    %586 = arith.andi %583, %585 : vector<1x256xi1>
    %cst_147 = arith.constant 0.000000e+00 : f32
    %587 = vector.shape_cast %586 : vector<1x256xi1> to vector<1x256xi1>
    %588 = vector.broadcast %587 : vector<1x256xi1> to vector<64x256xi1>
    %589 = vector.broadcast %cst_147 : f32 to vector<64x256xf32>
    %590 = arith.select %588, %564, %589 : vector<64x256xi1>, vector<64x256xf32>
    %cst_148 = arith.constant dense<0.000000e+00> : vector<64xf32>
    %591 = vector.multi_reduction <add>, %590, %cst_148 [1] : vector<64x256xf32> to vector<64xf32>
    %592 = vector.shape_cast %591 : vector<64xf32> to vector<64x1xf32>
    %593 = vector.shape_cast %586 : vector<1x256xi1> to vector<1x256xi1>
    %594 = vector.broadcast %593 : vector<1x256xi1> to vector<64x256xi1>
    %595 = vector.shape_cast %592 : vector<64x1xf32> to vector<64x1xf32>
    %596 = vector.broadcast %595 : vector<64x1xf32> to vector<64x256xf32>
    %597 = arith.select %594, %596, %581 : vector<64x256xi1>, vector<64x256xf32>
    %c22_i32_149 = arith.constant 22 : i32
    %598 = vector.broadcast %c22_i32_149 : i32 to vector<1x256xi32>
    %599 = arith.cmpi sge, %241, %598 : vector<1x256xi32>
    %c33_i32_150 = arith.constant 33 : i32
    %600 = vector.broadcast %c33_i32_150 : i32 to vector<1x256xi32>
    %601 = arith.cmpi slt, %241, %600 : vector<1x256xi32>
    %602 = arith.andi %599, %601 : vector<1x256xi1>
    %cst_151 = arith.constant 0.000000e+00 : f32
    %603 = vector.shape_cast %602 : vector<1x256xi1> to vector<1x256xi1>
    %604 = vector.broadcast %603 : vector<1x256xi1> to vector<64x256xi1>
    %605 = vector.broadcast %cst_151 : f32 to vector<64x256xf32>
    %606 = arith.select %604, %564, %605 : vector<64x256xi1>, vector<64x256xf32>
    %cst_152 = arith.constant dense<0.000000e+00> : vector<64xf32>
    %607 = vector.multi_reduction <add>, %606, %cst_152 [1] : vector<64x256xf32> to vector<64xf32>
    %608 = vector.shape_cast %607 : vector<64xf32> to vector<64x1xf32>
    %609 = vector.shape_cast %602 : vector<1x256xi1> to vector<1x256xi1>
    %610 = vector.broadcast %609 : vector<1x256xi1> to vector<64x256xi1>
    %611 = vector.shape_cast %608 : vector<64x1xf32> to vector<64x1xf32>
    %612 = vector.broadcast %611 : vector<64x1xf32> to vector<64x256xf32>
    %613 = arith.select %610, %612, %597 : vector<64x256xi1>, vector<64x256xf32>
    %c33_i32_153 = arith.constant 33 : i32
    %614 = vector.broadcast %c33_i32_153 : i32 to vector<1x256xi32>
    %615 = arith.cmpi sge, %241, %614 : vector<1x256xi32>
    %c44_i32_154 = arith.constant 44 : i32
    %616 = vector.broadcast %c44_i32_154 : i32 to vector<1x256xi32>
    %617 = arith.cmpi slt, %241, %616 : vector<1x256xi32>
    %618 = arith.andi %615, %617 : vector<1x256xi1>
    %cst_155 = arith.constant 0.000000e+00 : f32
    %619 = vector.shape_cast %618 : vector<1x256xi1> to vector<1x256xi1>
    %620 = vector.broadcast %619 : vector<1x256xi1> to vector<64x256xi1>
    %621 = vector.broadcast %cst_155 : f32 to vector<64x256xf32>
    %622 = arith.select %620, %564, %621 : vector<64x256xi1>, vector<64x256xf32>
    %cst_156 = arith.constant dense<0.000000e+00> : vector<64xf32>
    %623 = vector.multi_reduction <add>, %622, %cst_156 [1] : vector<64x256xf32> to vector<64xf32>
    %624 = vector.shape_cast %623 : vector<64xf32> to vector<64x1xf32>
    %625 = vector.shape_cast %618 : vector<1x256xi1> to vector<1x256xi1>
    %626 = vector.broadcast %625 : vector<1x256xi1> to vector<64x256xi1>
    %627 = vector.shape_cast %624 : vector<64x1xf32> to vector<64x1xf32>
    %628 = vector.broadcast %627 : vector<64x1xf32> to vector<64x256xf32>
    %629 = arith.select %626, %628, %613 : vector<64x256xi1>, vector<64x256xf32>
    %c44_i32_157 = arith.constant 44 : i32
    %630 = vector.broadcast %c44_i32_157 : i32 to vector<1x256xi32>
    %631 = arith.cmpi sge, %241, %630 : vector<1x256xi32>
    %c55_i32_158 = arith.constant 55 : i32
    %632 = vector.broadcast %c55_i32_158 : i32 to vector<1x256xi32>
    %633 = arith.cmpi slt, %241, %632 : vector<1x256xi32>
    %634 = arith.andi %631, %633 : vector<1x256xi1>
    %cst_159 = arith.constant 0.000000e+00 : f32
    %635 = vector.shape_cast %634 : vector<1x256xi1> to vector<1x256xi1>
    %636 = vector.broadcast %635 : vector<1x256xi1> to vector<64x256xi1>
    %637 = vector.broadcast %cst_159 : f32 to vector<64x256xf32>
    %638 = arith.select %636, %564, %637 : vector<64x256xi1>, vector<64x256xf32>
    %cst_160 = arith.constant dense<0.000000e+00> : vector<64xf32>
    %639 = vector.multi_reduction <add>, %638, %cst_160 [1] : vector<64x256xf32> to vector<64xf32>
    %640 = vector.shape_cast %639 : vector<64xf32> to vector<64x1xf32>
    %641 = vector.shape_cast %634 : vector<1x256xi1> to vector<1x256xi1>
    %642 = vector.broadcast %641 : vector<1x256xi1> to vector<64x256xi1>
    %643 = vector.shape_cast %640 : vector<64x1xf32> to vector<64x1xf32>
    %644 = vector.broadcast %643 : vector<64x1xf32> to vector<64x256xf32>
    %645 = arith.select %642, %644, %629 : vector<64x256xi1>, vector<64x256xf32>
    %c55_i32_161 = arith.constant 55 : i32
    %646 = vector.broadcast %c55_i32_161 : i32 to vector<1x256xi32>
    %647 = arith.cmpi sge, %241, %646 : vector<1x256xi32>
    %c66_i32_162 = arith.constant 66 : i32
    %648 = vector.broadcast %c66_i32_162 : i32 to vector<1x256xi32>
    %649 = arith.cmpi slt, %241, %648 : vector<1x256xi32>
    %650 = arith.andi %647, %649 : vector<1x256xi1>
    %cst_163 = arith.constant 0.000000e+00 : f32
    %651 = vector.shape_cast %650 : vector<1x256xi1> to vector<1x256xi1>
    %652 = vector.broadcast %651 : vector<1x256xi1> to vector<64x256xi1>
    %653 = vector.broadcast %cst_163 : f32 to vector<64x256xf32>
    %654 = arith.select %652, %564, %653 : vector<64x256xi1>, vector<64x256xf32>
    %cst_164 = arith.constant dense<0.000000e+00> : vector<64xf32>
    %655 = vector.multi_reduction <add>, %654, %cst_164 [1] : vector<64x256xf32> to vector<64xf32>
    %656 = vector.shape_cast %655 : vector<64xf32> to vector<64x1xf32>
    %657 = vector.shape_cast %650 : vector<1x256xi1> to vector<1x256xi1>
    %658 = vector.broadcast %657 : vector<1x256xi1> to vector<64x256xi1>
    %659 = vector.shape_cast %656 : vector<64x1xf32> to vector<64x1xf32>
    %660 = vector.broadcast %659 : vector<64x1xf32> to vector<64x256xf32>
    %661 = arith.select %658, %660, %645 : vector<64x256xi1>, vector<64x256xf32>
    %c66_i32_165 = arith.constant 66 : i32
    %662 = vector.broadcast %c66_i32_165 : i32 to vector<1x256xi32>
    %663 = arith.cmpi sge, %241, %662 : vector<1x256xi32>
    %c77_i32_166 = arith.constant 77 : i32
    %664 = vector.broadcast %c77_i32_166 : i32 to vector<1x256xi32>
    %665 = arith.cmpi slt, %241, %664 : vector<1x256xi32>
    %666 = arith.andi %663, %665 : vector<1x256xi1>
    %cst_167 = arith.constant 0.000000e+00 : f32
    %667 = vector.shape_cast %666 : vector<1x256xi1> to vector<1x256xi1>
    %668 = vector.broadcast %667 : vector<1x256xi1> to vector<64x256xi1>
    %669 = vector.broadcast %cst_167 : f32 to vector<64x256xf32>
    %670 = arith.select %668, %564, %669 : vector<64x256xi1>, vector<64x256xf32>
    %cst_168 = arith.constant dense<0.000000e+00> : vector<64xf32>
    %671 = vector.multi_reduction <add>, %670, %cst_168 [1] : vector<64x256xf32> to vector<64xf32>
    %672 = vector.shape_cast %671 : vector<64xf32> to vector<64x1xf32>
    %673 = vector.shape_cast %666 : vector<1x256xi1> to vector<1x256xi1>
    %674 = vector.broadcast %673 : vector<1x256xi1> to vector<64x256xi1>
    %675 = vector.shape_cast %672 : vector<64x1xf32> to vector<64x1xf32>
    %676 = vector.broadcast %675 : vector<64x1xf32> to vector<64x256xf32>
    %677 = arith.select %674, %676, %661 : vector<64x256xi1>, vector<64x256xf32>
    %c77_i32_169 = arith.constant 77 : i32
    %678 = vector.broadcast %c77_i32_169 : i32 to vector<1x256xi32>
    %679 = arith.cmpi sge, %241, %678 : vector<1x256xi32>
    %c88_i32_170 = arith.constant 88 : i32
    %680 = vector.broadcast %c88_i32_170 : i32 to vector<1x256xi32>
    %681 = arith.cmpi slt, %241, %680 : vector<1x256xi32>
    %682 = arith.andi %679, %681 : vector<1x256xi1>
    %cst_171 = arith.constant 0.000000e+00 : f32
    %683 = vector.shape_cast %682 : vector<1x256xi1> to vector<1x256xi1>
    %684 = vector.broadcast %683 : vector<1x256xi1> to vector<64x256xi1>
    %685 = vector.broadcast %cst_171 : f32 to vector<64x256xf32>
    %686 = arith.select %684, %564, %685 : vector<64x256xi1>, vector<64x256xf32>
    %cst_172 = arith.constant dense<0.000000e+00> : vector<64xf32>
    %687 = vector.multi_reduction <add>, %686, %cst_172 [1] : vector<64x256xf32> to vector<64xf32>
    %688 = vector.shape_cast %687 : vector<64xf32> to vector<64x1xf32>
    %689 = vector.shape_cast %682 : vector<1x256xi1> to vector<1x256xi1>
    %690 = vector.broadcast %689 : vector<1x256xi1> to vector<64x256xi1>
    %691 = vector.shape_cast %688 : vector<64x1xf32> to vector<64x1xf32>
    %692 = vector.broadcast %691 : vector<64x1xf32> to vector<64x256xf32>
    %693 = arith.select %690, %692, %677 : vector<64x256xi1>, vector<64x256xf32>
    %c88_i32_173 = arith.constant 88 : i32
    %694 = vector.broadcast %c88_i32_173 : i32 to vector<1x256xi32>
    %695 = arith.cmpi sge, %241, %694 : vector<1x256xi32>
    %c99_i32_174 = arith.constant 99 : i32
    %696 = vector.broadcast %c99_i32_174 : i32 to vector<1x256xi32>
    %697 = arith.cmpi slt, %241, %696 : vector<1x256xi32>
    %698 = arith.andi %695, %697 : vector<1x256xi1>
    %cst_175 = arith.constant 0.000000e+00 : f32
    %699 = vector.shape_cast %698 : vector<1x256xi1> to vector<1x256xi1>
    %700 = vector.broadcast %699 : vector<1x256xi1> to vector<64x256xi1>
    %701 = vector.broadcast %cst_175 : f32 to vector<64x256xf32>
    %702 = arith.select %700, %564, %701 : vector<64x256xi1>, vector<64x256xf32>
    %cst_176 = arith.constant dense<0.000000e+00> : vector<64xf32>
    %703 = vector.multi_reduction <add>, %702, %cst_176 [1] : vector<64x256xf32> to vector<64xf32>
    %704 = vector.shape_cast %703 : vector<64xf32> to vector<64x1xf32>
    %705 = vector.shape_cast %698 : vector<1x256xi1> to vector<1x256xi1>
    %706 = vector.broadcast %705 : vector<1x256xi1> to vector<64x256xi1>
    %707 = vector.shape_cast %704 : vector<64x1xf32> to vector<64x1xf32>
    %708 = vector.broadcast %707 : vector<64x1xf32> to vector<64x256xf32>
    %709 = arith.select %706, %708, %693 : vector<64x256xi1>, vector<64x256xf32>
    %c99_i32_177 = arith.constant 99 : i32
    %710 = vector.broadcast %c99_i32_177 : i32 to vector<1x256xi32>
    %711 = arith.cmpi sge, %241, %710 : vector<1x256xi32>
    %c110_i32_178 = arith.constant 110 : i32
    %712 = vector.broadcast %c110_i32_178 : i32 to vector<1x256xi32>
    %713 = arith.cmpi slt, %241, %712 : vector<1x256xi32>
    %714 = arith.andi %711, %713 : vector<1x256xi1>
    %cst_179 = arith.constant 0.000000e+00 : f32
    %715 = vector.shape_cast %714 : vector<1x256xi1> to vector<1x256xi1>
    %716 = vector.broadcast %715 : vector<1x256xi1> to vector<64x256xi1>
    %717 = vector.broadcast %cst_179 : f32 to vector<64x256xf32>
    %718 = arith.select %716, %564, %717 : vector<64x256xi1>, vector<64x256xf32>
    %cst_180 = arith.constant dense<0.000000e+00> : vector<64xf32>
    %719 = vector.multi_reduction <add>, %718, %cst_180 [1] : vector<64x256xf32> to vector<64xf32>
    %720 = vector.shape_cast %719 : vector<64xf32> to vector<64x1xf32>
    %721 = vector.shape_cast %714 : vector<1x256xi1> to vector<1x256xi1>
    %722 = vector.broadcast %721 : vector<1x256xi1> to vector<64x256xi1>
    %723 = vector.shape_cast %720 : vector<64x1xf32> to vector<64x1xf32>
    %724 = vector.broadcast %723 : vector<64x1xf32> to vector<64x256xf32>
    %725 = arith.select %722, %724, %709 : vector<64x256xi1>, vector<64x256xf32>
    %c110_i32_181 = arith.constant 110 : i32
    %726 = vector.broadcast %c110_i32_181 : i32 to vector<1x256xi32>
    %727 = arith.cmpi sge, %241, %726 : vector<1x256xi32>
    %c121_i32_182 = arith.constant 121 : i32
    %728 = vector.broadcast %c121_i32_182 : i32 to vector<1x256xi32>
    %729 = arith.cmpi slt, %241, %728 : vector<1x256xi32>
    %730 = arith.andi %727, %729 : vector<1x256xi1>
    %cst_183 = arith.constant 0.000000e+00 : f32
    %731 = vector.shape_cast %730 : vector<1x256xi1> to vector<1x256xi1>
    %732 = vector.broadcast %731 : vector<1x256xi1> to vector<64x256xi1>
    %733 = vector.broadcast %cst_183 : f32 to vector<64x256xf32>
    %734 = arith.select %732, %564, %733 : vector<64x256xi1>, vector<64x256xf32>
    %cst_184 = arith.constant dense<0.000000e+00> : vector<64xf32>
    %735 = vector.multi_reduction <add>, %734, %cst_184 [1] : vector<64x256xf32> to vector<64xf32>
    %736 = vector.shape_cast %735 : vector<64xf32> to vector<64x1xf32>
    %737 = vector.shape_cast %730 : vector<1x256xi1> to vector<1x256xi1>
    %738 = vector.broadcast %737 : vector<1x256xi1> to vector<64x256xi1>
    %739 = vector.shape_cast %736 : vector<64x1xf32> to vector<64x1xf32>
    %740 = vector.broadcast %739 : vector<64x1xf32> to vector<64x256xf32>
    %741 = arith.select %738, %740, %725 : vector<64x256xi1>, vector<64x256xf32>
    %c121_i32_185 = arith.constant 121 : i32
    %742 = vector.broadcast %c121_i32_185 : i32 to vector<1x256xi32>
    %743 = arith.cmpi sge, %241, %742 : vector<1x256xi32>
    %c132_i32_186 = arith.constant 132 : i32
    %744 = vector.broadcast %c132_i32_186 : i32 to vector<1x256xi32>
    %745 = arith.cmpi slt, %241, %744 : vector<1x256xi32>
    %746 = arith.andi %743, %745 : vector<1x256xi1>
    %cst_187 = arith.constant 0.000000e+00 : f32
    %747 = vector.shape_cast %746 : vector<1x256xi1> to vector<1x256xi1>
    %748 = vector.broadcast %747 : vector<1x256xi1> to vector<64x256xi1>
    %749 = vector.broadcast %cst_187 : f32 to vector<64x256xf32>
    %750 = arith.select %748, %564, %749 : vector<64x256xi1>, vector<64x256xf32>
    %cst_188 = arith.constant dense<0.000000e+00> : vector<64xf32>
    %751 = vector.multi_reduction <add>, %750, %cst_188 [1] : vector<64x256xf32> to vector<64xf32>
    %752 = vector.shape_cast %751 : vector<64xf32> to vector<64x1xf32>
    %753 = vector.shape_cast %746 : vector<1x256xi1> to vector<1x256xi1>
    %754 = vector.broadcast %753 : vector<1x256xi1> to vector<64x256xi1>
    %755 = vector.shape_cast %752 : vector<64x1xf32> to vector<64x1xf32>
    %756 = vector.broadcast %755 : vector<64x1xf32> to vector<64x256xf32>
    %757 = arith.select %754, %756, %741 : vector<64x256xi1>, vector<64x256xf32>
    %c132_i32_189 = arith.constant 132 : i32
    %758 = vector.broadcast %c132_i32_189 : i32 to vector<1x256xi32>
    %759 = arith.cmpi sge, %241, %758 : vector<1x256xi32>
    %c143_i32_190 = arith.constant 143 : i32
    %760 = vector.broadcast %c143_i32_190 : i32 to vector<1x256xi32>
    %761 = arith.cmpi slt, %241, %760 : vector<1x256xi32>
    %762 = arith.andi %759, %761 : vector<1x256xi1>
    %cst_191 = arith.constant 0.000000e+00 : f32
    %763 = vector.shape_cast %762 : vector<1x256xi1> to vector<1x256xi1>
    %764 = vector.broadcast %763 : vector<1x256xi1> to vector<64x256xi1>
    %765 = vector.broadcast %cst_191 : f32 to vector<64x256xf32>
    %766 = arith.select %764, %564, %765 : vector<64x256xi1>, vector<64x256xf32>
    %cst_192 = arith.constant dense<0.000000e+00> : vector<64xf32>
    %767 = vector.multi_reduction <add>, %766, %cst_192 [1] : vector<64x256xf32> to vector<64xf32>
    %768 = vector.shape_cast %767 : vector<64xf32> to vector<64x1xf32>
    %769 = vector.shape_cast %762 : vector<1x256xi1> to vector<1x256xi1>
    %770 = vector.broadcast %769 : vector<1x256xi1> to vector<64x256xi1>
    %771 = vector.shape_cast %768 : vector<64x1xf32> to vector<64x1xf32>
    %772 = vector.broadcast %771 : vector<64x1xf32> to vector<64x256xf32>
    %773 = arith.select %770, %772, %757 : vector<64x256xi1>, vector<64x256xf32>
    %c143_i32_193 = arith.constant 143 : i32
    %774 = vector.broadcast %c143_i32_193 : i32 to vector<1x256xi32>
    %775 = arith.cmpi sge, %241, %774 : vector<1x256xi32>
    %c154_i32_194 = arith.constant 154 : i32
    %776 = vector.broadcast %c154_i32_194 : i32 to vector<1x256xi32>
    %777 = arith.cmpi slt, %241, %776 : vector<1x256xi32>
    %778 = arith.andi %775, %777 : vector<1x256xi1>
    %cst_195 = arith.constant 0.000000e+00 : f32
    %779 = vector.shape_cast %778 : vector<1x256xi1> to vector<1x256xi1>
    %780 = vector.broadcast %779 : vector<1x256xi1> to vector<64x256xi1>
    %781 = vector.broadcast %cst_195 : f32 to vector<64x256xf32>
    %782 = arith.select %780, %564, %781 : vector<64x256xi1>, vector<64x256xf32>
    %cst_196 = arith.constant dense<0.000000e+00> : vector<64xf32>
    %783 = vector.multi_reduction <add>, %782, %cst_196 [1] : vector<64x256xf32> to vector<64xf32>
    %784 = vector.shape_cast %783 : vector<64xf32> to vector<64x1xf32>
    %785 = vector.shape_cast %778 : vector<1x256xi1> to vector<1x256xi1>
    %786 = vector.broadcast %785 : vector<1x256xi1> to vector<64x256xi1>
    %787 = vector.shape_cast %784 : vector<64x1xf32> to vector<64x1xf32>
    %788 = vector.broadcast %787 : vector<64x1xf32> to vector<64x256xf32>
    %789 = arith.select %786, %788, %773 : vector<64x256xi1>, vector<64x256xf32>
    %c154_i32_197 = arith.constant 154 : i32
    %790 = vector.broadcast %c154_i32_197 : i32 to vector<1x256xi32>
    %791 = arith.cmpi sge, %241, %790 : vector<1x256xi32>
    %c165_i32_198 = arith.constant 165 : i32
    %792 = vector.broadcast %c165_i32_198 : i32 to vector<1x256xi32>
    %793 = arith.cmpi slt, %241, %792 : vector<1x256xi32>
    %794 = arith.andi %791, %793 : vector<1x256xi1>
    %cst_199 = arith.constant 0.000000e+00 : f32
    %795 = vector.shape_cast %794 : vector<1x256xi1> to vector<1x256xi1>
    %796 = vector.broadcast %795 : vector<1x256xi1> to vector<64x256xi1>
    %797 = vector.broadcast %cst_199 : f32 to vector<64x256xf32>
    %798 = arith.select %796, %564, %797 : vector<64x256xi1>, vector<64x256xf32>
    %cst_200 = arith.constant dense<0.000000e+00> : vector<64xf32>
    %799 = vector.multi_reduction <add>, %798, %cst_200 [1] : vector<64x256xf32> to vector<64xf32>
    %800 = vector.shape_cast %799 : vector<64xf32> to vector<64x1xf32>
    %801 = vector.shape_cast %794 : vector<1x256xi1> to vector<1x256xi1>
    %802 = vector.broadcast %801 : vector<1x256xi1> to vector<64x256xi1>
    %803 = vector.shape_cast %800 : vector<64x1xf32> to vector<64x1xf32>
    %804 = vector.broadcast %803 : vector<64x1xf32> to vector<64x256xf32>
    %805 = arith.select %802, %804, %789 : vector<64x256xi1>, vector<64x256xf32>
    %c165_i32_201 = arith.constant 165 : i32
    %806 = vector.broadcast %c165_i32_201 : i32 to vector<1x256xi32>
    %807 = arith.cmpi sge, %241, %806 : vector<1x256xi32>
    %c176_i32_202 = arith.constant 176 : i32
    %808 = vector.broadcast %c176_i32_202 : i32 to vector<1x256xi32>
    %809 = arith.cmpi slt, %241, %808 : vector<1x256xi32>
    %810 = arith.andi %807, %809 : vector<1x256xi1>
    %cst_203 = arith.constant 0.000000e+00 : f32
    %811 = vector.shape_cast %810 : vector<1x256xi1> to vector<1x256xi1>
    %812 = vector.broadcast %811 : vector<1x256xi1> to vector<64x256xi1>
    %813 = vector.broadcast %cst_203 : f32 to vector<64x256xf32>
    %814 = arith.select %812, %564, %813 : vector<64x256xi1>, vector<64x256xf32>
    %cst_204 = arith.constant dense<0.000000e+00> : vector<64xf32>
    %815 = vector.multi_reduction <add>, %814, %cst_204 [1] : vector<64x256xf32> to vector<64xf32>
    %816 = vector.shape_cast %815 : vector<64xf32> to vector<64x1xf32>
    %817 = vector.shape_cast %810 : vector<1x256xi1> to vector<1x256xi1>
    %818 = vector.broadcast %817 : vector<1x256xi1> to vector<64x256xi1>
    %819 = vector.shape_cast %816 : vector<64x1xf32> to vector<64x1xf32>
    %820 = vector.broadcast %819 : vector<64x1xf32> to vector<64x256xf32>
    %821 = arith.select %818, %820, %805 : vector<64x256xi1>, vector<64x256xf32>
    %c176_i32_205 = arith.constant 176 : i32
    %822 = vector.broadcast %c176_i32_205 : i32 to vector<1x256xi32>
    %823 = arith.cmpi sge, %241, %822 : vector<1x256xi32>
    %c187_i32_206 = arith.constant 187 : i32
    %824 = vector.broadcast %c187_i32_206 : i32 to vector<1x256xi32>
    %825 = arith.cmpi slt, %241, %824 : vector<1x256xi32>
    %826 = arith.andi %823, %825 : vector<1x256xi1>
    %cst_207 = arith.constant 0.000000e+00 : f32
    %827 = vector.shape_cast %826 : vector<1x256xi1> to vector<1x256xi1>
    %828 = vector.broadcast %827 : vector<1x256xi1> to vector<64x256xi1>
    %829 = vector.broadcast %cst_207 : f32 to vector<64x256xf32>
    %830 = arith.select %828, %564, %829 : vector<64x256xi1>, vector<64x256xf32>
    %cst_208 = arith.constant dense<0.000000e+00> : vector<64xf32>
    %831 = vector.multi_reduction <add>, %830, %cst_208 [1] : vector<64x256xf32> to vector<64xf32>
    %832 = vector.shape_cast %831 : vector<64xf32> to vector<64x1xf32>
    %833 = vector.shape_cast %826 : vector<1x256xi1> to vector<1x256xi1>
    %834 = vector.broadcast %833 : vector<1x256xi1> to vector<64x256xi1>
    %835 = vector.shape_cast %832 : vector<64x1xf32> to vector<64x1xf32>
    %836 = vector.broadcast %835 : vector<64x1xf32> to vector<64x256xf32>
    %837 = arith.select %834, %836, %821 : vector<64x256xi1>, vector<64x256xf32>
    %c187_i32_209 = arith.constant 187 : i32
    %838 = vector.broadcast %c187_i32_209 : i32 to vector<1x256xi32>
    %839 = arith.cmpi sge, %241, %838 : vector<1x256xi32>
    %c198_i32_210 = arith.constant 198 : i32
    %840 = vector.broadcast %c198_i32_210 : i32 to vector<1x256xi32>
    %841 = arith.cmpi slt, %241, %840 : vector<1x256xi32>
    %842 = arith.andi %839, %841 : vector<1x256xi1>
    %cst_211 = arith.constant 0.000000e+00 : f32
    %843 = vector.shape_cast %842 : vector<1x256xi1> to vector<1x256xi1>
    %844 = vector.broadcast %843 : vector<1x256xi1> to vector<64x256xi1>
    %845 = vector.broadcast %cst_211 : f32 to vector<64x256xf32>
    %846 = arith.select %844, %564, %845 : vector<64x256xi1>, vector<64x256xf32>
    %cst_212 = arith.constant dense<0.000000e+00> : vector<64xf32>
    %847 = vector.multi_reduction <add>, %846, %cst_212 [1] : vector<64x256xf32> to vector<64xf32>
    %848 = vector.shape_cast %847 : vector<64xf32> to vector<64x1xf32>
    %849 = vector.shape_cast %842 : vector<1x256xi1> to vector<1x256xi1>
    %850 = vector.broadcast %849 : vector<1x256xi1> to vector<64x256xi1>
    %851 = vector.shape_cast %848 : vector<64x1xf32> to vector<64x1xf32>
    %852 = vector.broadcast %851 : vector<64x1xf32> to vector<64x256xf32>
    %853 = arith.select %850, %852, %837 : vector<64x256xi1>, vector<64x256xf32>
    %c198_i32_213 = arith.constant 198 : i32
    %854 = vector.broadcast %c198_i32_213 : i32 to vector<1x256xi32>
    %855 = arith.cmpi sge, %241, %854 : vector<1x256xi32>
    %c209_i32_214 = arith.constant 209 : i32
    %856 = vector.broadcast %c209_i32_214 : i32 to vector<1x256xi32>
    %857 = arith.cmpi slt, %241, %856 : vector<1x256xi32>
    %858 = arith.andi %855, %857 : vector<1x256xi1>
    %cst_215 = arith.constant 0.000000e+00 : f32
    %859 = vector.shape_cast %858 : vector<1x256xi1> to vector<1x256xi1>
    %860 = vector.broadcast %859 : vector<1x256xi1> to vector<64x256xi1>
    %861 = vector.broadcast %cst_215 : f32 to vector<64x256xf32>
    %862 = arith.select %860, %564, %861 : vector<64x256xi1>, vector<64x256xf32>
    %cst_216 = arith.constant dense<0.000000e+00> : vector<64xf32>
    %863 = vector.multi_reduction <add>, %862, %cst_216 [1] : vector<64x256xf32> to vector<64xf32>
    %864 = vector.shape_cast %863 : vector<64xf32> to vector<64x1xf32>
    %865 = vector.shape_cast %858 : vector<1x256xi1> to vector<1x256xi1>
    %866 = vector.broadcast %865 : vector<1x256xi1> to vector<64x256xi1>
    %867 = vector.shape_cast %864 : vector<64x1xf32> to vector<64x1xf32>
    %868 = vector.broadcast %867 : vector<64x1xf32> to vector<64x256xf32>
    %869 = arith.select %866, %868, %853 : vector<64x256xi1>, vector<64x256xf32>
    %c209_i32_217 = arith.constant 209 : i32
    %870 = vector.broadcast %c209_i32_217 : i32 to vector<1x256xi32>
    %871 = arith.cmpi sge, %241, %870 : vector<1x256xi32>
    %c220_i32_218 = arith.constant 220 : i32
    %872 = vector.broadcast %c220_i32_218 : i32 to vector<1x256xi32>
    %873 = arith.cmpi slt, %241, %872 : vector<1x256xi32>
    %874 = arith.andi %871, %873 : vector<1x256xi1>
    %cst_219 = arith.constant 0.000000e+00 : f32
    %875 = vector.shape_cast %874 : vector<1x256xi1> to vector<1x256xi1>
    %876 = vector.broadcast %875 : vector<1x256xi1> to vector<64x256xi1>
    %877 = vector.broadcast %cst_219 : f32 to vector<64x256xf32>
    %878 = arith.select %876, %564, %877 : vector<64x256xi1>, vector<64x256xf32>
    %cst_220 = arith.constant dense<0.000000e+00> : vector<64xf32>
    %879 = vector.multi_reduction <add>, %878, %cst_220 [1] : vector<64x256xf32> to vector<64xf32>
    %880 = vector.shape_cast %879 : vector<64xf32> to vector<64x1xf32>
    %881 = vector.shape_cast %874 : vector<1x256xi1> to vector<1x256xi1>
    %882 = vector.broadcast %881 : vector<1x256xi1> to vector<64x256xi1>
    %883 = vector.shape_cast %880 : vector<64x1xf32> to vector<64x1xf32>
    %884 = vector.broadcast %883 : vector<64x1xf32> to vector<64x256xf32>
    %885 = arith.select %882, %884, %869 : vector<64x256xi1>, vector<64x256xf32>
    %cst_221 = arith.constant 0.000000e+00 : f32
    %886 = vector.broadcast %cst_221 : f32 to vector<64x256xf32>
    %887 = arith.cmpf ogt, %885, %886 : vector<64x256xf32>
    %cst_222 = arith.constant 1.000000e+00 : f32
    %888 = vector.broadcast %cst_222 : f32 to vector<64x256xf32>
    %889 = arith.select %887, %885, %888 : vector<64x256xi1>, vector<64x256xf32>
    %890 = tpu.reciprocal %889 : vector<64x256xf32> -> vector<64x256xf32>
    %891 = arith.mulf %564, %890 : vector<64x256xf32>
    %c0_223 = arith.constant 0 : index
    %c0_224 = arith.constant 0 : index
    %892 = vector.load %arg13[%c0_223, %c0_224] : memref<64x256xf32, #tpu.memory_space<vmem>>, vector<64x256xf32>
    tpu.vector_store %arg13[%c0_223, %c0_224], %891 {strides = array<i32>} : memref<64x256xf32, #tpu.memory_space<vmem>>, vector<64x256xf32>,
    return
  }
  func.func @transform_0(%arg0: i32) -> (i32, i32) {
    %c0_i32 = arith.constant 0 : i32
    %c0_i32_0 = arith.constant 0 : i32
    %c0_i32_1 = arith.constant 0 : i32
    return %c0_i32, %c0_i32_0 : i32, i32
  }
  func.func @transform_1(%arg0: i32) -> (i32, i32) {
    %c0_i32 = arith.constant 0 : i32
    %c0_i32_0 = arith.constant 0 : i32
    %c0_i32_1 = arith.constant 0 : i32
    return %c0_i32, %c0_i32_0 : i32, i32
  }
  func.func @transform_2(%arg0: i32) -> (i32, i32) {
    %c0_i32 = arith.constant 0 : i32
    %c0_i32_0 = arith.constant 0 : i32
    %c0_i32_1 = arith.constant 0 : i32
    return %c0_i32, %c0_i32_0 : i32, i32
  }
  func.func @transform_3(%arg0: i32) -> (i32, i32) {
    %c0_i32 = arith.constant 0 : i32
    %c0_i32_0 = arith.constant 0 : i32
    %c0_i32_1 = arith.constant 0 : i32
    return %c0_i32, %c0_i32_0 : i32, i32
  }
  func.func @transform_4(%arg0: i32) -> (i32, i32) {
    %c0_i32 = arith.constant 0 : i32
    %c0_i32_0 = arith.constant 0 : i32
    %c0_i32_1 = arith.constant 0 : i32
    return %c0_i32, %c0_i32_0 : i32, i32
  }
  func.func @transform_5(%arg0: i32) -> (i32, i32) {
    %c0_i32 = arith.constant 0 : i32
    %c0_i32_0 = arith.constant 0 : i32
    %c0_i32_1 = arith.constant 0 : i32
    return %c0_i32, %c0_i32_0 : i32, i32
  }
  func.func @transform_6(%arg0: i32) -> (i32, i32) {
    %c0_i32 = arith.constant 0 : i32
    %c0_i32_0 = arith.constant 0 : i32
    %c0_i32_1 = arith.constant 0 : i32
    return %c0_i32, %c0_i32_0 : i32, i32
  }
  func.func @transform_7(%arg0: i32) -> (i32, i32) {
    %c0_i32 = arith.constant 0 : i32
    %c0_i32_0 = arith.constant 0 : i32
    %c0_i32_1 = arith.constant 0 : i32
    return %c0_i32, %c0_i32_0 : i32, i32
  }
  func.func @transform_8(%arg0: i32) -> (i32, i32) {
    %c0_i32 = arith.constant 0 : i32
    %c0_i32_0 = arith.constant 0 : i32
    %c0_i32_1 = arith.constant 0 : i32
    return %c0_i32, %c0_i32_0 : i32, i32
  }
  func.func @transform_9(%arg0: i32) -> (i32, i32) {
    %c0_i32 = arith.constant 0 : i32
    %c0_i32_0 = arith.constant 0 : i32
    %c0_i32_1 = arith.constant 0 : i32
    return %c0_i32, %c0_i32_0 : i32, i32
  }
  func.func @transform_10(%arg0: i32) -> (i32, i32) {
    %c0_i32 = arith.constant 0 : i32
    %c0_i32_0 = arith.constant 0 : i32
    %c0_i32_1 = arith.constant 0 : i32
    return %c0_i32, %c0_i32_0 : i32, i32
  }
  func.func @transform_11(%arg0: i32) -> (i32, i32) {
    %c0_i32 = arith.constant 0 : i32
    %c0_i32_0 = arith.constant 0 : i32
    %c0_i32_1 = arith.constant 0 : i32
    return %c0_i32, %c0_i32_0 : i32, i32
  }
  func.func @transform_12(%arg0: i32) -> (i32, i32) {
    %c0_i32 = arith.constant 0 : i32
    %c0_i32_0 = arith.constant 0 : i32
    %c0_i32_1 = arith.constant 0 : i32
    return %c0_i32, %c0_i32_0 : i32, i32
  }
  func.func @transform_13(%arg0: i32) -> (i32, i32) {
    %c0_i32 = arith.constant 0 : i32
    %c0_i32_0 = arith.constant 0 : i32
    %c0_i32_1 = arith.constant 0 : i32
    return %c0_i32, %c0_i32_0 : i32, i32
  }
  func.func @transform_14(%arg0: i32) -> (i32, i32) {
    %c0_i32 = arith.constant 0 : i32
    %c0_i32_0 = arith.constant 0 : i32
    %c0_i32_1 = arith.constant 0 : i32
    return %c0_i32, %c0_i32_0 : i32, i32
  }
}

</mosaic_0001>

<llo_original>
// kernel: tpu_custom_call.1
$region0: #{tpu_custom_call.1}
  #allocation0 [shape = 'u32[]', space=smem, size = 0x4, offset = 0x4, fixed_abs, tag = 'smem constant byte address 0x4 - core index']
  #allocation1 [shape = 'u32[144,128]{1,0:T(1,128)}', space=vmem, size = 0x12000, scoped, tag = 'internal scratch']
  #allocation2 [shape = 'f32[64,128]{1,0:T(8,128)}', space=vmem, size = 0x8000, scoped, tag = 'scratch operand']
  #allocation3 [shape = 'f32[64,32]{1,0:T(8,128)}', space=vmem, size = 0x8000, scoped, tag = 'scratch operand']
  %s0 = inlined_call_operand.vmem [shape: f32[64,32], index: 0, kind: input, shape index: {}]
  %s1 = inlined_call_operand.hbm [shape: f32[1,32], index: 1, kind: input, shape index: {}]
  %s2 = inlined_call_operand.hbm [shape: f32[1,32], index: 2, kind: input, shape index: {}]
  %s3 = inlined_call_operand.vmem [shape: f32[32,64], index: 3, kind: input, shape index: {}]
  %s4 = inlined_call_operand.hbm [shape: f32[1,64], index: 4, kind: input, shape index: {}]
  %s5 = inlined_call_operand.vmem [shape: f32[64,128], index: 5, kind: input, shape index: {}]
  %s6 = inlined_call_operand.hbm [shape: f32[32,128], index: 6, kind: input, shape index: {}]
  %s7 = inlined_call_operand.vmem [shape: f32[1,128], index: 7, kind: input, shape index: {}]
  %s8 = inlined_call_operand.hbm [shape: f32[32,256], index: 8, kind: input, shape index: {}]
  %s9 = inlined_call_operand.vmem [shape: f32[1,256], index: 9, kind: input, shape index: {}]
  %s10 = inlined_call_operand.vmem [shape: f32[8,32], index: 10, kind: input, shape index: {}]
  %s11 = inlined_call_operand.vmem [shape: f32[8,32], index: 11, kind: input, shape index: {}]
  %s12 = inlined_call_operand.hbm [shape: f32[64,256], index: 12, kind: output, shape index: {0}]
  %s13 = inlined_call_operand.hbm [shape: f32[8,32], index: 13, kind: output, shape index: {1}]
  %s14 = inlined_call_operand.hbm [shape: f32[8,32], index: 14, kind: output, shape index: {2}]
  %15 = xla_tuple %s12, %s13, %s14
  %s16 = sld [smem:[#allocation0]]
  $region94: #{tpu_custom_call.1} parent=0
    _
  %s18 = ssub.s32 1, %s16
  %s19 = scalar_select 0, %s18, %s16
  $region1: #{tpu_custom_call.1} parent=0
    #allocation4 [shape = 'u8[512]{0}', space=vmem, size = 0x400, scoped, tag = 'input window, operand 1, single buffered']
    #allocation5 [shape = 's32[1]{0}', space=sflag, size = 0x4, scoped, tag = 'scoped memory for tpu_custom_call.1']
    #allocation6 [shape = 's32[1]{0}', space=sflag, size = 0x4, scoped, tag = 'scoped memory for tpu_custom_call.1']
    #allocation7 [shape = 'u8[512]{0}', space=vmem, size = 0x400, scoped, tag = 'input window, operand 2, single buffered']
    #allocation8 [shape = 's32[1]{0}', space=sflag, size = 0x4, scoped, tag = 'scoped memory for tpu_custom_call.1']
    #allocation9 [shape = 'u8[512]{0}', space=vmem, size = 0x400, scoped, tag = 'input window, operand 4, single buffered']
    #allocation10 [shape = 'u8[16384]{0}', space=vmem, size = 0x4000, scoped, tag = 'input window, operand 6, single buffered']
    #allocation11 [shape = 's32[1]{0}', space=sflag, size = 0x4, scoped, tag = 'scoped memory for tpu_custom_call.1']
    #allocation12 [shape = 'u8[32768]{0}', space=vmem, size = 0x8000, scoped, tag = 'input window, operand 8, single buffered']
    #allocation13 [shape = 'u8[65536]{0}', space=vmem, size = 0x10000, scoped, tag = 'output window, operand 0, single buffered']
    #allocation14 [shape = 'u8[4096]{0}', space=vmem, size = 0x1000, scoped, tag = 'output window, operand 1, single buffered']
    #allocation15 [shape = 's32[1]{0}', space=sflag, size = 0x4, scoped, tag = 'scoped memory for tpu_custom_call.1']
    #allocation16 [shape = 'u8[4096]{0}', space=vmem, size = 0x1000, scoped, tag = 'output window, operand 2, single buffered']
    %20 = vsyncpa [#allocation5], 0
    %21 = vsyncpa [#allocation8], 0
    %22 = vsyncpa [#allocation11], 0
    %23 = vsyncpa [#allocation6], 0
    %24 = vsyncpa [#allocation15], 0
    // Predicated region
    $region2: #{tpu_custom_call.1} parent=1 // pred_check
      _
    $region3: #{tpu_custom_call.1} parent=1 // pred_check_branch
      %26 = sbr.rel (0) target = $region5
    $region4: #{tpu_custom_call.1} parent=1 // pred_region
      _
    $region5: #{tpu_custom_call.1} parent=1 // pred_fallthru
      _
    // Predicated region
    $region6: #{tpu_custom_call.1} parent=1 // pred_check
      _
    $region7: #{tpu_custom_call.1} parent=1 // pred_check_branch
      %28 = sbr.rel (0) target = $region9
    $region8: #{tpu_custom_call.1} parent=1 // pred_region
      %s30 = ssub.s32 16, 16
      %31 = vsyncadd [#allocation5], %s30
      %s33 = sshll.u32 [#allocation4], 4
      %s34 = int_to_ptr.vmem [resolvable:$true] %s33
      %36 = dma.hbm_to_vmem [thread:$0]  %s1, 16, %s34, [#allocation5]
    $region9: #{tpu_custom_call.1} parent=1 // pred_fallthru
      _
    // Predicated region
    $region10: #{tpu_custom_call.1} parent=1 // pred_check
      _
    $region11: #{tpu_custom_call.1} parent=1 // pred_check_branch
      %38 = sbr.rel (0) target = $region13
    $region12: #{tpu_custom_call.1} parent=1 // pred_region
      %s40 = ssub.s32 16, 16
      %41 = vsyncadd [#allocation8], %s40
      %s43 = sshll.u32 [#allocation7], 4
      %s44 = int_to_ptr.vmem [resolvable:$true] %s43
      %46 = dma.hbm_to_vmem [thread:$0]  %s2, 16, %s44, [#allocation8]
    $region13: #{tpu_custom_call.1} parent=1 // pred_fallthru
      _
    // Predicated region
    $region14: #{tpu_custom_call.1} parent=1 // pred_check
      _
    $region15: #{tpu_custom_call.1} parent=1 // pred_check_branch
      %48 = sbr.rel (0) target = $region17
    $region16: #{tpu_custom_call.1} parent=1 // pred_region
      _
    $region17: #{tpu_custom_call.1} parent=1 // pred_fallthru
      _
    // Predicated region
    $region18: #{tpu_custom_call.1} parent=1 // pred_check
      _
    $region19: #{tpu_custom_call.1} parent=1 // pred_check_branch
      %50 = sbr.rel (0) target = $region21
    $region20: #{tpu_custom_call.1} parent=1 // pred_region
      %s52 = ssub.s32 16, 16
      %53 = vsyncadd [#allocation8], %s52
      %s55 = sshll.u32 [#allocation9], 4
      %s56 = int_to_ptr.vmem [resolvable:$true] %s55
      %58 = dma.hbm_to_vmem [thread:$0]  %s4, 16, %s56, [#allocation8]
    $region21: #{tpu_custom_call.1} parent=1 // pred_fallthru
      _
    // Predicated region
    $region22: #{tpu_custom_call.1} parent=1 // pred_check
      _
    $region23: #{tpu_custom_call.1} parent=1 // pred_check_branch
      %60 = sbr.rel (0) target = $region25
    $region24: #{tpu_custom_call.1} parent=1 // pred_region
      _
    $region25: #{tpu_custom_call.1} parent=1 // pred_fallthru
      _
    // Predicated region
    $region26: #{tpu_custom_call.1} parent=1 // pred_check
      _
    $region27: #{tpu_custom_call.1} parent=1 // pred_check_branch
      %62 = sbr.rel (0) target = $region29
    $region28: #{tpu_custom_call.1} parent=1 // pred_region
      %s64 = ssub.s32 512, 512
      %65 = vsyncadd [#allocation11], %s64
      %s66 = sshll.u32 [#allocation10], 4
      %s67 = int_to_ptr.vmem [resolvable:$true] %s66
      %72 = dma.hbm_to_vmem [thread:$0]  %s6, 512, %s67, [#allocation11], 128, 128, 8
    $region29: #{tpu_custom_call.1} parent=1 // pred_fallthru
      _
    // Predicated region
    $region30: #{tpu_custom_call.1} parent=1 // pred_check
      _
    $region31: #{tpu_custom_call.1} parent=1 // pred_check_branch
      %74 = sbr.rel (0) target = $region33
    $region32: #{tpu_custom_call.1} parent=1 // pred_region
      _
    $region33: #{tpu_custom_call.1} parent=1 // pred_fallthru
      _
    // Predicated region
    $region34: #{tpu_custom_call.1} parent=1 // pred_check
      _
    $region35: #{tpu_custom_call.1} parent=1 // pred_check_branch
      %76 = sbr.rel (0) target = $region37
    $region36: #{tpu_custom_call.1} parent=1 // pred_region
      %s78 = ssub.s32 1024, 1024
      %79 = vsyncadd [#allocation11], %s78
      %s80 = sshll.u32 [#allocation12], 4
      %s81 = int_to_ptr.vmem [resolvable:$true] %s80
      %86 = dma.hbm_to_vmem [thread:$0]  %s8, 1024, %s81, [#allocation11], 256, 256, 16
    $region37: #{tpu_custom_call.1} parent=1 // pred_fallthru
      _
    // Predicated region
    $region38: #{tpu_custom_call.1} parent=1 // pred_check
      _
    $region39: #{tpu_custom_call.1} parent=1 // pred_check_branch
      %88 = sbr.rel (0) target = $region41
    $region40: #{tpu_custom_call.1} parent=1 // pred_region
      _
    $region41: #{tpu_custom_call.1} parent=1 // pred_fallthru
      _
    // Predicated region
    $region42: #{tpu_custom_call.1} parent=1 // pred_check
      _
    $region43: #{tpu_custom_call.1} parent=1 // pred_check_branch
      %90 = sbr.rel (0) target = $region45
    $region44: #{tpu_custom_call.1} parent=1 // pred_region
      _
    $region45: #{tpu_custom_call.1} parent=1 // pred_fallthru
      _
    // Predicated region
    $region46: #{tpu_custom_call.1} parent=1 // pred_check
      _
    $region47: #{tpu_custom_call.1} parent=1 // pred_check_branch
      %92 = sbr.rel (0) target = $region49
    $region48: #{tpu_custom_call.1} parent=1 // pred_region
      _
    $region49: #{tpu_custom_call.1} parent=1 // pred_fallthru
      _
    // Predicated region
    $region50: #{tpu_custom_call.1} parent=1 // pred_check
      _
    $region51: #{tpu_custom_call.1} parent=1 // pred_check_branch
      %94 = sbr.rel (0) target = $region53
    $region52: #{tpu_custom_call.1} parent=1 // pred_region
      %95 = dma.done [#allocation5], 16
    $region53: #{tpu_custom_call.1} parent=1 // pred_fallthru
      _
    // Predicated region
    $region54: #{tpu_custom_call.1} parent=1 // pred_check
      _
    $region55: #{tpu_custom_call.1} parent=1 // pred_check_branch
      %97 = sbr.rel (0) target = $region57
    $region56: #{tpu_custom_call.1} parent=1 // pred_region
      %98 = dma.done [#allocation8], 16
    $region57: #{tpu_custom_call.1} parent=1 // pred_fallthru
      _
    // Predicated region
    $region58: #{tpu_custom_call.1} parent=1 // pred_check
      _
    $region59: #{tpu_custom_call.1} parent=1 // pred_check_branch
      %100 = sbr.rel (0) target = $region61
    $region60: #{tpu_custom_call.1} parent=1 // pred_region
      %101 = dma.done [#allocation8], 16
    $region61: #{tpu_custom_call.1} parent=1 // pred_fallthru
      _
    // Predicated region
    $region62: #{tpu_custom_call.1} parent=1 // pred_check
      _
    $region63: #{tpu_custom_call.1} parent=1 // pred_check_branch
      %103 = sbr.rel (0) target = $region65
    $region64: #{tpu_custom_call.1} parent=1 // pred_region
      %104 = dma.done [#allocation11], 512
    $region65: #{tpu_custom_call.1} parent=1 // pred_fallthru
      _
    // Predicated region
    $region66: #{tpu_custom_call.1} parent=1 // pred_check
      _
    $region67: #{tpu_custom_call.1} parent=1 // pred_check_branch
      %106 = sbr.rel (0) target = $region69
    $region68: #{tpu_custom_call.1} parent=1 // pred_region
      %107 = dma.done [#allocation11], 1024
    $region69: #{tpu_custom_call.1} parent=1 // pred_fallthru
      _
    %v108 = vld [vmem:[%s0] sm:$0xff]
    %v109 = vld [vmem:[%s0 + $0x8] sm:$0xff]
    %v110 = vld [vmem:[%s0 + $0x10] sm:$0xff]
    %v111 = vld [vmem:[%s0 + $0x18] sm:$0xff]
    %v112 = vld [vmem:[%s0 + $0x20] sm:$0xff]
    %v113 = vld [vmem:[%s0 + $0x28] sm:$0xff]
    %v114 = vld [vmem:[%s0 + $0x30] sm:$0xff]
    %v115 = vld [vmem:[%s0 + $0x38] sm:$0xff]
    %vm116 = vcmask 261120
    %v117 = vsel %vm116, %v108, 0.0
    %v118 = vsel %vm116, %v109, 0.0
    %v119 = vadd.f32 %v117, %v118
    %v120 = vsel %vm116, %v110, 0.0
    %v121 = vadd.f32 %v119, %v120
    %v122 = vsel %vm116, %v111, 0.0
    %v123 = vadd.f32 %v121, %v122
    %v124 = vsel %vm116, %v112, 0.0
    %v125 = vadd.f32 %v123, %v124
    %v126 = vsel %vm116, %v113, 0.0
    %v127 = vadd.f32 %v125, %v126
    %v128 = vsel %vm116, %v114, 0.0
    %v129 = vadd.f32 %v127, %v128
    %v130 = vsel %vm116, %v115, 0.0
    %v131 = vadd.f32 %v129, %v130
    %v132 = vrot.slane %v131, 4
    %v133 = vadd.f32 %v131, %v132
    %v134 = vrot.slane %v133, 2
    %v135 = vadd.f32 %v133, %v134
    %v136 = vrot.slane %v135, 1
    %v137 = vadd.f32 %v135, %v136
    %v138 = vmul.f32 %v137, 0.0625
    %v139 = vmul.f32 %v108, %v108
    %v140 = vmul.f32 %v109, %v109
    %v141 = vmul.f32 %v110, %v110
    %v142 = vmul.f32 %v111, %v111
    %v143 = vmul.f32 %v112, %v112
    %v144 = vmul.f32 %v113, %v113
    %v145 = vmul.f32 %v114, %v114
    %v146 = vmul.f32 %v115, %v115
    %v147 = vsel %vm116, %v139, 0.0
    %v148 = vsel %vm116, %v140, 0.0
    %v149 = vadd.f32 %v147, %v148
    %v150 = vsel %vm116, %v141, 0.0
    %v151 = vadd.f32 %v149, %v150
    %v152 = vsel %vm116, %v142, 0.0
    %v153 = vadd.f32 %v151, %v152
    %v154 = vsel %vm116, %v143, 0.0
    %v155 = vadd.f32 %v153, %v154
    %v156 = vsel %vm116, %v144, 0.0
    %v157 = vadd.f32 %v155, %v156
    %v158 = vsel %vm116, %v145, 0.0
    %v159 = vadd.f32 %v157, %v158
    %v160 = vsel %vm116, %v146, 0.0
    %v161 = vadd.f32 %v159, %v160
    %v162 = vrot.slane %v161, 4
    %v163 = vadd.f32 %v161, %v162
    %v164 = vrot.slane %v163, 2
    %v165 = vadd.f32 %v163, %v164
    %v166 = vrot.slane %v165, 1
    %v167 = vadd.f32 %v165, %v166
    %v168 = vmul.f32 %v167, 0.0625
    %v169 = vmul.f32 %v138, %v138
    %v170 = vsub.f32 %v168, %v169
    %v171 = vsub.f32 %v108, %v138
    %v172 = vsub.f32 %v109, %v138
    %v173 = vsub.f32 %v110, %v138
    %v174 = vsub.f32 %v111, %v138
    %v175 = vsub.f32 %v112, %v138
    %v176 = vsub.f32 %v113, %v138
    %v177 = vsub.f32 %v114, %v138
    %v178 = vsub.f32 %v115, %v138
    %v179 = vadd.f32 %v170, 1e-05
    %v180 = vrsqrt.pop %v179
    %v181 = vmul.f32 %v171, %v180
    %v182 = vmul.f32 %v172, %v180
    %v183 = vmul.f32 %v173, %v180
    %v184 = vmul.f32 %v174, %v180
    %v185 = vmul.f32 %v175, %v180
    %v186 = vmul.f32 %v176, %v180
    %v187 = vmul.f32 %v177, %v180
    %v188 = vmul.f32 %v178, %v180
    %v189 = vld [vmem:[#allocation4] sm:$0x1]
    %v191 = vlaneseq
    %v192 = vshrl.u32 %v191, 7
    %v193 = vsub.s32 0, %v192
    %v194 = vrot.slane %v189, %v193
    %v196 = vmul.f32 %v181, %v194
    %v197 = vmul.f32 %v182, %v194
    %v198 = vmul.f32 %v183, %v194
    %v199 = vmul.f32 %v184, %v194
    %v200 = vmul.f32 %v185, %v194
    %v201 = vmul.f32 %v186, %v194
    %v202 = vmul.f32 %v187, %v194
    %v203 = vmul.f32 %v188, %v194
    %v204 = vld [vmem:[#allocation7] sm:$0x1]
    %v206 = vlaneseq
    %v207 = vshrl.u32 %v206, 7
    %v208 = vsub.s32 0, %v207
    %v209 = vrot.slane %v204, %v208
    %v211 = vadd.f32 %v196, %v209
    %v212 = vadd.f32 %v197, %v209
    %v213 = vadd.f32 %v198, %v209
    %v214 = vadd.f32 %v199, %v209
    %v215 = vadd.f32 %v200, %v209
    %v216 = vadd.f32 %v201, %v209
    %v217 = vadd.f32 %v202, %v209
    %v218 = vadd.f32 %v203, %v209
    %v219 = vld [vmem:[%s3] sm:$0xff]
    %v220 = vld [vmem:[%s3 + $0x8] sm:$0xff]
    %v221 = vld [vmem:[%s3 + $0x10] sm:$0xff]
    %v222 = vld [vmem:[%s3 + $0x18] sm:$0xff]
    %v223 = vld [vmem:[#allocation9] sm:$0x1]
    %v225 = vlaneseq
    %v226 = vshrl.u32 %v225, 7
    %v227 = vsub.s32 0, %v226
    %v228 = vrot.slane %v223, %v227
    %v231 = vsel %vm116, %v211, 0
    %v234 = vsel %vm116, %v212, 0
    %v237 = vsel %vm116, %v213, 0
    %v240 = vsel %vm116, %v214, 0
    %v243 = vsel %vm116, %v215, 0
    %v246 = vsel %vm116, %v216, 0
    %v249 = vsel %vm116, %v217, 0
    %v252 = vsel %vm116, %v218, 0
    %254 = vmatprep.subr.mxu0 0.0
    %255 = vmatpush1.msra.mxu0 %v219
    %256 = vmatprep.subr.mxu0 0.0
    %257 = vmatpush1.msra.mxu0 %v220
    %258 = vmatprep.subr.mxu0 0.0
    %259 = vmatpush1.msra.mxu0 %v221
    %260 = vmatprep.subr.mxu0 0.0
    %261 = vmatpush1.msra.mxu0 %v222
    %262 = vmatprep.subr.mxu0 0.0
    %263 = vmatpush1.msra.mxu0 0.0
    %264 = vmatprep.subr.mxu0 0.0
    %265 = vmatpush1.msra.mxu0 0.0
    %266 = vmatprep.subr.mxu0 0.0
    %267 = vmatpush1.msra.mxu0 0.0
    %268 = vmatprep.subr.mxu0 0.0
    %269 = vmatpush1.msra.mxu0 0.0
    %270 = vmatprep.subr.mxu0 0.0
    %271 = vmatpush1.msra.mxu0 0.0
    %272 = vmatprep.subr.mxu0 0.0
    %273 = vmatpush1.msra.mxu0 0.0
    %274 = vmatprep.subr.mxu0 0.0
    %275 = vmatpush1.msra.mxu0 0.0
    %276 = vmatprep.subr.mxu0 0.0
    %277 = vmatpush1.msra.mxu0 0.0
    %278 = vmatprep.subr.mxu0 0.0
    %279 = vmatpush1.msra.mxu0 0.0
    %280 = vmatprep.subr.mxu0 0.0
    %281 = vmatpush1.msra.mxu0 0.0
    %282 = vmatprep.subr.mxu0 0.0
    %283 = vmatpush1.msra.mxu0 0.0
    %284 = vmatprep.subr.mxu0 0.0
    %285 = vmatpush1.msra.mxu0 0.0
    %286 = vmatprep.subr.mxu0 0.0
    %287 = vmatpush1.msra.mxu0 0.0
    %288 = vmatprep.subr.mxu0 0.0
    %289 = vmatpush1.msra.mxu0 0.0
    %290 = vmatprep.subr.mxu0 0.0
    %291 = vmatpush1.msra.mxu0 0.0
    %292 = vmatprep.subr.mxu0 0.0
    %293 = vmatpush1.msra.mxu0 0.0
    %294 = vmatprep.subr.mxu0 0.0
    %295 = vmatpush1.msra.mxu0 0.0
    %296 = vmatprep.subr.mxu0 0.0
    %297 = vmatpush1.msra.mxu0 0.0
    %298 = vmatprep.subr.mxu0 0.0
    %299 = vmatpush1.msra.mxu0 0.0
    %300 = vmatprep.subr.mxu0 0.0
    %301 = vmatpush1.msra.mxu0 0.0
    %302 = vmatprep.subr.mxu0 0.0
    %303 = vmatpush1.msra.mxu0 0.0
    %304 = vmatprep.subr.mxu0 0.0
    %305 = vmatpush1.msra.mxu0 0.0
    %306 = vmatprep.subr.mxu0 0.0
    %307 = vmatpush1.msra.mxu0 0.0
    %308 = vmatprep.subr.mxu0 0.0
    %309 = vmatpush1.msra.mxu0 0.0
    %310 = vmatprep.subr.mxu0 0.0
    %311 = vmatpush1.msra.mxu0 0.0
    %312 = vmatprep.subr.mxu0 0.0
    %313 = vmatpush1.msra.mxu0 0.0
    %314 = vmatprep.subr.mxu0 0.0
    %315 = vmatpush1.msra.mxu0 0.0
    %316 = vmatprep.subr.mxu0 0.0
    %317 = vmatpush1.msra.mxu0 0.0
    %318 = vmatprep.mubr.f32.mxu0 0.0
    %319 = vmatmul.mubr.f32.gmra.mrb[0].mxu0 %v231
    %v320 = vpop.f32.mrb[0].mxu0
    %v321 = vadd.f32 %v228, %v320
    %v322 = vpop.f32.mrb[0].mxu0
    %323 = vmatprep.mubr.f32.mxu0 0.0
    %324 = vmatmul.mubr.f32.gmra.mrb[0].mxu0 %v234
    %v325 = vpop.f32.mrb[0].mxu0
    %v326 = vadd.f32 %v228, %v325
    %v327 = vpop.f32.mrb[0].mxu0
    %328 = vmatprep.mubr.f32.mxu0 0.0
    %329 = vmatmul.mubr.f32.gmra.mrb[0].mxu0 %v237
    %v330 = vpop.f32.mrb[0].mxu0
    %v331 = vadd.f32 %v228, %v330
    %v332 = vpop.f32.mrb[0].mxu0
    %333 = vmatprep.mubr.f32.mxu0 0.0
    %334 = vmatmul.mubr.f32.gmra.mrb[0].mxu0 %v240
    %v335 = vpop.f32.mrb[0].mxu0
    %v336 = vadd.f32 %v228, %v335
    %v337 = vpop.f32.mrb[0].mxu0
    %338 = vmatprep.mubr.f32.mxu0 0.0
    %339 = vmatmul.mubr.f32.gmra.mrb[0].mxu0 %v243
    %v340 = vpop.f32.mrb[0].mxu0
    %v341 = vadd.f32 %v228, %v340
    %v342 = vpop.f32.mrb[0].mxu0
    %343 = vmatprep.mubr.f32.mxu0 0.0
    %344 = vmatmul.mubr.f32.gmra.mrb[0].mxu0 %v246
    %v345 = vpop.f32.mrb[0].mxu0
    %v346 = vadd.f32 %v228, %v345
    %v347 = vpop.f32.mrb[0].mxu0
    %348 = vmatprep.mubr.f32.mxu0 0.0
    %349 = vmatmul.mubr.f32.gmra.mrb[0].mxu0 %v249
    %v350 = vpop.f32.mrb[0].mxu0
    %v351 = vadd.f32 %v228, %v350
    %v352 = vpop.f32.mrb[0].mxu0
    %353 = vmatprep.mubr.f32.mxu0 0.0
    %354 = vmatmul.mubr.f32.gmra.mrb[0].mxu0 %v252
    %v355 = vpop.f32.mrb[0].mxu0
    %v356 = vadd.f32 %v228, %v355
    %v357 = vpop.f32.mrb[0].mxu0
    %358 = vdwg.mxu0
    %v359 = vmax.f32 %v321, 0.0
    %v360 = vmax.f32 %v326, 0.0
    %v361 = vmax.f32 %v331, 0.0
    %v362 = vmax.f32 %v336, 0.0
    %v363 = vmax.f32 %v341, 0.0
    %v364 = vmax.f32 %v346, 0.0
    %v365 = vmax.f32 %v351, 0.0
    %v366 = vmax.f32 %v356, 0.0
    %v367 = vld [vmem:[%s5] sm:$0xff]
    %v368 = vld [vmem:[%s5 + $0x8] sm:$0xff]
    %v369 = vld [vmem:[%s5 + $0x10] sm:$0xff]
    %v370 = vld [vmem:[%s5 + $0x18] sm:$0xff]
    %v371 = vld [vmem:[%s5 + $0x20] sm:$0xff]
    %v372 = vld [vmem:[%s5 + $0x28] sm:$0xff]
    %v373 = vld [vmem:[%s5 + $0x30] sm:$0xff]
    %v374 = vld [vmem:[%s5 + $0x38] sm:$0xff]
    %v375 = vld [vmem:[%s7] sm:$0x1]
    %v377 = vlaneseq
    %v378 = vshrl.u32 %v377, 7
    %v379 = vsub.s32 0, %v378
    %v380 = vrot.slane %v375, %v379
    %vm382 = vcmask 523264
    %v384 = vsel %vm382, %v359, 0
    %v387 = vsel %vm382, %v360, 0
    %v390 = vsel %vm382, %v361, 0
    %v393 = vsel %vm382, %v362, 0
    %v396 = vsel %vm382, %v363, 0
    %v399 = vsel %vm382, %v364, 0
    %v402 = vsel %vm382, %v365, 0
    %v405 = vsel %vm382, %v366, 0
    %407 = vmatprep.subr.mxu0 0.0
    %408 = vmatpush1.msra.mxu0 %v367
    %409 = vmatprep.subr.mxu0 0.0
    %410 = vmatpush1.msra.mxu0 %v368
    %411 = vmatprep.subr.mxu0 0.0
    %412 = vmatpush1.msra.mxu0 %v369
    %413 = vmatprep.subr.mxu0 0.0
    %414 = vmatpush1.msra.mxu0 %v370
    %415 = vmatprep.subr.mxu0 0.0
    %416 = vmatpush1.msra.mxu0 %v371
    %417 = vmatprep.subr.mxu0 0.0
    %418 = vmatpush1.msra.mxu0 %v372
    %419 = vmatprep.subr.mxu0 0.0
    %420 = vmatpush1.msra.mxu0 %v373
    %421 = vmatprep.subr.mxu0 0.0
    %422 = vmatpush1.msra.mxu0 %v374
    %423 = vmatprep.subr.mxu0 0.0
    %424 = vmatpush1.msra.mxu0 0.0
    %425 = vmatprep.subr.mxu0 0.0
    %426 = vmatpush1.msra.mxu0 0.0
    %427 = vmatprep.subr.mxu0 0.0
    %428 = vmatpush1.msra.mxu0 0.0
    %429 = vmatprep.subr.mxu0 0.0
    %430 = vmatpush1.msra.mxu0 0.0
    %431 = vmatprep.subr.mxu0 0.0
    %432 = vmatpush1.msra.mxu0 0.0
    %433 = vmatprep.subr.mxu0 0.0
    %434 = vmatpush1.msra.mxu0 0.0
    %435 = vmatprep.subr.mxu0 0.0
    %436 = vmatpush1.msra.mxu0 0.0
    %437 = vmatprep.subr.mxu0 0.0
    %438 = vmatpush1.msra.mxu0 0.0
    %439 = vmatprep.subr.mxu0 0.0
    %440 = vmatpush1.msra.mxu0 0.0
    %441 = vmatprep.subr.mxu0 0.0
    %442 = vmatpush1.msra.mxu0 0.0
    %443 = vmatprep.subr.mxu0 0.0
    %444 = vmatpush1.msra.mxu0 0.0
    %445 = vmatprep.subr.mxu0 0.0
    %446 = vmatpush1.msra.mxu0 0.0
    %447 = vmatprep.subr.mxu0 0.0
    %448 = vmatpush1.msra.mxu0 0.0
    %449 = vmatprep.subr.mxu0 0.0
    %450 = vmatpush1.msra.mxu0 0.0
    %451 = vmatprep.subr.mxu0 0.0
    %452 = vmatpush1.msra.mxu0 0.0
    %453 = vmatprep.subr.mxu0 0.0
    %454 = vmatpush1.msra.mxu0 0.0
    %455 = vmatprep.subr.mxu0 0.0
    %456 = vmatpush1.msra.mxu0 0.0
    %457 = vmatprep.subr.mxu0 0.0
    %458 = vmatpush1.msra.mxu0 0.0
    %459 = vmatprep.subr.mxu0 0.0
    %460 = vmatpush1.msra.mxu0 0.0
    %461 = vmatprep.subr.mxu0 0.0
    %462 = vmatpush1.msra.mxu0 0.0
    %463 = vmatprep.subr.mxu0 0.0
    %464 = vmatpush1.msra.mxu0 0.0
    %465 = vmatprep.subr.mxu0 0.0
    %466 = vmatpush1.msra.mxu0 0.0
    %467 = vmatprep.subr.mxu0 0.0
    %468 = vmatpush1.msra.mxu0 0.0
    %469 = vmatprep.subr.mxu0 0.0
    %470 = vmatpush1.msra.mxu0 0.0
    %471 = vmatprep.mubr.f32.mxu0 0.0
    %472 = vmatmul.mubr.f32.gmra.mrb[0].mxu0 %v384
    %v473 = vpop.f32.mrb[0].mxu0
    %v474 = vadd.f32 %v380, %v473
    %v475 = vpop.f32.mrb[0].mxu0
    %476 = vmatprep.mubr.f32.mxu0 0.0
    %477 = vmatmul.mubr.f32.gmra.mrb[0].mxu0 %v387
    %v478 = vpop.f32.mrb[0].mxu0
    %v479 = vadd.f32 %v380, %v478
    %v480 = vpop.f32.mrb[0].mxu0
    %481 = vmatprep.mubr.f32.mxu0 0.0
    %482 = vmatmul.mubr.f32.gmra.mrb[0].mxu0 %v390
    %v483 = vpop.f32.mrb[0].mxu0
    %v484 = vadd.f32 %v380, %v483
    %v485 = vpop.f32.mrb[0].mxu0
    %486 = vmatprep.mubr.f32.mxu0 0.0
    %487 = vmatmul.mubr.f32.gmra.mrb[0].mxu0 %v393
    %v488 = vpop.f32.mrb[0].mxu0
    %v489 = vadd.f32 %v380, %v488
    %v490 = vpop.f32.mrb[0].mxu0
    %491 = vmatprep.mubr.f32.mxu0 0.0
    %492 = vmatmul.mubr.f32.gmra.mrb[0].mxu0 %v396
    %v493 = vpop.f32.mrb[0].mxu0
    %v494 = vadd.f32 %v380, %v493
    %v495 = vpop.f32.mrb[0].mxu0
    %496 = vmatprep.mubr.f32.mxu0 0.0
    %497 = vmatmul.mubr.f32.gmra.mrb[0].mxu0 %v399
    %v498 = vpop.f32.mrb[0].mxu0
    %v499 = vadd.f32 %v380, %v498
    %v500 = vpop.f32.mrb[0].mxu0
    %501 = vmatprep.mubr.f32.mxu0 0.0
    %502 = vmatmul.mubr.f32.gmra.mrb[0].mxu0 %v402
    %v503 = vpop.f32.mrb[0].mxu0
    %v504 = vadd.f32 %v380, %v503
    %v505 = vpop.f32.mrb[0].mxu0
    %506 = vmatprep.mubr.f32.mxu0 0.0
    %507 = vmatmul.mubr.f32.gmra.mrb[0].mxu0 %v405
    %v508 = vpop.f32.mrb[0].mxu0
    %v509 = vadd.f32 %v380, %v508
    %v510 = vpop.f32.mrb[0].mxu0
    %511 = vdwg.mxu0
    %512 = vst [vmem:[#allocation2] sm:$0xff] %v474
    %513 = vst [vmem:[#allocation2 + $0x8] sm:$0xff] %v479
    %514 = vst [vmem:[#allocation2 + $0x10] sm:$0xff] %v484
    %515 = vst [vmem:[#allocation2 + $0x18] sm:$0xff] %v489
    %516 = vst [vmem:[#allocation2 + $0x20] sm:$0xff] %v494
    %517 = vst [vmem:[#allocation2 + $0x28] sm:$0xff] %v499
    %518 = vst [vmem:[#allocation2 + $0x30] sm:$0xff] %v504
    %519 = vst [vmem:[#allocation2 + $0x38] sm:$0xff] %v509
    %v520 = vld [vmem:[#allocation10] sm:$0xff]
    %v521 = vld [vmem:[#allocation10 + $0x8] sm:$0xff]
    %v522 = vld [vmem:[#allocation10 + $0x10] sm:$0xff]
    %v523 = vld [vmem:[#allocation10 + $0x18] sm:$0xff]
    %v524 = vld [vmem:[%s10] sm:$0xff]
    %v525 = vld [vmem:[%s11] sm:$0xff]
    %v526 = vld [vmem:[#allocation2] sm:$0xff]
    %v528 = vsel %vm116, %v524, 0
    %530 = vmatprep.subr.mxu0 0.0
    %531 = vmatpush1.msra.mxu0 %v520
    %532 = vmatprep.subr.mxu0 0.0
    %533 = vmatpush1.msra.mxu0 %v521
    %534 = vmatprep.subr.mxu0 0.0
    %535 = vmatpush1.msra.mxu0 %v522
    %536 = vmatprep.subr.mxu0 0.0
    %537 = vmatpush1.msra.mxu0 %v523
    %538 = vmatprep.subr.mxu0 0.0
    %539 = vmatpush1.msra.mxu0 0.0
    %540 = vmatprep.subr.mxu0 0.0
    %541 = vmatpush1.msra.mxu0 0.0
    %542 = vmatprep.subr.mxu0 0.0
    %543 = vmatpush1.msra.mxu0 0.0
    %544 = vmatprep.subr.mxu0 0.0
    %545 = vmatpush1.msra.mxu0 0.0
    %546 = vmatprep.subr.mxu0 0.0
    %547 = vmatpush1.msra.mxu0 0.0
    %548 = vmatprep.subr.mxu0 0.0
    %549 = vmatpush1.msra.mxu0 0.0
    %550 = vmatprep.subr.mxu0 0.0
    %551 = vmatpush1.msra.mxu0 0.0
    %552 = vmatprep.subr.mxu0 0.0
    %553 = vmatpush1.msra.mxu0 0.0
    %554 = vmatprep.subr.mxu0 0.0
    %555 = vmatpush1.msra.mxu0 0.0
    %556 = vmatprep.subr.mxu0 0.0
    %557 = vmatpush1.msra.mxu0 0.0
    %558 = vmatprep.subr.mxu0 0.0
    %559 = vmatpush1.msra.mxu0 0.0
    %560 = vmatprep.subr.mxu0 0.0
    %561 = vmatpush1.msra.mxu0 0.0
    %562 = vmatprep.subr.mxu0 0.0
    %563 = vmatpush1.msra.mxu0 0.0
    %564 = vmatprep.subr.mxu0 0.0
    %565 = vmatpush1.msra.mxu0 0.0
    %566 = vmatprep.subr.mxu0 0.0
    %567 = vmatpush1.msra.mxu0 0.0
    %568 = vmatprep.subr.mxu0 0.0
    %569 = vmatpush1.msra.mxu0 0.0
    %570 = vmatprep.subr.mxu0 0.0
    %571 = vmatpush1.msra.mxu0 0.0
    %572 = vmatprep.subr.mxu0 0.0
    %573 = vmatpush1.msra.mxu0 0.0
    %574 = vmatprep.subr.mxu0 0.0
    %575 = vmatpush1.msra.mxu0 0.0
    %576 = vmatprep.subr.mxu0 0.0
    %577 = vmatpush1.msra.mxu0 0.0
    %578 = vmatprep.subr.mxu0 0.0
    %579 = vmatpush1.msra.mxu0 0.0
    %580 = vmatprep.subr.mxu0 0.0
    %581 = vmatpush1.msra.mxu0 0.0
    %582 = vmatprep.subr.mxu0 0.0
    %583 = vmatpush1.msra.mxu0 0.0
    %584 = vmatprep.subr.mxu0 0.0
    %585 = vmatpush1.msra.mxu0 0.0
    %586 = vmatprep.subr.mxu0 0.0
    %587 = vmatpush1.msra.mxu0 0.0
    %588 = vmatprep.subr.mxu0 0.0
    %589 = vmatpush1.msra.mxu0 0.0
    %590 = vmatprep.subr.mxu0 0.0
    %591 = vmatpush1.msra.mxu0 0.0
    %592 = vmatprep.subr.mxu0 0.0
    %593 = vmatpush1.msra.mxu0 0.0
    %594 = vmatprep.mubr.f32.mxu0 0.0
    %595 = vmatmul.mubr.f32.gmra.mrb[0].mxu0 %v528
    %v596 = vpop.f32.mrb[0].mxu0
    %v597 = vadd.f32 0.0, %v596
    %v598 = vpop.f32.mrb[0].mxu0
    %599 = vdwg.mxu0
    %v600 = vadd.f32 %v526, %v597
    %v601 = vxor.u32 %v600, 2147483648
    %v602 = vmul.f32 %v601, 1.442695
    %v603 = vpow.pop %v602
    %v604 = vadd.f32 %v603, 1.0
    %v605 = vrcp.pop %v604
    %v606 = vmul.f32 1.0, %v605
    %v607 = vtanh.pop %v600
    %609 = vrot.lane.b32.xlu0 %v525, 32
    %v610 = vpop.permute.xlu0 %609
    %v612 = vmul.f32 %v606, %v610
    %614 = vrot.lane.b32.xlu0 %v607, 32
    %v615 = vpop.permute.xlu0 %614
    %v617 = vmul.f32 %v606, %v615
    %619 = vrot.lane.b32.xlu0 %v617, 32
    %v620 = vpop.permute.xlu0 %619
    %v622 = vadd.f32 %v612, %v620
    %v623 = vtanh.pop %v622
    %625 = vrot.lane.b32.xlu0 %v623, 32
    %v626 = vpop.permute.xlu0 %625
    %v628 = vmul.f32 %v606, %v626
    %630 = vrot.lane.b32.xlu0 %v628, 64
    %v631 = vpop.permute.xlu0 %630
    %633 = vst.msk [vmem:[#allocation3] sm:$0xff] %vm116, %v631
    %s634 = scalar_lea.vmem [#allocation2], 8
    %v635 = vld [vmem:[%s634] sm:$0xff]
    %v636 = vsel %vm116, %v631, 0
    %638 = vmatprep.subr.mxu0 0.0
    %639 = vmatpush1.msra.mxu0 %v520
    %640 = vmatprep.subr.mxu0 0.0
    %641 = vmatpush1.msra.mxu0 %v521
    %642 = vmatprep.subr.mxu0 0.0
    %643 = vmatpush1.msra.mxu0 %v522
    %644 = vmatprep.subr.mxu0 0.0
    %645 = vmatpush1.msra.mxu0 %v523
    %646 = vmatprep.subr.mxu0 0.0
    %647 = vmatpush1.msra.mxu0 0.0
    %648 = vmatprep.subr.mxu0 0.0
    %649 = vmatpush1.msra.mxu0 0.0
    %650 = vmatprep.subr.mxu0 0.0
    %651 = vmatpush1.msra.mxu0 0.0
    %652 = vmatprep.subr.mxu0 0.0
    %653 = vmatpush1.msra.mxu0 0.0
    %654 = vmatprep.subr.mxu0 0.0
    %655 = vmatpush1.msra.mxu0 0.0
    %656 = vmatprep.subr.mxu0 0.0
    %657 = vmatpush1.msra.mxu0 0.0
    %658 = vmatprep.subr.mxu0 0.0
    %659 = vmatpush1.msra.mxu0 0.0
    %660 = vmatprep.subr.mxu0 0.0
    %661 = vmatpush1.msra.mxu0 0.0
    %662 = vmatprep.subr.mxu0 0.0
    %663 = vmatpush1.msra.mxu0 0.0
    %664 = vmatprep.subr.mxu0 0.0
    %665 = vmatpush1.msra.mxu0 0.0
    %666 = vmatprep.subr.mxu0 0.0
    %667 = vmatpush1.msra.mxu0 0.0
    %668 = vmatprep.subr.mxu0 0.0
    %669 = vmatpush1.msra.mxu0 0.0
    %670 = vmatprep.subr.mxu0 0.0
    %671 = vmatpush1.msra.mxu0 0.0
    %672 = vmatprep.subr.mxu0 0.0
    %673 = vmatpush1.msra.mxu0 0.0
    %674 = vmatprep.subr.mxu0 0.0
    %675 = vmatpush1.msra.mxu0 0.0
    %676 = vmatprep.subr.mxu0 0.0
    %677 = vmatpush1.msra.mxu0 0.0
    %678 = vmatprep.subr.mxu0 0.0
    %679 = vmatpush1.msra.mxu0 0.0
    %680 = vmatprep.subr.mxu0 0.0
    %681 = vmatpush1.msra.mxu0 0.0
    %682 = vmatprep.subr.mxu0 0.0
    %683 = vmatpush1.msra.mxu0 0.0
    %684 = vmatprep.subr.mxu0 0.0
    %685 = vmatpush1.msra.mxu0 0.0
    %686 = vmatprep.subr.mxu0 0.0
    %687 = vmatpush1.msra.mxu0 0.0
    %688 = vmatprep.subr.mxu0 0.0
    %689 = vmatpush1.msra.mxu0 0.0
    %690 = vmatprep.subr.mxu0 0.0
    %691 = vmatpush1.msra.mxu0 0.0
    %692 = vmatprep.subr.mxu0 0.0
    %693 = vmatpush1.msra.mxu0 0.0
    %694 = vmatprep.subr.mxu0 0.0
    %695 = vmatpush1.msra.mxu0 0.0
    %696 = vmatprep.subr.mxu0 0.0
    %697 = vmatpush1.msra.mxu0 0.0
    %698 = vmatprep.subr.mxu0 0.0
    %699 = vmatpush1.msra.mxu0 0.0
    %700 = vmatprep.subr.mxu0 0.0
    %701 = vmatpush1.msra.mxu0 0.0
    %702 = vmatprep.mubr.f32.mxu0 0.0
    %703 = vmatmul.mubr.f32.gmra.mrb[0].mxu0 %v636
    %v704 = vpop.f32.mrb[0].mxu0
    %v705 = vadd.f32 0.0, %v704
    %v706 = vpop.f32.mrb[0].mxu0
    %707 = vdwg.mxu0
    %v708 = vadd.f32 %v635, %v705
    %v709 = vxor.u32 %v708, 2147483648
    %v710 = vmul.f32 %v709, 1.442695
    %v711 = vpow.pop %v710
    %v712 = vadd.f32 %v711, 1.0
    %v713 = vrcp.pop %v712
    %v714 = vmul.f32 1.0, %v713
    %v715 = vtanh.pop %v708
    %v716 = vmul.f32 %v714, %v622
    %718 = vrot.lane.b32.xlu0 %v715, 32
    %v719 = vpop.permute.xlu0 %718
    %v721 = vmul.f32 %v714, %v719
    %723 = vrot.lane.b32.xlu0 %v721, 32
    %v724 = vpop.permute.xlu0 %723
    %v726 = vadd.f32 %v716, %v724
    %v727 = vtanh.pop %v726
    %729 = vrot.lane.b32.xlu0 %v727, 32
    %v730 = vpop.permute.xlu0 %729
    %v732 = vmul.f32 %v714, %v730
    %734 = vrot.lane.b32.xlu0 %v732, 64
    %v735 = vpop.permute.xlu0 %734
    %s737 = scalar_lea.vmem [#allocation3], 8
    %738 = vst.msk [vmem:[%s737] sm:$0xff] %vm116, %v735
    %s739 = scalar_lea.vmem [#allocation2], 16
    %v740 = vld [vmem:[%s739] sm:$0xff]
    %v741 = vsel %vm116, %v735, 0
    %743 = vmatprep.subr.mxu0 0.0
    %744 = vmatpush1.msra.mxu0 %v520
    %745 = vmatprep.subr.mxu0 0.0
    %746 = vmatpush1.msra.mxu0 %v521
    %747 = vmatprep.subr.mxu0 0.0
    %748 = vmatpush1.msra.mxu0 %v522
    %749 = vmatprep.subr.mxu0 0.0
    %750 = vmatpush1.msra.mxu0 %v523
    %751 = vmatprep.subr.mxu0 0.0
    %752 = vmatpush1.msra.mxu0 0.0
    %753 = vmatprep.subr.mxu0 0.0
    %754 = vmatpush1.msra.mxu0 0.0
    %755 = vmatprep.subr.mxu0 0.0
    %756 = vmatpush1.msra.mxu0 0.0
    %757 = vmatprep.subr.mxu0 0.0
    %758 = vmatpush1.msra.mxu0 0.0
    %759 = vmatprep.subr.mxu0 0.0
    %760 = vmatpush1.msra.mxu0 0.0
    %761 = vmatprep.subr.mxu0 0.0
    %762 = vmatpush1.msra.mxu0 0.0
    %763 = vmatprep.subr.mxu0 0.0
    %764 = vmatpush1.msra.mxu0 0.0
    %765 = vmatprep.subr.mxu0 0.0
    %766 = vmatpush1.msra.mxu0 0.0
    %767 = vmatprep.subr.mxu0 0.0
    %768 = vmatpush1.msra.mxu0 0.0
    %769 = vmatprep.subr.mxu0 0.0
    %770 = vmatpush1.msra.mxu0 0.0
    %771 = vmatprep.subr.mxu0 0.0
    %772 = vmatpush1.msra.mxu0 0.0
    %773 = vmatprep.subr.mxu0 0.0
    %774 = vmatpush1.msra.mxu0 0.0
    %775 = vmatprep.subr.mxu0 0.0
    %776 = vmatpush1.msra.mxu0 0.0
    %777 = vmatprep.subr.mxu0 0.0
    %778 = vmatpush1.msra.mxu0 0.0
    %779 = vmatprep.subr.mxu0 0.0
    %780 = vmatpush1.msra.mxu0 0.0
    %781 = vmatprep.subr.mxu0 0.0
    %782 = vmatpush1.msra.mxu0 0.0
    %783 = vmatprep.subr.mxu0 0.0
    %784 = vmatpush1.msra.mxu0 0.0
    %785 = vmatprep.subr.mxu0 0.0
    %786 = vmatpush1.msra.mxu0 0.0
    %787 = vmatprep.subr.mxu0 0.0
    %788 = vmatpush1.msra.mxu0 0.0
    %789 = vmatprep.subr.mxu0 0.0
    %790 = vmatpush1.msra.mxu0 0.0
    %791 = vmatprep.subr.mxu0 0.0
    %792 = vmatpush1.msra.mxu0 0.0
    %793 = vmatprep.subr.mxu0 0.0
    %794 = vmatpush1.msra.mxu0 0.0
    %795 = vmatprep.subr.mxu0 0.0
    %796 = vmatpush1.msra.mxu0 0.0
    %797 = vmatprep.subr.mxu0 0.0
    %798 = vmatpush1.msra.mxu0 0.0
    %799 = vmatprep.subr.mxu0 0.0
    %800 = vmatpush1.msra.mxu0 0.0
    %801 = vmatprep.subr.mxu0 0.0
    %802 = vmatpush1.msra.mxu0 0.0
    %803 = vmatprep.subr.mxu0 0.0
    %804 = vmatpush1.msra.mxu0 0.0
    %805 = vmatprep.subr.mxu0 0.0
    %806 = vmatpush1.msra.mxu0 0.0
    %807 = vmatprep.mubr.f32.mxu0 0.0
    %808 = vmatmul.mubr.f32.gmra.mrb[0].mxu0 %v741
    %v809 = vpop.f32.mrb[0].mxu0
    %v810 = vadd.f32 0.0, %v809
    %v811 = vpop.f32.mrb[0].mxu0
    %812 = vdwg.mxu0
    %v813 = vadd.f32 %v740, %v810
    %v814 = vxor.u32 %v813, 2147483648
    %v815 = vmul.f32 %v814, 1.442695
    %v816 = vpow.pop %v815
    %v817 = vadd.f32 %v816, 1.0
    %v818 = vrcp.pop %v817
    %v819 = vmul.f32 1.0, %v818
    %v820 = vtanh.pop %v813
    %v821 = vmul.f32 %v819, %v726
    %823 = vrot.lane.b32.xlu0 %v820, 32
    %v824 = vpop.permute.xlu0 %823
    %v826 = vmul.f32 %v819, %v824
    %828 = vrot.lane.b32.xlu0 %v826, 32
    %v829 = vpop.permute.xlu0 %828
    %v831 = vadd.f32 %v821, %v829
    %v832 = vtanh.pop %v831
    %834 = vrot.lane.b32.xlu0 %v832, 32
    %v835 = vpop.permute.xlu0 %834
    %v837 = vmul.f32 %v819, %v835
    %839 = vrot.lane.b32.xlu0 %v837, 64
    %v840 = vpop.permute.xlu0 %839
    %s842 = scalar_lea.vmem [#allocation3], 16
    %843 = vst.msk [vmem:[%s842] sm:$0xff] %vm116, %v840
    %s844 = scalar_lea.vmem [#allocation2], 24
    %v845 = vld [vmem:[%s844] sm:$0xff]
    %v846 = vsel %vm116, %v840, 0
    %848 = vmatprep.subr.mxu0 0.0
    %849 = vmatpush1.msra.mxu0 %v520
    %850 = vmatprep.subr.mxu0 0.0
    %851 = vmatpush1.msra.mxu0 %v521
    %852 = vmatprep.subr.mxu0 0.0
    %853 = vmatpush1.msra.mxu0 %v522
    %854 = vmatprep.subr.mxu0 0.0
    %855 = vmatpush1.msra.mxu0 %v523
    %856 = vmatprep.subr.mxu0 0.0
    %857 = vmatpush1.msra.mxu0 0.0
    %858 = vmatprep.subr.mxu0 0.0
    %859 = vmatpush1.msra.mxu0 0.0
    %860 = vmatprep.subr.mxu0 0.0
    %861 = vmatpush1.msra.mxu0 0.0
    %862 = vmatprep.subr.mxu0 0.0
    %863 = vmatpush1.msra.mxu0 0.0
    %864 = vmatprep.subr.mxu0 0.0
    %865 = vmatpush1.msra.mxu0 0.0
    %866 = vmatprep.subr.mxu0 0.0
    %867 = vmatpush1.msra.mxu0 0.0
    %868 = vmatprep.subr.mxu0 0.0
    %869 = vmatpush1.msra.mxu0 0.0
    %870 = vmatprep.subr.mxu0 0.0
    %871 = vmatpush1.msra.mxu0 0.0
    %872 = vmatprep.subr.mxu0 0.0
    %873 = vmatpush1.msra.mxu0 0.0
    %874 = vmatprep.subr.mxu0 0.0
    %875 = vmatpush1.msra.mxu0 0.0
    %876 = vmatprep.subr.mxu0 0.0
    %877 = vmatpush1.msra.mxu0 0.0
    %878 = vmatprep.subr.mxu0 0.0
    %879 = vmatpush1.msra.mxu0 0.0
    %880 = vmatprep.subr.mxu0 0.0
    %881 = vmatpush1.msra.mxu0 0.0
    %882 = vmatprep.subr.mxu0 0.0
    %883 = vmatpush1.msra.mxu0 0.0
    %884 = vmatprep.subr.mxu0 0.0
    %885 = vmatpush1.msra.mxu0 0.0
    %886 = vmatprep.subr.mxu0 0.0
    %887 = vmatpush1.msra.mxu0 0.0
    %888 = vmatprep.subr.mxu0 0.0
    %889 = vmatpush1.msra.mxu0 0.0
    %890 = vmatprep.subr.mxu0 0.0
    %891 = vmatpush1.msra.mxu0 0.0
    %892 = vmatprep.subr.mxu0 0.0
    %893 = vmatpush1.msra.mxu0 0.0
    %894 = vmatprep.subr.mxu0 0.0
    %895 = vmatpush1.msra.mxu0 0.0
    %896 = vmatprep.subr.mxu0 0.0
    %897 = vmatpush1.msra.mxu0 0.0
    %898 = vmatprep.subr.mxu0 0.0
    %899 = vmatpush1.msra.mxu0 0.0
    %900 = vmatprep.subr.mxu0 0.0
    %901 = vmatpush1.msra.mxu0 0.0
    %902 = vmatprep.subr.mxu0 0.0
    %903 = vmatpush1.msra.mxu0 0.0
    %904 = vmatprep.subr.mxu0 0.0
    %905 = vmatpush1.msra.mxu0 0.0
    %906 = vmatprep.subr.mxu0 0.0
    %907 = vmatpush1.msra.mxu0 0.0
    %908 = vmatprep.subr.mxu0 0.0
    %909 = vmatpush1.msra.mxu0 0.0
    %910 = vmatprep.subr.mxu0 0.0
    %911 = vmatpush1.msra.mxu0 0.0
    %912 = vmatprep.mubr.f32.mxu0 0.0
    %913 = vmatmul.mubr.f32.gmra.mrb[0].mxu0 %v846
    %v914 = vpop.f32.mrb[0].mxu0
    %v915 = vadd.f32 0.0, %v914
    %v916 = vpop.f32.mrb[0].mxu0
    %917 = vdwg.mxu0
    %v918 = vadd.f32 %v845, %v915
    %v919 = vxor.u32 %v918, 2147483648
    %v920 = vmul.f32 %v919, 1.442695
    %v921 = vpow.pop %v920
    %v922 = vadd.f32 %v921, 1.0
    %v923 = vrcp.pop %v922
    %v924 = vmul.f32 1.0, %v923
    %v925 = vtanh.pop %v918
    %v926 = vmul.f32 %v924, %v831
    %928 = vrot.lane.b32.xlu0 %v925, 32
    %v929 = vpop.permute.xlu0 %928
    %v931 = vmul.f32 %v924, %v929
    %933 = vrot.lane.b32.xlu0 %v931, 32
    %v934 = vpop.permute.xlu0 %933
    %v936 = vadd.f32 %v926, %v934
    %v937 = vtanh.pop %v936
    %939 = vrot.lane.b32.xlu0 %v937, 32
    %v940 = vpop.permute.xlu0 %939
    %v942 = vmul.f32 %v924, %v940
    %944 = vrot.lane.b32.xlu0 %v942, 64
    %v945 = vpop.permute.xlu0 %944
    %s947 = scalar_lea.vmem [#allocation3], 24
    %948 = vst.msk [vmem:[%s947] sm:$0xff] %vm116, %v945
    %s949 = scalar_lea.vmem [#allocation2], 32
    %v950 = vld [vmem:[%s949] sm:$0xff]
    %v951 = vsel %vm116, %v945, 0
    %953 = vmatprep.subr.mxu0 0.0
    %954 = vmatpush1.msra.mxu0 %v520
    %955 = vmatprep.subr.mxu0 0.0
    %956 = vmatpush1.msra.mxu0 %v521
    %957 = vmatprep.subr.mxu0 0.0
    %958 = vmatpush1.msra.mxu0 %v522
    %959 = vmatprep.subr.mxu0 0.0
    %960 = vmatpush1.msra.mxu0 %v523
    %961 = vmatprep.subr.mxu0 0.0
    %962 = vmatpush1.msra.mxu0 0.0
    %963 = vmatprep.subr.mxu0 0.0
    %964 = vmatpush1.msra.mxu0 0.0
    %965 = vmatprep.subr.mxu0 0.0
    %966 = vmatpush1.msra.mxu0 0.0
    %967 = vmatprep.subr.mxu0 0.0
    %968 = vmatpush1.msra.mxu0 0.0
    %969 = vmatprep.subr.mxu0 0.0
    %970 = vmatpush1.msra.mxu0 0.0
    %971 = vmatprep.subr.mxu0 0.0
    %972 = vmatpush1.msra.mxu0 0.0
    %973 = vmatprep.subr.mxu0 0.0
    %974 = vmatpush1.msra.mxu0 0.0
    %975 = vmatprep.subr.mxu0 0.0
    %976 = vmatpush1.msra.mxu0 0.0
    %977 = vmatprep.subr.mxu0 0.0
    %978 = vmatpush1.msra.mxu0 0.0
    %979 = vmatprep.subr.mxu0 0.0
    %980 = vmatpush1.msra.mxu0 0.0
    %981 = vmatprep.subr.mxu0 0.0
    %982 = vmatpush1.msra.mxu0 0.0
    %983 = vmatprep.subr.mxu0 0.0
    %984 = vmatpush1.msra.mxu0 0.0
    %985 = vmatprep.subr.mxu0 0.0
    %986 = vmatpush1.msra.mxu0 0.0
    %987 = vmatprep.subr.mxu0 0.0
    %988 = vmatpush1.msra.mxu0 0.0
    %989 = vmatprep.subr.mxu0 0.0
    %990 = vmatpush1.msra.mxu0 0.0
    %991 = vmatprep.subr.mxu0 0.0
    %992 = vmatpush1.msra.mxu0 0.0
    %993 = vmatprep.subr.mxu0 0.0
    %994 = vmatpush1.msra.mxu0 0.0
    %995 = vmatprep.subr.mxu0 0.0
    %996 = vmatpush1.msra.mxu0 0.0
    %997 = vmatprep.subr.mxu0 0.0
    %998 = vmatpush1.msra.mxu0 0.0
    %999 = vmatprep.subr.mxu0 0.0
    %1000 = vmatpush1.msra.mxu0 0.0
    %1001 = vmatprep.subr.mxu0 0.0
    %1002 = vmatpush1.msra.mxu0 0.0
    %1003 = vmatprep.subr.mxu0 0.0
    %1004 = vmatpush1.msra.mxu0 0.0
    %1005 = vmatprep.subr.mxu0 0.0
    %1006 = vmatpush1.msra.mxu0 0.0
    %1007 = vmatprep.subr.mxu0 0.0
    %1008 = vmatpush1.msra.mxu0 0.0
    %1009 = vmatprep.subr.mxu0 0.0
    %1010 = vmatpush1.msra.mxu0 0.0
    %1011 = vmatprep.subr.mxu0 0.0
    %1012 = vmatpush1.msra.mxu0 0.0
    %1013 = vmatprep.subr.mxu0 0.0
    %1014 = vmatpush1.msra.mxu0 0.0
    %1015 = vmatprep.subr.mxu0 0.0
    %1016 = vmatpush1.msra.mxu0 0.0
    %1017 = vmatprep.mubr.f32.mxu0 0.0
    %1018 = vmatmul.mubr.f32.gmra.mrb[0].mxu0 %v951
    %v1019 = vpop.f32.mrb[0].mxu0
    %v1020 = vadd.f32 0.0, %v1019
    %v1021 = vpop.f32.mrb[0].mxu0
    %1022 = vdwg.mxu0
    %v1023 = vadd.f32 %v950, %v1020
    %v1024 = vxor.u32 %v1023, 2147483648
    %v1025 = vmul.f32 %v1024, 1.442695
    %v1026 = vpow.pop %v1025
    %v1027 = vadd.f32 %v1026, 1.0
    %v1028 = vrcp.pop %v1027
    %v1029 = vmul.f32 1.0, %v1028
    %v1030 = vtanh.pop %v1023
    %v1031 = vmul.f32 %v1029, %v936
    %1033 = vrot.lane.b32.xlu0 %v1030, 32
    %v1034 = vpop.permute.xlu0 %1033
    %v1036 = vmul.f32 %v1029, %v1034
    %1038 = vrot.lane.b32.xlu0 %v1036, 32
    %v1039 = vpop.permute.xlu0 %1038
    %v1041 = vadd.f32 %v1031, %v1039
    %v1042 = vtanh.pop %v1041
    %1044 = vrot.lane.b32.xlu0 %v1042, 32
    %v1045 = vpop.permute.xlu0 %1044
    %v1047 = vmul.f32 %v1029, %v1045
    %1049 = vrot.lane.b32.xlu0 %v1047, 64
    %v1050 = vpop.permute.xlu0 %1049
    %s1052 = scalar_lea.vmem [#allocation3], 32
    %1053 = vst.msk [vmem:[%s1052] sm:$0xff] %vm116, %v1050
    %s1054 = scalar_lea.vmem [#allocation2], 40
    %v1055 = vld [vmem:[%s1054] sm:$0xff]
    %v1056 = vsel %vm116, %v1050, 0
    %1058 = vmatprep.subr.mxu0 0.0
    %1059 = vmatpush1.msra.mxu0 %v520
    %1060 = vmatprep.subr.mxu0 0.0
    %1061 = vmatpush1.msra.mxu0 %v521
    %1062 = vmatprep.subr.mxu0 0.0
    %1063 = vmatpush1.msra.mxu0 %v522
    %1064 = vmatprep.subr.mxu0 0.0
    %1065 = vmatpush1.msra.mxu0 %v523
    %1066 = vmatprep.subr.mxu0 0.0
    %1067 = vmatpush1.msra.mxu0 0.0
    %1068 = vmatprep.subr.mxu0 0.0
    %1069 = vmatpush1.msra.mxu0 0.0
    %1070 = vmatprep.subr.mxu0 0.0
    %1071 = vmatpush1.msra.mxu0 0.0
    %1072 = vmatprep.subr.mxu0 0.0
    %1073 = vmatpush1.msra.mxu0 0.0
    %1074 = vmatprep.subr.mxu0 0.0
    %1075 = vmatpush1.msra.mxu0 0.0
    %1076 = vmatprep.subr.mxu0 0.0
    %1077 = vmatpush1.msra.mxu0 0.0
    %1078 = vmatprep.subr.mxu0 0.0
    %1079 = vmatpush1.msra.mxu0 0.0
    %1080 = vmatprep.subr.mxu0 0.0
    %1081 = vmatpush1.msra.mxu0 0.0
    %1082 = vmatprep.subr.mxu0 0.0
    %1083 = vmatpush1.msra.mxu0 0.0
    %1084 = vmatprep.subr.mxu0 0.0
    %1085 = vmatpush1.msra.mxu0 0.0
    %1086 = vmatprep.subr.mxu0 0.0
    %1087 = vmatpush1.msra.mxu0 0.0
    %1088 = vmatprep.subr.mxu0 0.0
    %1089 = vmatpush1.msra.mxu0 0.0
    %1090 = vmatprep.subr.mxu0 0.0
    %1091 = vmatpush1.msra.mxu0 0.0
    %1092 = vmatprep.subr.mxu0 0.0
    %1093 = vmatpush1.msra.mxu0 0.0
    %1094 = vmatprep.subr.mxu0 0.0
    %1095 = vmatpush1.msra.mxu0 0.0
    %1096 = vmatprep.subr.mxu0 0.0
    %1097 = vmatpush1.msra.mxu0 0.0
    %1098 = vmatprep.subr.mxu0 0.0
    %1099 = vmatpush1.msra.mxu0 0.0
    %1100 = vmatprep.subr.mxu0 0.0
    %1101 = vmatpush1.msra.mxu0 0.0
    %1102 = vmatprep.subr.mxu0 0.0
    %1103 = vmatpush1.msra.mxu0 0.0
    %1104 = vmatprep.subr.mxu0 0.0
    %1105 = vmatpush1.msra.mxu0 0.0
    %1106 = vmatprep.subr.mxu0 0.0
    %1107 = vmatpush1.msra.mxu0 0.0
    %1108 = vmatprep.subr.mxu0 0.0
    %1109 = vmatpush1.msra.mxu0 0.0
    %1110 = vmatprep.subr.mxu0 0.0
    %1111 = vmatpush1.msra.mxu0 0.0
    %1112 = vmatprep.subr.mxu0 0.0
    %1113 = vmatpush1.msra.mxu0 0.0
    %1114 = vmatprep.subr.mxu0 0.0
    %1115 = vmatpush1.msra.mxu0 0.0
    %1116 = vmatprep.subr.mxu0 0.0
    %1117 = vmatpush1.msra.mxu0 0.0
    %1118 = vmatprep.subr.mxu0 0.0
    %1119 = vmatpush1.msra.mxu0 0.0
    %1120 = vmatprep.subr.mxu0 0.0
    %1121 = vmatpush1.msra.mxu0 0.0
    %1122 = vmatprep.mubr.f32.mxu0 0.0
    %1123 = vmatmul.mubr.f32.gmra.mrb[0].mxu0 %v1056
    %v1124 = vpop.f32.mrb[0].mxu0
    %v1125 = vadd.f32 0.0, %v1124
    %v1126 = vpop.f32.mrb[0].mxu0
    %1127 = vdwg.mxu0
    %v1128 = vadd.f32 %v1055, %v1125
    %v1129 = vxor.u32 %v1128, 2147483648
    %v1130 = vmul.f32 %v1129, 1.442695
    %v1131 = vpow.pop %v1130
    %v1132 = vadd.f32 %v1131, 1.0
    %v1133 = vrcp.pop %v1132
    %v1134 = vmul.f32 1.0, %v1133
    %v1135 = vtanh.pop %v1128
    %v1136 = vmul.f32 %v1134, %v1041
    %1138 = vrot.lane.b32.xlu0 %v1135, 32
    %v1139 = vpop.permute.xlu0 %1138
    %v1141 = vmul.f32 %v1134, %v1139
    %1143 = vrot.lane.b32.xlu0 %v1141, 32
    %v1144 = vpop.permute.xlu0 %1143
    %v1146 = vadd.f32 %v1136, %v1144
    %v1147 = vtanh.pop %v1146
    %1149 = vrot.lane.b32.xlu0 %v1147, 32
    %v1150 = vpop.permute.xlu0 %1149
    %v1152 = vmul.f32 %v1134, %v1150
    %1154 = vrot.lane.b32.xlu0 %v1152, 64
    %v1155 = vpop.permute.xlu0 %1154
    %s1157 = scalar_lea.vmem [#allocation3], 40
    %1158 = vst.msk [vmem:[%s1157] sm:$0xff] %vm116, %v1155
    %s1159 = scalar_lea.vmem [#allocation2], 48
    %v1160 = vld [vmem:[%s1159] sm:$0xff]
    %v1161 = vsel %vm116, %v1155, 0
    %1163 = vmatprep.subr.mxu0 0.0
    %1164 = vmatpush1.msra.mxu0 %v520
    %1165 = vmatprep.subr.mxu0 0.0
    %1166 = vmatpush1.msra.mxu0 %v521
    %1167 = vmatprep.subr.mxu0 0.0
    %1168 = vmatpush1.msra.mxu0 %v522
    %1169 = vmatprep.subr.mxu0 0.0
    %1170 = vmatpush1.msra.mxu0 %v523
    %1171 = vmatprep.subr.mxu0 0.0
    %1172 = vmatpush1.msra.mxu0 0.0
    %1173 = vmatprep.subr.mxu0 0.0
    %1174 = vmatpush1.msra.mxu0 0.0
    %1175 = vmatprep.subr.mxu0 0.0
    %1176 = vmatpush1.msra.mxu0 0.0
    %1177 = vmatprep.subr.mxu0 0.0
    %1178 = vmatpush1.msra.mxu0 0.0
    %1179 = vmatprep.subr.mxu0 0.0
    %1180 = vmatpush1.msra.mxu0 0.0
    %1181 = vmatprep.subr.mxu0 0.0
    %1182 = vmatpush1.msra.mxu0 0.0
    %1183 = vmatprep.subr.mxu0 0.0
    %1184 = vmatpush1.msra.mxu0 0.0
    %1185 = vmatprep.subr.mxu0 0.0
    %1186 = vmatpush1.msra.mxu0 0.0
    %1187 = vmatprep.subr.mxu0 0.0
    %1188 = vmatpush1.msra.mxu0 0.0
    %1189 = vmatprep.subr.mxu0 0.0
    %1190 = vmatpush1.msra.mxu0 0.0
    %1191 = vmatprep.subr.mxu0 0.0
    %1192 = vmatpush1.msra.mxu0 0.0
    %1193 = vmatprep.subr.mxu0 0.0
    %1194 = vmatpush1.msra.mxu0 0.0
    %1195 = vmatprep.subr.mxu0 0.0
    %1196 = vmatpush1.msra.mxu0 0.0
    %1197 = vmatprep.subr.mxu0 0.0
    %1198 = vmatpush1.msra.mxu0 0.0
    %1199 = vmatprep.subr.mxu0 0.0
    %1200 = vmatpush1.msra.mxu0 0.0
    %1201 = vmatprep.subr.mxu0 0.0
    %1202 = vmatpush1.msra.mxu0 0.0
    %1203 = vmatprep.subr.mxu0 0.0
    %1204 = vmatpush1.msra.mxu0 0.0
    %1205 = vmatprep.subr.mxu0 0.0
    %1206 = vmatpush1.msra.mxu0 0.0
    %1207 = vmatprep.subr.mxu0 0.0
    %1208 = vmatpush1.msra.mxu0 0.0
    %1209 = vmatprep.subr.mxu0 0.0
    %1210 = vmatpush1.msra.mxu0 0.0
    %1211 = vmatprep.subr.mxu0 0.0
    %1212 = vmatpush1.msra.mxu0 0.0
    %1213 = vmatprep.subr.mxu0 0.0
    %1214 = vmatpush1.msra.mxu0 0.0
    %1215 = vmatprep.subr.mxu0 0.0
    %1216 = vmatpush1.msra.mxu0 0.0
    %1217 = vmatprep.subr.mxu0 0.0
    %1218 = vmatpush1.msra.mxu0 0.0
    %1219 = vmatprep.subr.mxu0 0.0
    %1220 = vmatpush1.msra.mxu0 0.0
    %1221 = vmatprep.subr.mxu0 0.0
    %1222 = vmatpush1.msra.mxu0 0.0
    %1223 = vmatprep.subr.mxu0 0.0
    %1224 = vmatpush1.msra.mxu0 0.0
    %1225 = vmatprep.subr.mxu0 0.0
    %1226 = vmatpush1.msra.mxu0 0.0
    %1227 = vmatprep.mubr.f32.mxu0 0.0
    %1228 = vmatmul.mubr.f32.gmra.mrb[0].mxu0 %v1161
    %v1229 = vpop.f32.mrb[0].mxu0
    %v1230 = vadd.f32 0.0, %v1229
    %v1231 = vpop.f32.mrb[0].mxu0
    %1232 = vdwg.mxu0
    %v1233 = vadd.f32 %v1160, %v1230
    %v1234 = vxor.u32 %v1233, 2147483648
    %v1235 = vmul.f32 %v1234, 1.442695
    %v1236 = vpow.pop %v1235
    %v1237 = vadd.f32 %v1236, 1.0
    %v1238 = vrcp.pop %v1237
    %v1239 = vmul.f32 1.0, %v1238
    %v1240 = vtanh.pop %v1233
    %v1241 = vmul.f32 %v1239, %v1146
    %1243 = vrot.lane.b32.xlu0 %v1240, 32
    %v1244 = vpop.permute.xlu0 %1243
    %v1246 = vmul.f32 %v1239, %v1244
    %1248 = vrot.lane.b32.xlu0 %v1246, 32
    %v1249 = vpop.permute.xlu0 %1248
    %v1251 = vadd.f32 %v1241, %v1249
    %v1252 = vtanh.pop %v1251
    %1254 = vrot.lane.b32.xlu0 %v1252, 32
    %v1255 = vpop.permute.xlu0 %1254
    %v1257 = vmul.f32 %v1239, %v1255
    %1259 = vrot.lane.b32.xlu0 %v1257, 64
    %v1260 = vpop.permute.xlu0 %1259
    %s1262 = scalar_lea.vmem [#allocation3], 48
    %1263 = vst.msk [vmem:[%s1262] sm:$0xff] %vm116, %v1260
    %s1264 = scalar_lea.vmem [#allocation2], 56
    %v1265 = vld [vmem:[%s1264] sm:$0xff]
    %v1266 = vsel %vm116, %v1260, 0
    %1268 = vmatprep.subr.mxu0 0.0
    %1269 = vmatpush1.msra.mxu0 %v520
    %1270 = vmatprep.subr.mxu0 0.0
    %1271 = vmatpush1.msra.mxu0 %v521
    %1272 = vmatprep.subr.mxu0 0.0
    %1273 = vmatpush1.msra.mxu0 %v522
    %1274 = vmatprep.subr.mxu0 0.0
    %1275 = vmatpush1.msra.mxu0 %v523
    %1276 = vmatprep.subr.mxu0 0.0
    %1277 = vmatpush1.msra.mxu0 0.0
    %1278 = vmatprep.subr.mxu0 0.0
    %1279 = vmatpush1.msra.mxu0 0.0
    %1280 = vmatprep.subr.mxu0 0.0
    %1281 = vmatpush1.msra.mxu0 0.0
    %1282 = vmatprep.subr.mxu0 0.0
    %1283 = vmatpush1.msra.mxu0 0.0
    %1284 = vmatprep.subr.mxu0 0.0
    %1285 = vmatpush1.msra.mxu0 0.0
    %1286 = vmatprep.subr.mxu0 0.0
    %1287 = vmatpush1.msra.mxu0 0.0
    %1288 = vmatprep.subr.mxu0 0.0
    %1289 = vmatpush1.msra.mxu0 0.0
    %1290 = vmatprep.subr.mxu0 0.0
    %1291 = vmatpush1.msra.mxu0 0.0
    %1292 = vmatprep.subr.mxu0 0.0
    %1293 = vmatpush1.msra.mxu0 0.0
    %1294 = vmatprep.subr.mxu0 0.0
    %1295 = vmatpush1.msra.mxu0 0.0
    %1296 = vmatprep.subr.mxu0 0.0
    %1297 = vmatpush1.msra.mxu0 0.0
    %1298 = vmatprep.subr.mxu0 0.0
    %1299 = vmatpush1.msra.mxu0 0.0
    %1300 = vmatprep.subr.mxu0 0.0
    %1301 = vmatpush1.msra.mxu0 0.0
    %1302 = vmatprep.subr.mxu0 0.0
    %1303 = vmatpush1.msra.mxu0 0.0
    %1304 = vmatprep.subr.mxu0 0.0
    %1305 = vmatpush1.msra.mxu0 0.0
    %1306 = vmatprep.subr.mxu0 0.0
    %1307 = vmatpush1.msra.mxu0 0.0
    %1308 = vmatprep.subr.mxu0 0.0
    %1309 = vmatpush1.msra.mxu0 0.0
    %1310 = vmatprep.subr.mxu0 0.0
    %1311 = vmatpush1.msra.mxu0 0.0
    %1312 = vmatprep.subr.mxu0 0.0
    %1313 = vmatpush1.msra.mxu0 0.0
    %1314 = vmatprep.subr.mxu0 0.0
    %1315 = vmatpush1.msra.mxu0 0.0
    %1316 = vmatprep.subr.mxu0 0.0
    %1317 = vmatpush1.msra.mxu0 0.0
    %1318 = vmatprep.subr.mxu0 0.0
    %1319 = vmatpush1.msra.mxu0 0.0
    %1320 = vmatprep.subr.mxu0 0.0
    %1321 = vmatpush1.msra.mxu0 0.0
    %1322 = vmatprep.subr.mxu0 0.0
    %1323 = vmatpush1.msra.mxu0 0.0
    %1324 = vmatprep.subr.mxu0 0.0
    %1325 = vmatpush1.msra.mxu0 0.0
    %1326 = vmatprep.subr.mxu0 0.0
    %1327 = vmatpush1.msra.mxu0 0.0
    %1328 = vmatprep.subr.mxu0 0.0
    %1329 = vmatpush1.msra.mxu0 0.0
    %1330 = vmatprep.subr.mxu0 0.0
    %1331 = vmatpush1.msra.mxu0 0.0
    %1332 = vmatprep.mubr.f32.mxu0 0.0
    %1333 = vmatmul.mubr.f32.gmra.mrb[0].mxu0 %v1266
    %v1334 = vpop.f32.mrb[0].mxu0
    %v1335 = vadd.f32 0.0, %v1334
    %v1336 = vpop.f32.mrb[0].mxu0
    %1337 = vdwg.mxu0
    %v1338 = vadd.f32 %v1265, %v1335
    %v1339 = vxor.u32 %v1338, 2147483648
    %v1340 = vmul.f32 %v1339, 1.442695
    %v1341 = vpow.pop %v1340
    %v1342 = vadd.f32 %v1341, 1.0
    %v1343 = vrcp.pop %v1342
    %v1344 = vmul.f32 1.0, %v1343
    %v1345 = vtanh.pop %v1338
    %v1346 = vmul.f32 %v1344, %v1251
    %1348 = vrot.lane.b32.xlu0 %v1345, 32
    %v1349 = vpop.permute.xlu0 %1348
    %v1351 = vmul.f32 %v1344, %v1349
    %1353 = vrot.lane.b32.xlu0 %v1351, 32
    %v1354 = vpop.permute.xlu0 %1353
    %v1356 = vadd.f32 %v1346, %v1354
    %v1357 = vtanh.pop %v1356
    %1359 = vrot.lane.b32.xlu0 %v1357, 32
    %v1360 = vpop.permute.xlu0 %1359
    %v1362 = vmul.f32 %v1344, %v1360
    %1364 = vrot.lane.b32.xlu0 %v1362, 64
    %v1365 = vpop.permute.xlu0 %1364
    %s1367 = scalar_lea.vmem [#allocation3], 56
    %1368 = vst.msk [vmem:[%s1367] sm:$0xff] %vm116, %v1365
    %1369 = vst.msk [vmem:[#allocation14] sm:$0xff] %vm116, %v1365
    %1371 = vrot.lane.b32.xlu0 %v1356, 96
    %v1372 = vpop.permute.xlu0 %1371
    %1374 = vst.msk [vmem:[#allocation16] sm:$0xff] %vm116, %v1372
    %v1375 = vld [vmem:[#allocation3] sm:$0xff]
    %v1376 = vld [vmem:[#allocation3 + $0x8] sm:$0xff]
    %v1377 = vld [vmem:[#allocation3 + $0x10] sm:$0xff]
    %v1378 = vld [vmem:[#allocation3 + $0x18] sm:$0xff]
    %v1379 = vld [vmem:[#allocation3 + $0x20] sm:$0xff]
    %v1380 = vld [vmem:[#allocation3 + $0x28] sm:$0xff]
    %v1381 = vld [vmem:[#allocation3 + $0x30] sm:$0xff]
    %v1382 = vld [vmem:[#allocation3 + $0x38] sm:$0xff]
    %v1383 = vld [vmem:[#allocation12] sm:$0xff]
    %v1384 = vld [vmem:[#allocation12 + $0x8] sm:$0xff]
    %v1385 = vld [vmem:[#allocation12 + $0x10] sm:$0xff]
    %v1386 = vld [vmem:[#allocation12 + $0x18] sm:$0xff]
    %v1387 = vld [vmem:[#allocation12 + $0x20] sm:$0xff]
    %v1388 = vld [vmem:[#allocation12 + $0x28] sm:$0xff]
    %v1389 = vld [vmem:[#allocation12 + $0x30] sm:$0xff]
    %v1390 = vld [vmem:[#allocation12 + $0x38] sm:$0xff]
    %v1391 = vld [vmem:[%s9] sm:$0x3]
    %v1393 = vlaneseq
    %v1394 = vshrl.u32 %v1393, 7
    %v1395 = vsub.s32 0, %v1394
    %v1396 = vrot.slane %v1391, %v1395
    %v1397 = vlaneseq
    %v1398 = vshrl.u32 %v1397, 7
    %v1399 = vsub.s32 1, %v1398
    %v1400 = vrot.slane %v1391, %v1399
    %v1404 = vsel %vm116, %v1375, 0
    %v1407 = vsel %vm116, %v1376, 0
    %v1410 = vsel %vm116, %v1377, 0
    %v1413 = vsel %vm116, %v1378, 0
    %v1416 = vsel %vm116, %v1379, 0
    %v1419 = vsel %vm116, %v1380, 0
    %v1422 = vsel %vm116, %v1381, 0
    %v1425 = vsel %vm116, %v1382, 0
    %1427 = vmatprep.subr.mxu0 %v1384
    %1428 = vmatpush1.msra.mxu0 %v1383
    %1429 = vmatprep.subr.mxu0 %v1386
    %1430 = vmatpush1.msra.mxu0 %v1385
    %1431 = vmatprep.subr.mxu0 %v1388
    %1432 = vmatpush1.msra.mxu0 %v1387
    %1433 = vmatprep.subr.mxu0 %v1390
    %1434 = vmatpush1.msra.mxu0 %v1389
    %1435 = vmatprep.subr.mxu0 0.0
    %1436 = vmatpush1.msra.mxu0 0.0
    %1437 = vmatprep.subr.mxu0 0.0
    %1438 = vmatpush1.msra.mxu0 0.0
    %1439 = vmatprep.subr.mxu0 0.0
    %1440 = vmatpush1.msra.mxu0 0.0
    %1441 = vmatprep.subr.mxu0 0.0
    %1442 = vmatpush1.msra.mxu0 0.0
    %1443 = vmatprep.subr.mxu0 0.0
    %1444 = vmatpush1.msra.mxu0 0.0
    %1445 = vmatprep.subr.mxu0 0.0
    %1446 = vmatpush1.msra.mxu0 0.0
    %1447 = vmatprep.subr.mxu0 0.0
    %1448 = vmatpush1.msra.mxu0 0.0
    %1449 = vmatprep.subr.mxu0 0.0
    %1450 = vmatpush1.msra.mxu0 0.0
    %1451 = vmatprep.subr.mxu0 0.0
    %1452 = vmatpush1.msra.mxu0 0.0
    %1453 = vmatprep.subr.mxu0 0.0
    %1454 = vmatpush1.msra.mxu0 0.0
    %1455 = vmatprep.subr.mxu0 0.0
    %1456 = vmatpush1.msra.mxu0 0.0
    %1457 = vmatprep.subr.mxu0 0.0
    %1458 = vmatpush1.msra.mxu0 0.0
    %1459 = vmatprep.subr.mxu0 0.0
    %1460 = vmatpush1.msra.mxu0 0.0
    %1461 = vmatprep.subr.mxu0 0.0
    %1462 = vmatpush1.msra.mxu0 0.0
    %1463 = vmatprep.subr.mxu0 0.0
    %1464 = vmatpush1.msra.mxu0 0.0
    %1465 = vmatprep.subr.mxu0 0.0
    %1466 = vmatpush1.msra.mxu0 0.0
    %1467 = vmatprep.subr.mxu0 0.0
    %1468 = vmatpush1.msra.mxu0 0.0
    %1469 = vmatprep.subr.mxu0 0.0
    %1470 = vmatpush1.msra.mxu0 0.0
    %1471 = vmatprep.subr.mxu0 0.0
    %1472 = vmatpush1.msra.mxu0 0.0
    %1473 = vmatprep.subr.mxu0 0.0
    %1474 = vmatpush1.msra.mxu0 0.0
    %1475 = vmatprep.subr.mxu0 0.0
    %1476 = vmatpush1.msra.mxu0 0.0
    %1477 = vmatprep.subr.mxu0 0.0
    %1478 = vmatpush1.msra.mxu0 0.0
    %1479 = vmatprep.subr.mxu0 0.0
    %1480 = vmatpush1.msra.mxu0 0.0
    %1481 = vmatprep.subr.mxu0 0.0
    %1482 = vmatpush1.msra.mxu0 0.0
    %1483 = vmatprep.subr.mxu0 0.0
    %1484 = vmatpush1.msra.mxu0 0.0
    %1485 = vmatprep.subr.mxu0 0.0
    %1486 = vmatpush1.msra.mxu0 0.0
    %1487 = vmatprep.subr.mxu0 0.0
    %1488 = vmatpush1.msra.mxu0 0.0
    %1489 = vmatprep.subr.mxu0 0.0
    %1490 = vmatpush1.msra.mxu0 0.0
    %1491 = vmatprep.mubr.f32.mxu0 0.0
    %1492 = vmatmul.mubr.f32.gmra.mrb[0].mxu0 %v1404
    %v1493 = vpop.f32.mrb[0].mxu0
    %v1494 = vadd.f32 %v1396, %v1493
    %v1495 = vpop.f32.mrb[0].mxu0
    %v1496 = vadd.f32 %v1400, %v1495
    %1497 = vmatprep.mubr.f32.mxu0 0.0
    %1498 = vmatmul.mubr.f32.gmra.mrb[0].mxu0 %v1407
    %v1499 = vpop.f32.mrb[0].mxu0
    %v1500 = vadd.f32 %v1396, %v1499
    %v1501 = vpop.f32.mrb[0].mxu0
    %v1502 = vadd.f32 %v1400, %v1501
    %1503 = vmatprep.mubr.f32.mxu0 0.0
    %1504 = vmatmul.mubr.f32.gmra.mrb[0].mxu0 %v1410
    %v1505 = vpop.f32.mrb[0].mxu0
    %v1506 = vadd.f32 %v1396, %v1505
    %v1507 = vpop.f32.mrb[0].mxu0
    %v1508 = vadd.f32 %v1400, %v1507
    %1509 = vmatprep.mubr.f32.mxu0 0.0
    %1510 = vmatmul.mubr.f32.gmra.mrb[0].mxu0 %v1413
    %v1511 = vpop.f32.mrb[0].mxu0
    %v1512 = vadd.f32 %v1396, %v1511
    %v1513 = vpop.f32.mrb[0].mxu0
    %v1514 = vadd.f32 %v1400, %v1513
    %1515 = vmatprep.mubr.f32.mxu0 0.0
    %1516 = vmatmul.mubr.f32.gmra.mrb[0].mxu0 %v1416
    %v1517 = vpop.f32.mrb[0].mxu0
    %v1518 = vadd.f32 %v1396, %v1517
    %v1519 = vpop.f32.mrb[0].mxu0
    %v1520 = vadd.f32 %v1400, %v1519
    %1521 = vmatprep.mubr.f32.mxu0 0.0
    %1522 = vmatmul.mubr.f32.gmra.mrb[0].mxu0 %v1419
    %v1523 = vpop.f32.mrb[0].mxu0
    %v1524 = vadd.f32 %v1396, %v1523
    %v1525 = vpop.f32.mrb[0].mxu0
    %v1526 = vadd.f32 %v1400, %v1525
    %1527 = vmatprep.mubr.f32.mxu0 0.0
    %1528 = vmatmul.mubr.f32.gmra.mrb[0].mxu0 %v1422
    %v1529 = vpop.f32.mrb[0].mxu0
    %v1530 = vadd.f32 %v1396, %v1529
    %v1531 = vpop.f32.mrb[0].mxu0
    %v1532 = vadd.f32 %v1400, %v1531
    %1533 = vmatprep.mubr.f32.mxu0 0.0
    %1534 = vmatmul.mubr.f32.gmra.mrb[0].mxu0 %v1425
    %v1535 = vpop.f32.mrb[0].mxu0
    %v1536 = vadd.f32 %v1396, %v1535
    %v1537 = vpop.f32.mrb[0].mxu0
    %v1538 = vadd.f32 %v1400, %v1537
    %1539 = vdwg.mxu0
    %v1540 = vlaneseq
    %v1541 = vand.u32 %v1540, 127
    %v1542 = vadd.s32 %v1541, 128
    %vm1543 = vcmp.ge.s32.totalorder %v1541, 0
    %vm1544 = vcmp.ge.s32.totalorder %v1542, 0
    %vm1545 = vcmp.lt.s32.totalorder %v1541, 11
    %vm1546 = vcmp.lt.s32.totalorder %v1542, 11
    %vm1547 = vmand %vm1543, %vm1545
    %vm1548 = vmand %vm1544, %vm1546
    %v1549 = vsel %vm1547, 1, 0
    %v1550 = vsel %vm1548, 1, 0
    %vm1551 = vcmp.eq.s32.totalorder %v1549, 1
    %vm1552 = vcmp.eq.s32.totalorder %v1550, 1
    %v1553 = vsel %vm1551, %v1494, -1e+30
    %v1554 = vsel %vm1552, %v1496, -1e+30
    %v1555 = vsel %vm1551, %v1500, -1e+30
    %v1556 = vsel %vm1552, %v1502, -1e+30
    %v1557 = vsel %vm1551, %v1506, -1e+30
    %v1558 = vsel %vm1552, %v1508, -1e+30
    %v1559 = vsel %vm1551, %v1512, -1e+30
    %v1560 = vsel %vm1552, %v1514, -1e+30
    %v1561 = vsel %vm1551, %v1518, -1e+30
    %v1562 = vsel %vm1552, %v1520, -1e+30
    %v1563 = vsel %vm1551, %v1524, -1e+30
    %v1564 = vsel %vm1552, %v1526, -1e+30
    %v1565 = vsel %vm1551, %v1530, -1e+30
    %v1566 = vsel %vm1552, %v1532, -1e+30
    %v1567 = vsel %vm1551, %v1536, -1e+30
    %v1568 = vsel %vm1552, %v1538, -1e+30
    %v1569 = vmax.f32 %v1553, %v1554
    %1570 = vmax.xlane.f32.xlu0 %v1569
    %v1571 = vpop.xlane.xlu0 %1570
    %v1572 = vmax.f32 %v1555, %v1556
    %1573 = vmax.xlane.f32.xlu0 %v1572
    %v1574 = vpop.xlane.xlu0 %1573
    %v1575 = vmax.f32 %v1557, %v1558
    %1576 = vmax.xlane.f32.xlu0 %v1575
    %v1577 = vpop.xlane.xlu0 %1576
    %v1578 = vmax.f32 %v1559, %v1560
    %1579 = vmax.xlane.f32.xlu0 %v1578
    %v1580 = vpop.xlane.xlu0 %1579
    %v1581 = vmax.f32 %v1561, %v1562
    %1582 = vmax.xlane.f32.xlu0 %v1581
    %v1583 = vpop.xlane.xlu0 %1582
    %v1584 = vmax.f32 %v1563, %v1564
    %1585 = vmax.xlane.f32.xlu0 %v1584
    %v1586 = vpop.xlane.xlu0 %1585
    %v1587 = vmax.f32 %v1565, %v1566
    %1588 = vmax.xlane.f32.xlu0 %v1587
    %v1589 = vpop.xlane.xlu0 %1588
    %v1590 = vmax.f32 %v1567, %v1568
    %1591 = vmax.xlane.f32.xlu0 %v1590
    %v1592 = vpop.xlane.xlu0 %1591
    %v1593 = vsel %vm1551, %v1571, 0.0
    %v1594 = vsel %vm1552, %v1571, 0.0
    %v1595 = vsel %vm1551, %v1574, 0.0
    %v1596 = vsel %vm1552, %v1574, 0.0
    %v1597 = vsel %vm1551, %v1577, 0.0
    %v1598 = vsel %vm1552, %v1577, 0.0
    %v1599 = vsel %vm1551, %v1580, 0.0
    %v1600 = vsel %vm1552, %v1580, 0.0
    %v1601 = vsel %vm1551, %v1583, 0.0
    %v1602 = vsel %vm1552, %v1583, 0.0
    %v1603 = vsel %vm1551, %v1586, 0.0
    %v1604 = vsel %vm1552, %v1586, 0.0
    %v1605 = vsel %vm1551, %v1589, 0.0
    %v1606 = vsel %vm1552, %v1589, 0.0
    %v1607 = vsel %vm1551, %v1592, 0.0
    %v1608 = vsel %vm1552, %v1592, 0.0
    %vm1609 = vcmp.ge.s32.totalorder %v1541, 11
    %vm1610 = vcmp.ge.s32.totalorder %v1542, 11
    %vm1611 = vcmp.lt.s32.totalorder %v1541, 22
    %vm1612 = vcmp.lt.s32.totalorder %v1542, 22
    %vm1613 = vmand %vm1609, %vm1611
    %vm1614 = vmand %vm1610, %vm1612
    %v1615 = vsel %vm1613, 1, 0
    %v1616 = vsel %vm1614, 1, 0
    %vm1617 = vcmp.eq.s32.totalorder %v1615, 1
    %vm1618 = vcmp.eq.s32.totalorder %v1616, 1
    %v1619 = vsel %vm1617, %v1494, -1e+30
    %v1620 = vsel %vm1618, %v1496, -1e+30
    %v1621 = vsel %vm1617, %v1500, -1e+30
    %v1622 = vsel %vm1618, %v1502, -1e+30
    %v1623 = vsel %vm1617, %v1506, -1e+30
    %v1624 = vsel %vm1618, %v1508, -1e+30
    %v1625 = vsel %vm1617, %v1512, -1e+30
    %v1626 = vsel %vm1618, %v1514, -1e+30
    %v1627 = vsel %vm1617, %v1518, -1e+30
    %v1628 = vsel %vm1618, %v1520, -1e+30
    %v1629 = vsel %vm1617, %v1524, -1e+30
    %v1630 = vsel %vm1618, %v1526, -1e+30
    %v1631 = vsel %vm1617, %v1530, -1e+30
    %v1632 = vsel %vm1618, %v1532, -1e+30
    %v1633 = vsel %vm1617, %v1536, -1e+30
    %v1634 = vsel %vm1618, %v1538, -1e+30
    %v1635 = vmax.f32 %v1619, %v1620
    %1636 = vmax.xlane.f32.xlu0 %v1635
    %v1637 = vpop.xlane.xlu0 %1636
    %v1638 = vmax.f32 %v1621, %v1622
    %1639 = vmax.xlane.f32.xlu0 %v1638
    %v1640 = vpop.xlane.xlu0 %1639
    %v1641 = vmax.f32 %v1623, %v1624
    %1642 = vmax.xlane.f32.xlu0 %v1641
    %v1643 = vpop.xlane.xlu0 %1642
    %v1644 = vmax.f32 %v1625, %v1626
    %1645 = vmax.xlane.f32.xlu0 %v1644
    %v1646 = vpop.xlane.xlu0 %1645
    %v1647 = vmax.f32 %v1627, %v1628
    %1648 = vmax.xlane.f32.xlu0 %v1647
    %v1649 = vpop.xlane.xlu0 %1648
    %v1650 = vmax.f32 %v1629, %v1630
    %1651 = vmax.xlane.f32.xlu0 %v1650
    %v1652 = vpop.xlane.xlu0 %1651
    %v1653 = vmax.f32 %v1631, %v1632
    %1654 = vmax.xlane.f32.xlu0 %v1653
    %v1655 = vpop.xlane.xlu0 %1654
    %v1656 = vmax.f32 %v1633, %v1634
    %1657 = vmax.xlane.f32.xlu0 %v1656
    %v1658 = vpop.xlane.xlu0 %1657
    %v1659 = vsel %vm1617, %v1637, %v1593
    %v1660 = vsel %vm1618, %v1637, %v1594
    %v1661 = vsel %vm1617, %v1640, %v1595
    %v1662 = vsel %vm1618, %v1640, %v1596
    %v1663 = vsel %vm1617, %v1643, %v1597
    %v1664 = vsel %vm1618, %v1643, %v1598
    %v1665 = vsel %vm1617, %v1646, %v1599
    %v1666 = vsel %vm1618, %v1646, %v1600
    %v1667 = vsel %vm1617, %v1649, %v1601
    %v1668 = vsel %vm1618, %v1649, %v1602
    %v1669 = vsel %vm1617, %v1652, %v1603
    %v1670 = vsel %vm1618, %v1652, %v1604
    %v1671 = vsel %vm1617, %v1655, %v1605
    %v1672 = vsel %vm1618, %v1655, %v1606
    %v1673 = vsel %vm1617, %v1658, %v1607
    %v1674 = vsel %vm1618, %v1658, %v1608
    %vm1675 = vcmp.ge.s32.totalorder %v1541, 22
    %vm1676 = vcmp.ge.s32.totalorder %v1542, 22
    %vm1677 = vcmp.lt.s32.totalorder %v1541, 33
    %vm1678 = vcmp.lt.s32.totalorder %v1542, 33
    %vm1679 = vmand %vm1675, %vm1677
    %vm1680 = vmand %vm1676, %vm1678
    %v1681 = vsel %vm1679, 1, 0
    %v1682 = vsel %vm1680, 1, 0
    %vm1683 = vcmp.eq.s32.totalorder %v1681, 1
    %vm1684 = vcmp.eq.s32.totalorder %v1682, 1
    %v1685 = vsel %vm1683, %v1494, -1e+30
    %v1686 = vsel %vm1684, %v1496, -1e+30
    %v1687 = vsel %vm1683, %v1500, -1e+30
    %v1688 = vsel %vm1684, %v1502, -1e+30
    %v1689 = vsel %vm1683, %v1506, -1e+30
    %v1690 = vsel %vm1684, %v1508, -1e+30
    %v1691 = vsel %vm1683, %v1512, -1e+30
    %v1692 = vsel %vm1684, %v1514, -1e+30
    %v1693 = vsel %vm1683, %v1518, -1e+30
    %v1694 = vsel %vm1684, %v1520, -1e+30
    %v1695 = vsel %vm1683, %v1524, -1e+30
    %v1696 = vsel %vm1684, %v1526, -1e+30
    %v1697 = vsel %vm1683, %v1530, -1e+30
    %v1698 = vsel %vm1684, %v1532, -1e+30
    %v1699 = vsel %vm1683, %v1536, -1e+30
    %v1700 = vsel %vm1684, %v1538, -1e+30
    %v1701 = vmax.f32 %v1685, %v1686
    %1702 = vmax.xlane.f32.xlu0 %v1701
    %v1703 = vpop.xlane.xlu0 %1702
    %v1704 = vmax.f32 %v1687, %v1688
    %1705 = vmax.xlane.f32.xlu0 %v1704
    %v1706 = vpop.xlane.xlu0 %1705
    %v1707 = vmax.f32 %v1689, %v1690
    %1708 = vmax.xlane.f32.xlu0 %v1707
    %v1709 = vpop.xlane.xlu0 %1708
    %v1710 = vmax.f32 %v1691, %v1692
    %1711 = vmax.xlane.f32.xlu0 %v1710
    %v1712 = vpop.xlane.xlu0 %1711
    %v1713 = vmax.f32 %v1693, %v1694
    %1714 = vmax.xlane.f32.xlu0 %v1713
    %v1715 = vpop.xlane.xlu0 %1714
    %v1716 = vmax.f32 %v1695, %v1696
    %1717 = vmax.xlane.f32.xlu0 %v1716
    %v1718 = vpop.xlane.xlu0 %1717
    %v1719 = vmax.f32 %v1697, %v1698
    %1720 = vmax.xlane.f32.xlu0 %v1719
    %v1721 = vpop.xlane.xlu0 %1720
    %v1722 = vmax.f32 %v1699, %v1700
    %1723 = vmax.xlane.f32.xlu0 %v1722
    %v1724 = vpop.xlane.xlu0 %1723
    %v1725 = vsel %vm1683, %v1703, %v1659
    %v1726 = vsel %vm1684, %v1703, %v1660
    %v1727 = vsel %vm1683, %v1706, %v1661
    %v1728 = vsel %vm1684, %v1706, %v1662
    %v1729 = vsel %vm1683, %v1709, %v1663
    %v1730 = vsel %vm1684, %v1709, %v1664
    %v1731 = vsel %vm1683, %v1712, %v1665
    %v1732 = vsel %vm1684, %v1712, %v1666
    %v1733 = vsel %vm1683, %v1715, %v1667
    %v1734 = vsel %vm1684, %v1715, %v1668
    %v1735 = vsel %vm1683, %v1718, %v1669
    %v1736 = vsel %vm1684, %v1718, %v1670
    %v1737 = vsel %vm1683, %v1721, %v1671
    %v1738 = vsel %vm1684, %v1721, %v1672
    %v1739 = vsel %vm1683, %v1724, %v1673
    %v1740 = vsel %vm1684, %v1724, %v1674
    %vm1741 = vcmp.ge.s32.totalorder %v1541, 33
    %vm1742 = vcmp.ge.s32.totalorder %v1542, 33
    %vm1743 = vcmp.lt.s32.totalorder %v1541, 44
    %vm1744 = vcmp.lt.s32.totalorder %v1542, 44
    %vm1745 = vmand %vm1741, %vm1743
    %vm1746 = vmand %vm1742, %vm1744
    %v1747 = vsel %vm1745, 1, 0
    %v1748 = vsel %vm1746, 1, 0
    %vm1749 = vcmp.eq.s32.totalorder %v1747, 1
    %vm1750 = vcmp.eq.s32.totalorder %v1748, 1
    %v1751 = vsel %vm1749, %v1494, -1e+30
    %v1752 = vsel %vm1750, %v1496, -1e+30
    %v1753 = vsel %vm1749, %v1500, -1e+30
    %v1754 = vsel %vm1750, %v1502, -1e+30
    %v1755 = vsel %vm1749, %v1506, -1e+30
    %v1756 = vsel %vm1750, %v1508, -1e+30
    %v1757 = vsel %vm1749, %v1512, -1e+30
    %v1758 = vsel %vm1750, %v1514, -1e+30
    %v1759 = vsel %vm1749, %v1518, -1e+30
    %v1760 = vsel %vm1750, %v1520, -1e+30
    %v1761 = vsel %vm1749, %v1524, -1e+30
    %v1762 = vsel %vm1750, %v1526, -1e+30
    %v1763 = vsel %vm1749, %v1530, -1e+30
    %v1764 = vsel %vm1750, %v1532, -1e+30
    %v1765 = vsel %vm1749, %v1536, -1e+30
    %v1766 = vsel %vm1750, %v1538, -1e+30
    %v1767 = vmax.f32 %v1751, %v1752
    %1768 = vmax.xlane.f32.xlu0 %v1767
    %v1769 = vpop.xlane.xlu0 %1768
    %v1770 = vmax.f32 %v1753, %v1754
    %1771 = vmax.xlane.f32.xlu0 %v1770
    %v1772 = vpop.xlane.xlu0 %1771
    %v1773 = vmax.f32 %v1755, %v1756
    %1774 = vmax.xlane.f32.xlu0 %v1773
    %v1775 = vpop.xlane.xlu0 %1774
    %v1776 = vmax.f32 %v1757, %v1758
    %1777 = vmax.xlane.f32.xlu0 %v1776
    %v1778 = vpop.xlane.xlu0 %1777
    %v1779 = vmax.f32 %v1759, %v1760
    %1780 = vmax.xlane.f32.xlu0 %v1779
    %v1781 = vpop.xlane.xlu0 %1780
    %v1782 = vmax.f32 %v1761, %v1762
    %1783 = vmax.xlane.f32.xlu0 %v1782
    %v1784 = vpop.xlane.xlu0 %1783
    %v1785 = vmax.f32 %v1763, %v1764
    %1786 = vmax.xlane.f32.xlu0 %v1785
    %v1787 = vpop.xlane.xlu0 %1786
    %v1788 = vmax.f32 %v1765, %v1766
    %1789 = vmax.xlane.f32.xlu0 %v1788
    %v1790 = vpop.xlane.xlu0 %1789
    %v1791 = vsel %vm1749, %v1769, %v1725
    %v1792 = vsel %vm1750, %v1769, %v1726
    %v1793 = vsel %vm1749, %v1772, %v1727
    %v1794 = vsel %vm1750, %v1772, %v1728
    %v1795 = vsel %vm1749, %v1775, %v1729
    %v1796 = vsel %vm1750, %v1775, %v1730
    %v1797 = vsel %vm1749, %v1778, %v1731
    %v1798 = vsel %vm1750, %v1778, %v1732
    %v1799 = vsel %vm1749, %v1781, %v1733
    %v1800 = vsel %vm1750, %v1781, %v1734
    %v1801 = vsel %vm1749, %v1784, %v1735
    %v1802 = vsel %vm1750, %v1784, %v1736
    %v1803 = vsel %vm1749, %v1787, %v1737
    %v1804 = vsel %vm1750, %v1787, %v1738
    %v1805 = vsel %vm1749, %v1790, %v1739
    %v1806 = vsel %vm1750, %v1790, %v1740
    %vm1807 = vcmp.ge.s32.totalorder %v1541, 44
    %vm1808 = vcmp.ge.s32.totalorder %v1542, 44
    %vm1809 = vcmp.lt.s32.totalorder %v1541, 55
    %vm1810 = vcmp.lt.s32.totalorder %v1542, 55
    %vm1811 = vmand %vm1807, %vm1809
    %vm1812 = vmand %vm1808, %vm1810
    %v1813 = vsel %vm1811, 1, 0
    %v1814 = vsel %vm1812, 1, 0
    %vm1815 = vcmp.eq.s32.totalorder %v1813, 1
    %vm1816 = vcmp.eq.s32.totalorder %v1814, 1
    %v1817 = vsel %vm1815, %v1494, -1e+30
    %v1818 = vsel %vm1816, %v1496, -1e+30
    %v1819 = vsel %vm1815, %v1500, -1e+30
    %v1820 = vsel %vm1816, %v1502, -1e+30
    %v1821 = vsel %vm1815, %v1506, -1e+30
    %v1822 = vsel %vm1816, %v1508, -1e+30
    %v1823 = vsel %vm1815, %v1512, -1e+30
    %v1824 = vsel %vm1816, %v1514, -1e+30
    %v1825 = vsel %vm1815, %v1518, -1e+30
    %v1826 = vsel %vm1816, %v1520, -1e+30
    %v1827 = vsel %vm1815, %v1524, -1e+30
    %v1828 = vsel %vm1816, %v1526, -1e+30
    %v1829 = vsel %vm1815, %v1530, -1e+30
    %v1830 = vsel %vm1816, %v1532, -1e+30
    %v1831 = vsel %vm1815, %v1536, -1e+30
    %v1832 = vsel %vm1816, %v1538, -1e+30
    %v1833 = vmax.f32 %v1817, %v1818
    %1834 = vmax.xlane.f32.xlu0 %v1833
    %v1835 = vpop.xlane.xlu0 %1834
    %v1836 = vmax.f32 %v1819, %v1820
    %1837 = vmax.xlane.f32.xlu0 %v1836
    %v1838 = vpop.xlane.xlu0 %1837
    %v1839 = vmax.f32 %v1821, %v1822
    %1840 = vmax.xlane.f32.xlu0 %v1839
    %v1841 = vpop.xlane.xlu0 %1840
    %v1842 = vmax.f32 %v1823, %v1824
    %1843 = vmax.xlane.f32.xlu0 %v1842
    %v1844 = vpop.xlane.xlu0 %1843
    %v1845 = vmax.f32 %v1825, %v1826
    %1846 = vmax.xlane.f32.xlu0 %v1845
    %v1847 = vpop.xlane.xlu0 %1846
    %v1848 = vmax.f32 %v1827, %v1828
    %1849 = vmax.xlane.f32.xlu0 %v1848
    %v1850 = vpop.xlane.xlu0 %1849
    %v1851 = vmax.f32 %v1829, %v1830
    %1852 = vmax.xlane.f32.xlu0 %v1851
    %v1853 = vpop.xlane.xlu0 %1852
    %v1854 = vmax.f32 %v1831, %v1832
    %1855 = vmax.xlane.f32.xlu0 %v1854
    %v1856 = vpop.xlane.xlu0 %1855
    %v1857 = vsel %vm1815, %v1835, %v1791
    %v1858 = vsel %vm1816, %v1835, %v1792
    %v1859 = vsel %vm1815, %v1838, %v1793
    %v1860 = vsel %vm1816, %v1838, %v1794
    %v1861 = vsel %vm1815, %v1841, %v1795
    %v1862 = vsel %vm1816, %v1841, %v1796
    %v1863 = vsel %vm1815, %v1844, %v1797
    %v1864 = vsel %vm1816, %v1844, %v1798
    %v1865 = vsel %vm1815, %v1847, %v1799
    %v1866 = vsel %vm1816, %v1847, %v1800
    %v1867 = vsel %vm1815, %v1850, %v1801
    %v1868 = vsel %vm1816, %v1850, %v1802
    %v1869 = vsel %vm1815, %v1853, %v1803
    %v1870 = vsel %vm1816, %v1853, %v1804
    %v1871 = vsel %vm1815, %v1856, %v1805
    %v1872 = vsel %vm1816, %v1856, %v1806
    %vm1873 = vcmp.ge.s32.totalorder %v1541, 55
    %vm1874 = vcmp.ge.s32.totalorder %v1542, 55
    %vm1875 = vcmp.lt.s32.totalorder %v1541, 66
    %vm1876 = vcmp.lt.s32.totalorder %v1542, 66
    %vm1877 = vmand %vm1873, %vm1875
    %vm1878 = vmand %vm1874, %vm1876
    %v1879 = vsel %vm1877, 1, 0
    %v1880 = vsel %vm1878, 1, 0
    %vm1881 = vcmp.eq.s32.totalorder %v1879, 1
    %vm1882 = vcmp.eq.s32.totalorder %v1880, 1
    %v1883 = vsel %vm1881, %v1494, -1e+30
    %v1884 = vsel %vm1882, %v1496, -1e+30
    %v1885 = vsel %vm1881, %v1500, -1e+30
    %v1886 = vsel %vm1882, %v1502, -1e+30
    %v1887 = vsel %vm1881, %v1506, -1e+30
    %v1888 = vsel %vm1882, %v1508, -1e+30
    %v1889 = vsel %vm1881, %v1512, -1e+30
    %v1890 = vsel %vm1882, %v1514, -1e+30
    %v1891 = vsel %vm1881, %v1518, -1e+30
    %v1892 = vsel %vm1882, %v1520, -1e+30
    %v1893 = vsel %vm1881, %v1524, -1e+30
    %v1894 = vsel %vm1882, %v1526, -1e+30
    %v1895 = vsel %vm1881, %v1530, -1e+30
    %v1896 = vsel %vm1882, %v1532, -1e+30
    %v1897 = vsel %vm1881, %v1536, -1e+30
    %v1898 = vsel %vm1882, %v1538, -1e+30
    %v1899 = vmax.f32 %v1883, %v1884
    %1900 = vmax.xlane.f32.xlu0 %v1899
    %v1901 = vpop.xlane.xlu0 %1900
    %v1902 = vmax.f32 %v1885, %v1886
    %1903 = vmax.xlane.f32.xlu0 %v1902
    %v1904 = vpop.xlane.xlu0 %1903
    %v1905 = vmax.f32 %v1887, %v1888
    %1906 = vmax.xlane.f32.xlu0 %v1905
    %v1907 = vpop.xlane.xlu0 %1906
    %v1908 = vmax.f32 %v1889, %v1890
    %1909 = vmax.xlane.f32.xlu0 %v1908
    %v1910 = vpop.xlane.xlu0 %1909
    %v1911 = vmax.f32 %v1891, %v1892
    %1912 = vmax.xlane.f32.xlu0 %v1911
    %v1913 = vpop.xlane.xlu0 %1912
    %v1914 = vmax.f32 %v1893, %v1894
    %1915 = vmax.xlane.f32.xlu0 %v1914
    %v1916 = vpop.xlane.xlu0 %1915
    %v1917 = vmax.f32 %v1895, %v1896
    %1918 = vmax.xlane.f32.xlu0 %v1917
    %v1919 = vpop.xlane.xlu0 %1918
    %v1920 = vmax.f32 %v1897, %v1898
    %1921 = vmax.xlane.f32.xlu0 %v1920
    %v1922 = vpop.xlane.xlu0 %1921
    %v1923 = vsel %vm1881, %v1901, %v1857
    %v1924 = vsel %vm1882, %v1901, %v1858
    %v1925 = vsel %vm1881, %v1904, %v1859
    %v1926 = vsel %vm1882, %v1904, %v1860
    %v1927 = vsel %vm1881, %v1907, %v1861
    %v1928 = vsel %vm1882, %v1907, %v1862
    %v1929 = vsel %vm1881, %v1910, %v1863
    %v1930 = vsel %vm1882, %v1910, %v1864
    %v1931 = vsel %vm1881, %v1913, %v1865
    %v1932 = vsel %vm1882, %v1913, %v1866
    %v1933 = vsel %vm1881, %v1916, %v1867
    %v1934 = vsel %vm1882, %v1916, %v1868
    %v1935 = vsel %vm1881, %v1919, %v1869
    %v1936 = vsel %vm1882, %v1919, %v1870
    %v1937 = vsel %vm1881, %v1922, %v1871
    %v1938 = vsel %vm1882, %v1922, %v1872
    %vm1939 = vcmp.ge.s32.totalorder %v1541, 66
    %vm1940 = vcmp.ge.s32.totalorder %v1542, 66
    %vm1941 = vcmp.lt.s32.totalorder %v1541, 77
    %vm1942 = vcmp.lt.s32.totalorder %v1542, 77
    %vm1943 = vmand %vm1939, %vm1941
    %vm1944 = vmand %vm1940, %vm1942
    %v1945 = vsel %vm1943, 1, 0
    %v1946 = vsel %vm1944, 1, 0
    %vm1947 = vcmp.eq.s32.totalorder %v1945, 1
    %vm1948 = vcmp.eq.s32.totalorder %v1946, 1
    %v1949 = vsel %vm1947, %v1494, -1e+30
    %v1950 = vsel %vm1948, %v1496, -1e+30
    %v1951 = vsel %vm1947, %v1500, -1e+30
    %v1952 = vsel %vm1948, %v1502, -1e+30
    %v1953 = vsel %vm1947, %v1506, -1e+30
    %v1954 = vsel %vm1948, %v1508, -1e+30
    %v1955 = vsel %vm1947, %v1512, -1e+30
    %v1956 = vsel %vm1948, %v1514, -1e+30
    %v1957 = vsel %vm1947, %v1518, -1e+30
    %v1958 = vsel %vm1948, %v1520, -1e+30
    %v1959 = vsel %vm1947, %v1524, -1e+30
    %v1960 = vsel %vm1948, %v1526, -1e+30
    %v1961 = vsel %vm1947, %v1530, -1e+30
    %v1962 = vsel %vm1948, %v1532, -1e+30
    %v1963 = vsel %vm1947, %v1536, -1e+30
    %v1964 = vsel %vm1948, %v1538, -1e+30
    %v1965 = vmax.f32 %v1949, %v1950
    %1966 = vmax.xlane.f32.xlu0 %v1965
    %v1967 = vpop.xlane.xlu0 %1966
    %v1968 = vmax.f32 %v1951, %v1952
    %1969 = vmax.xlane.f32.xlu0 %v1968
    %v1970 = vpop.xlane.xlu0 %1969
    %v1971 = vmax.f32 %v1953, %v1954
    %1972 = vmax.xlane.f32.xlu0 %v1971
    %v1973 = vpop.xlane.xlu0 %1972
    %v1974 = vmax.f32 %v1955, %v1956
    %1975 = vmax.xlane.f32.xlu0 %v1974
    %v1976 = vpop.xlane.xlu0 %1975
    %v1977 = vmax.f32 %v1957, %v1958
    %1978 = vmax.xlane.f32.xlu0 %v1977
    %v1979 = vpop.xlane.xlu0 %1978
    %v1980 = vmax.f32 %v1959, %v1960
    %1981 = vmax.xlane.f32.xlu0 %v1980
    %v1982 = vpop.xlane.xlu0 %1981
    %v1983 = vmax.f32 %v1961, %v1962
    %1984 = vmax.xlane.f32.xlu0 %v1983
    %v1985 = vpop.xlane.xlu0 %1984
    %v1986 = vmax.f32 %v1963, %v1964
    %1987 = vmax.xlane.f32.xlu0 %v1986
    %v1988 = vpop.xlane.xlu0 %1987
    %v1989 = vsel %vm1947, %v1967, %v1923
    %v1990 = vsel %vm1948, %v1967, %v1924
    %v1991 = vsel %vm1947, %v1970, %v1925
    %v1992 = vsel %vm1948, %v1970, %v1926
    %v1993 = vsel %vm1947, %v1973, %v1927
    %v1994 = vsel %vm1948, %v1973, %v1928
    %v1995 = vsel %vm1947, %v1976, %v1929
    %v1996 = vsel %vm1948, %v1976, %v1930
    %v1997 = vsel %vm1947, %v1979, %v1931
    %v1998 = vsel %vm1948, %v1979, %v1932
    %v1999 = vsel %vm1947, %v1982, %v1933
    %v2000 = vsel %vm1948, %v1982, %v1934
    %v2001 = vsel %vm1947, %v1985, %v1935
    %v2002 = vsel %vm1948, %v1985, %v1936
    %v2003 = vsel %vm1947, %v1988, %v1937
    %v2004 = vsel %vm1948, %v1988, %v1938
    %vm2005 = vcmp.ge.s32.totalorder %v1541, 77
    %vm2006 = vcmp.ge.s32.totalorder %v1542, 77
    %vm2007 = vcmp.lt.s32.totalorder %v1541, 88
    %vm2008 = vcmp.lt.s32.totalorder %v1542, 88
    %vm2009 = vmand %vm2005, %vm2007
    %vm2010 = vmand %vm2006, %vm2008
    %v2011 = vsel %vm2009, 1, 0
    %v2012 = vsel %vm2010, 1, 0
    %vm2013 = vcmp.eq.s32.totalorder %v2011, 1
    %vm2014 = vcmp.eq.s32.totalorder %v2012, 1
    %v2015 = vsel %vm2013, %v1494, -1e+30
    %v2016 = vsel %vm2014, %v1496, -1e+30
    %v2017 = vsel %vm2013, %v1500, -1e+30
    %v2018 = vsel %vm2014, %v1502, -1e+30
    %v2019 = vsel %vm2013, %v1506, -1e+30
    %v2020 = vsel %vm2014, %v1508, -1e+30
    %v2021 = vsel %vm2013, %v1512, -1e+30
    %v2022 = vsel %vm2014, %v1514, -1e+30
    %v2023 = vsel %vm2013, %v1518, -1e+30
    %v2024 = vsel %vm2014, %v1520, -1e+30
    %v2025 = vsel %vm2013, %v1524, -1e+30
    %v2026 = vsel %vm2014, %v1526, -1e+30
    %v2027 = vsel %vm2013, %v1530, -1e+30
    %v2028 = vsel %vm2014, %v1532, -1e+30
    %v2029 = vsel %vm2013, %v1536, -1e+30
    %v2030 = vsel %vm2014, %v1538, -1e+30
    %v2031 = vmax.f32 %v2015, %v2016
    %2032 = vmax.xlane.f32.xlu0 %v2031
    %v2033 = vpop.xlane.xlu0 %2032
    %v2034 = vmax.f32 %v2017, %v2018
    %2035 = vmax.xlane.f32.xlu0 %v2034
    %v2036 = vpop.xlane.xlu0 %2035
    %v2037 = vmax.f32 %v2019, %v2020
    %2038 = vmax.xlane.f32.xlu0 %v2037
    %v2039 = vpop.xlane.xlu0 %2038
    %v2040 = vmax.f32 %v2021, %v2022
    %2041 = vmax.xlane.f32.xlu0 %v2040
    %v2042 = vpop.xlane.xlu0 %2041
    %v2043 = vmax.f32 %v2023, %v2024
    %2044 = vmax.xlane.f32.xlu0 %v2043
    %v2045 = vpop.xlane.xlu0 %2044
    %v2046 = vmax.f32 %v2025, %v2026
    %2047 = vmax.xlane.f32.xlu0 %v2046
    %v2048 = vpop.xlane.xlu0 %2047
    %v2049 = vmax.f32 %v2027, %v2028
    %2050 = vmax.xlane.f32.xlu0 %v2049
    %v2051 = vpop.xlane.xlu0 %2050
    %v2052 = vmax.f32 %v2029, %v2030
    %2053 = vmax.xlane.f32.xlu0 %v2052
    %v2054 = vpop.xlane.xlu0 %2053
    %v2055 = vsel %vm2013, %v2033, %v1989
    %v2056 = vsel %vm2014, %v2033, %v1990
    %v2057 = vsel %vm2013, %v2036, %v1991
    %v2058 = vsel %vm2014, %v2036, %v1992
    %v2059 = vsel %vm2013, %v2039, %v1993
    %v2060 = vsel %vm2014, %v2039, %v1994
    %v2061 = vsel %vm2013, %v2042, %v1995
    %v2062 = vsel %vm2014, %v2042, %v1996
    %v2063 = vsel %vm2013, %v2045, %v1997
    %v2064 = vsel %vm2014, %v2045, %v1998
    %v2065 = vsel %vm2013, %v2048, %v1999
    %v2066 = vsel %vm2014, %v2048, %v2000
    %v2067 = vsel %vm2013, %v2051, %v2001
    %v2068 = vsel %vm2014, %v2051, %v2002
    %v2069 = vsel %vm2013, %v2054, %v2003
    %v2070 = vsel %vm2014, %v2054, %v2004
    %vm2071 = vcmp.ge.s32.totalorder %v1541, 88
    %vm2072 = vcmp.ge.s32.totalorder %v1542, 88
    %vm2073 = vcmp.lt.s32.totalorder %v1541, 99
    %vm2074 = vcmp.lt.s32.totalorder %v1542, 99
    %vm2075 = vmand %vm2071, %vm2073
    %vm2076 = vmand %vm2072, %vm2074
    %v2077 = vsel %vm2075, 1, 0
    %v2078 = vsel %vm2076, 1, 0
    %vm2079 = vcmp.eq.s32.totalorder %v2077, 1
    %vm2080 = vcmp.eq.s32.totalorder %v2078, 1
    %v2081 = vsel %vm2079, %v1494, -1e+30
    %v2082 = vsel %vm2080, %v1496, -1e+30
    %v2083 = vsel %vm2079, %v1500, -1e+30
    %v2084 = vsel %vm2080, %v1502, -1e+30
    %v2085 = vsel %vm2079, %v1506, -1e+30
    %v2086 = vsel %vm2080, %v1508, -1e+30
    %v2087 = vsel %vm2079, %v1512, -1e+30
    %v2088 = vsel %vm2080, %v1514, -1e+30
    %v2089 = vsel %vm2079, %v1518, -1e+30
    %v2090 = vsel %vm2080, %v1520, -1e+30
    %v2091 = vsel %vm2079, %v1524, -1e+30
    %v2092 = vsel %vm2080, %v1526, -1e+30
    %v2093 = vsel %vm2079, %v1530, -1e+30
    %v2094 = vsel %vm2080, %v1532, -1e+30
    %v2095 = vsel %vm2079, %v1536, -1e+30
    %v2096 = vsel %vm2080, %v1538, -1e+30
    %v2097 = vmax.f32 %v2081, %v2082
    %2098 = vmax.xlane.f32.xlu0 %v2097
    %v2099 = vpop.xlane.xlu0 %2098
    %v2100 = vmax.f32 %v2083, %v2084
    %2101 = vmax.xlane.f32.xlu0 %v2100
    %v2102 = vpop.xlane.xlu0 %2101
    %v2103 = vmax.f32 %v2085, %v2086
    %2104 = vmax.xlane.f32.xlu0 %v2103
    %v2105 = vpop.xlane.xlu0 %2104
    %v2106 = vmax.f32 %v2087, %v2088
    %2107 = vmax.xlane.f32.xlu0 %v2106
    %v2108 = vpop.xlane.xlu0 %2107
    %v2109 = vmax.f32 %v2089, %v2090
    %2110 = vmax.xlane.f32.xlu0 %v2109
    %v2111 = vpop.xlane.xlu0 %2110
    %v2112 = vmax.f32 %v2091, %v2092
    %2113 = vmax.xlane.f32.xlu0 %v2112
    %v2114 = vpop.xlane.xlu0 %2113
    %v2115 = vmax.f32 %v2093, %v2094
    %2116 = vmax.xlane.f32.xlu0 %v2115
    %v2117 = vpop.xlane.xlu0 %2116
    %v2118 = vmax.f32 %v2095, %v2096
    %2119 = vmax.xlane.f32.xlu0 %v2118
    %v2120 = vpop.xlane.xlu0 %2119
    %v2121 = vsel %vm2079, %v2099, %v2055
    %v2122 = vsel %vm2080, %v2099, %v2056
    %v2123 = vsel %vm2079, %v2102, %v2057
    %v2124 = vsel %vm2080, %v2102, %v2058
    %v2125 = vsel %vm2079, %v2105, %v2059
    %v2126 = vsel %vm2080, %v2105, %v2060
    %v2127 = vsel %vm2079, %v2108, %v2061
    %v2128 = vsel %vm2080, %v2108, %v2062
    %v2129 = vsel %vm2079, %v2111, %v2063
    %v2130 = vsel %vm2080, %v2111, %v2064
    %v2131 = vsel %vm2079, %v2114, %v2065
    %v2132 = vsel %vm2080, %v2114, %v2066
    %v2133 = vsel %vm2079, %v2117, %v2067
    %v2134 = vsel %vm2080, %v2117, %v2068
    %v2135 = vsel %vm2079, %v2120, %v2069
    %v2136 = vsel %vm2080, %v2120, %v2070
    %vm2137 = vcmp.ge.s32.totalorder %v1541, 99
    %vm2138 = vcmp.ge.s32.totalorder %v1542, 99
    %vm2139 = vcmp.lt.s32.totalorder %v1541, 110
    %vm2140 = vcmp.lt.s32.totalorder %v1542, 110
    %vm2141 = vmand %vm2137, %vm2139
    %vm2142 = vmand %vm2138, %vm2140
    %v2143 = vsel %vm2141, 1, 0
    %v2144 = vsel %vm2142, 1, 0
    %vm2145 = vcmp.eq.s32.totalorder %v2143, 1
    %vm2146 = vcmp.eq.s32.totalorder %v2144, 1
    %v2147 = vsel %vm2145, %v1494, -1e+30
    %v2148 = vsel %vm2146, %v1496, -1e+30
    %v2149 = vsel %vm2145, %v1500, -1e+30
    %v2150 = vsel %vm2146, %v1502, -1e+30
    %v2151 = vsel %vm2145, %v1506, -1e+30
    %v2152 = vsel %vm2146, %v1508, -1e+30
    %v2153 = vsel %vm2145, %v1512, -1e+30
    %v2154 = vsel %vm2146, %v1514, -1e+30
    %v2155 = vsel %vm2145, %v1518, -1e+30
    %v2156 = vsel %vm2146, %v1520, -1e+30
    %v2157 = vsel %vm2145, %v1524, -1e+30
    %v2158 = vsel %vm2146, %v1526, -1e+30
    %v2159 = vsel %vm2145, %v1530, -1e+30
    %v2160 = vsel %vm2146, %v1532, -1e+30
    %v2161 = vsel %vm2145, %v1536, -1e+30
    %v2162 = vsel %vm2146, %v1538, -1e+30
    %v2163 = vmax.f32 %v2147, %v2148
    %2164 = vmax.xlane.f32.xlu0 %v2163
    %v2165 = vpop.xlane.xlu0 %2164
    %v2166 = vmax.f32 %v2149, %v2150
    %2167 = vmax.xlane.f32.xlu0 %v2166
    %v2168 = vpop.xlane.xlu0 %2167
    %v2169 = vmax.f32 %v2151, %v2152
    %2170 = vmax.xlane.f32.xlu0 %v2169
    %v2171 = vpop.xlane.xlu0 %2170
    %v2172 = vmax.f32 %v2153, %v2154
    %2173 = vmax.xlane.f32.xlu0 %v2172
    %v2174 = vpop.xlane.xlu0 %2173
    %v2175 = vmax.f32 %v2155, %v2156
    %2176 = vmax.xlane.f32.xlu0 %v2175
    %v2177 = vpop.xlane.xlu0 %2176
    %v2178 = vmax.f32 %v2157, %v2158
    %2179 = vmax.xlane.f32.xlu0 %v2178
    %v2180 = vpop.xlane.xlu0 %2179
    %v2181 = vmax.f32 %v2159, %v2160
    %2182 = vmax.xlane.f32.xlu0 %v2181
    %v2183 = vpop.xlane.xlu0 %2182
    %v2184 = vmax.f32 %v2161, %v2162
    %2185 = vmax.xlane.f32.xlu0 %v2184
    %v2186 = vpop.xlane.xlu0 %2185
    %v2187 = vsel %vm2145, %v2165, %v2121
    %v2188 = vsel %vm2146, %v2165, %v2122
    %v2189 = vsel %vm2145, %v2168, %v2123
    %v2190 = vsel %vm2146, %v2168, %v2124
    %v2191 = vsel %vm2145, %v2171, %v2125
    %v2192 = vsel %vm2146, %v2171, %v2126
    %v2193 = vsel %vm2145, %v2174, %v2127
    %v2194 = vsel %vm2146, %v2174, %v2128
    %v2195 = vsel %vm2145, %v2177, %v2129
    %v2196 = vsel %vm2146, %v2177, %v2130
    %v2197 = vsel %vm2145, %v2180, %v2131
    %v2198 = vsel %vm2146, %v2180, %v2132
    %v2199 = vsel %vm2145, %v2183, %v2133
    %v2200 = vsel %vm2146, %v2183, %v2134
    %v2201 = vsel %vm2145, %v2186, %v2135
    %v2202 = vsel %vm2146, %v2186, %v2136
    %vm2203 = vcmp.ge.s32.totalorder %v1541, 110
    %vm2204 = vcmp.ge.s32.totalorder %v1542, 110
    %vm2205 = vcmp.lt.s32.totalorder %v1541, 121
    %vm2206 = vcmp.lt.s32.totalorder %v1542, 121
    %vm2207 = vmand %vm2203, %vm2205
    %vm2208 = vmand %vm2204, %vm2206
    %v2209 = vsel %vm2207, 1, 0
    %v2210 = vsel %vm2208, 1, 0
    %vm2211 = vcmp.eq.s32.totalorder %v2209, 1
    %vm2212 = vcmp.eq.s32.totalorder %v2210, 1
    %v2213 = vsel %vm2211, %v1494, -1e+30
    %v2214 = vsel %vm2212, %v1496, -1e+30
    %v2215 = vsel %vm2211, %v1500, -1e+30
    %v2216 = vsel %vm2212, %v1502, -1e+30
    %v2217 = vsel %vm2211, %v1506, -1e+30
    %v2218 = vsel %vm2212, %v1508, -1e+30
    %v2219 = vsel %vm2211, %v1512, -1e+30
    %v2220 = vsel %vm2212, %v1514, -1e+30
    %v2221 = vsel %vm2211, %v1518, -1e+30
    %v2222 = vsel %vm2212, %v1520, -1e+30
    %v2223 = vsel %vm2211, %v1524, -1e+30
    %v2224 = vsel %vm2212, %v1526, -1e+30
    %v2225 = vsel %vm2211, %v1530, -1e+30
    %v2226 = vsel %vm2212, %v1532, -1e+30
    %v2227 = vsel %vm2211, %v1536, -1e+30
    %v2228 = vsel %vm2212, %v1538, -1e+30
    %v2229 = vmax.f32 %v2213, %v2214
    %2230 = vmax.xlane.f32.xlu0 %v2229
    %v2231 = vpop.xlane.xlu0 %2230
    %v2232 = vmax.f32 %v2215, %v2216
    %2233 = vmax.xlane.f32.xlu0 %v2232
    %v2234 = vpop.xlane.xlu0 %2233
    %v2235 = vmax.f32 %v2217, %v2218
    %2236 = vmax.xlane.f32.xlu0 %v2235
    %v2237 = vpop.xlane.xlu0 %2236
    %v2238 = vmax.f32 %v2219, %v2220
    %2239 = vmax.xlane.f32.xlu0 %v2238
    %v2240 = vpop.xlane.xlu0 %2239
    %v2241 = vmax.f32 %v2221, %v2222
    %2242 = vmax.xlane.f32.xlu0 %v2241
    %v2243 = vpop.xlane.xlu0 %2242
    %v2244 = vmax.f32 %v2223, %v2224
    %2245 = vmax.xlane.f32.xlu0 %v2244
    %v2246 = vpop.xlane.xlu0 %2245
    %v2247 = vmax.f32 %v2225, %v2226
    %2248 = vmax.xlane.f32.xlu0 %v2247
    %v2249 = vpop.xlane.xlu0 %2248
    %v2250 = vmax.f32 %v2227, %v2228
    %2251 = vmax.xlane.f32.xlu0 %v2250
    %v2252 = vpop.xlane.xlu0 %2251
    %v2253 = vsel %vm2211, %v2231, %v2187
    %v2254 = vsel %vm2212, %v2231, %v2188
    %v2255 = vsel %vm2211, %v2234, %v2189
    %v2256 = vsel %vm2212, %v2234, %v2190
    %v2257 = vsel %vm2211, %v2237, %v2191
    %v2258 = vsel %vm2212, %v2237, %v2192
    %v2259 = vsel %vm2211, %v2240, %v2193
    %v2260 = vsel %vm2212, %v2240, %v2194
    %v2261 = vsel %vm2211, %v2243, %v2195
    %v2262 = vsel %vm2212, %v2243, %v2196
    %v2263 = vsel %vm2211, %v2246, %v2197
    %v2264 = vsel %vm2212, %v2246, %v2198
    %v2265 = vsel %vm2211, %v2249, %v2199
    %v2266 = vsel %vm2212, %v2249, %v2200
    %v2267 = vsel %vm2211, %v2252, %v2201
    %v2268 = vsel %vm2212, %v2252, %v2202
    %vm2269 = vcmp.ge.s32.totalorder %v1541, 121
    %vm2270 = vcmp.ge.s32.totalorder %v1542, 121
    %vm2271 = vcmp.lt.s32.totalorder %v1541, 132
    %vm2272 = vcmp.lt.s32.totalorder %v1542, 132
    %vm2273 = vmand %vm2269, %vm2271
    %vm2274 = vmand %vm2270, %vm2272
    %v2275 = vsel %vm2273, 1, 0
    %v2276 = vsel %vm2274, 1, 0
    %vm2277 = vcmp.eq.s32.totalorder %v2275, 1
    %vm2278 = vcmp.eq.s32.totalorder %v2276, 1
    %v2279 = vsel %vm2277, %v1494, -1e+30
    %v2280 = vsel %vm2278, %v1496, -1e+30
    %v2281 = vsel %vm2277, %v1500, -1e+30
    %v2282 = vsel %vm2278, %v1502, -1e+30
    %v2283 = vsel %vm2277, %v1506, -1e+30
    %v2284 = vsel %vm2278, %v1508, -1e+30
    %v2285 = vsel %vm2277, %v1512, -1e+30
    %v2286 = vsel %vm2278, %v1514, -1e+30
    %v2287 = vsel %vm2277, %v1518, -1e+30
    %v2288 = vsel %vm2278, %v1520, -1e+30
    %v2289 = vsel %vm2277, %v1524, -1e+30
    %v2290 = vsel %vm2278, %v1526, -1e+30
    %v2291 = vsel %vm2277, %v1530, -1e+30
    %v2292 = vsel %vm2278, %v1532, -1e+30
    %v2293 = vsel %vm2277, %v1536, -1e+30
    %v2294 = vsel %vm2278, %v1538, -1e+30
    %v2295 = vmax.f32 %v2279, %v2280
    %2296 = vmax.xlane.f32.xlu0 %v2295
    %v2297 = vpop.xlane.xlu0 %2296
    %v2298 = vmax.f32 %v2281, %v2282
    %2299 = vmax.xlane.f32.xlu0 %v2298
    %v2300 = vpop.xlane.xlu0 %2299
    %v2301 = vmax.f32 %v2283, %v2284
    %2302 = vmax.xlane.f32.xlu0 %v2301
    %v2303 = vpop.xlane.xlu0 %2302
    %v2304 = vmax.f32 %v2285, %v2286
    %2305 = vmax.xlane.f32.xlu0 %v2304
    %v2306 = vpop.xlane.xlu0 %2305
    %v2307 = vmax.f32 %v2287, %v2288
    %2308 = vmax.xlane.f32.xlu0 %v2307
    %v2309 = vpop.xlane.xlu0 %2308
    %v2310 = vmax.f32 %v2289, %v2290
    %2311 = vmax.xlane.f32.xlu0 %v2310
    %v2312 = vpop.xlane.xlu0 %2311
    %v2313 = vmax.f32 %v2291, %v2292
    %2314 = vmax.xlane.f32.xlu0 %v2313
    %v2315 = vpop.xlane.xlu0 %2314
    %v2316 = vmax.f32 %v2293, %v2294
    %2317 = vmax.xlane.f32.xlu0 %v2316
    %v2318 = vpop.xlane.xlu0 %2317
    %v2319 = vsel %vm2277, %v2297, %v2253
    %v2320 = vsel %vm2278, %v2297, %v2254
    %v2321 = vsel %vm2277, %v2300, %v2255
    %v2322 = vsel %vm2278, %v2300, %v2256
    %v2323 = vsel %vm2277, %v2303, %v2257
    %v2324 = vsel %vm2278, %v2303, %v2258
    %v2325 = vsel %vm2277, %v2306, %v2259
    %v2326 = vsel %vm2278, %v2306, %v2260
    %v2327 = vsel %vm2277, %v2309, %v2261
    %v2328 = vsel %vm2278, %v2309, %v2262
    %v2329 = vsel %vm2277, %v2312, %v2263
    %v2330 = vsel %vm2278, %v2312, %v2264
    %v2331 = vsel %vm2277, %v2315, %v2265
    %v2332 = vsel %vm2278, %v2315, %v2266
    %v2333 = vsel %vm2277, %v2318, %v2267
    %v2334 = vsel %vm2278, %v2318, %v2268
    %vm2335 = vcmp.ge.s32.totalorder %v1541, 132
    %vm2336 = vcmp.ge.s32.totalorder %v1542, 132
    %vm2337 = vcmp.lt.s32.totalorder %v1541, 143
    %vm2338 = vcmp.lt.s32.totalorder %v1542, 143
    %vm2339 = vmand %vm2335, %vm2337
    %vm2340 = vmand %vm2336, %vm2338
    %v2341 = vsel %vm2339, 1, 0
    %v2342 = vsel %vm2340, 1, 0
    %vm2343 = vcmp.eq.s32.totalorder %v2341, 1
    %vm2344 = vcmp.eq.s32.totalorder %v2342, 1
    %v2345 = vsel %vm2343, %v1494, -1e+30
    %v2346 = vsel %vm2344, %v1496, -1e+30
    %v2347 = vsel %vm2343, %v1500, -1e+30
    %v2348 = vsel %vm2344, %v1502, -1e+30
    %v2349 = vsel %vm2343, %v1506, -1e+30
    %v2350 = vsel %vm2344, %v1508, -1e+30
    %v2351 = vsel %vm2343, %v1512, -1e+30
    %v2352 = vsel %vm2344, %v1514, -1e+30
    %v2353 = vsel %vm2343, %v1518, -1e+30
    %v2354 = vsel %vm2344, %v1520, -1e+30
    %v2355 = vsel %vm2343, %v1524, -1e+30
    %v2356 = vsel %vm2344, %v1526, -1e+30
    %v2357 = vsel %vm2343, %v1530, -1e+30
    %v2358 = vsel %vm2344, %v1532, -1e+30
    %v2359 = vsel %vm2343, %v1536, -1e+30
    %v2360 = vsel %vm2344, %v1538, -1e+30
    %v2361 = vmax.f32 %v2345, %v2346
    %2362 = vmax.xlane.f32.xlu0 %v2361
    %v2363 = vpop.xlane.xlu0 %2362
    %v2364 = vmax.f32 %v2347, %v2348
    %2365 = vmax.xlane.f32.xlu0 %v2364
    %v2366 = vpop.xlane.xlu0 %2365
    %v2367 = vmax.f32 %v2349, %v2350
    %2368 = vmax.xlane.f32.xlu0 %v2367
    %v2369 = vpop.xlane.xlu0 %2368
    %v2370 = vmax.f32 %v2351, %v2352
    %2371 = vmax.xlane.f32.xlu0 %v2370
    %v2372 = vpop.xlane.xlu0 %2371
    %v2373 = vmax.f32 %v2353, %v2354
    %2374 = vmax.xlane.f32.xlu0 %v2373
    %v2375 = vpop.xlane.xlu0 %2374
    %v2376 = vmax.f32 %v2355, %v2356
    %2377 = vmax.xlane.f32.xlu0 %v2376
    %v2378 = vpop.xlane.xlu0 %2377
    %v2379 = vmax.f32 %v2357, %v2358
    %2380 = vmax.xlane.f32.xlu0 %v2379
    %v2381 = vpop.xlane.xlu0 %2380
    %v2382 = vmax.f32 %v2359, %v2360
    %2383 = vmax.xlane.f32.xlu0 %v2382
    %v2384 = vpop.xlane.xlu0 %2383
    %v2385 = vsel %vm2343, %v2363, %v2319
    %v2386 = vsel %vm2344, %v2363, %v2320
    %v2387 = vsel %vm2343, %v2366, %v2321
    %v2388 = vsel %vm2344, %v2366, %v2322
    %v2389 = vsel %vm2343, %v2369, %v2323
    %v2390 = vsel %vm2344, %v2369, %v2324
    %v2391 = vsel %vm2343, %v2372, %v2325
    %v2392 = vsel %vm2344, %v2372, %v2326
    %v2393 = vsel %vm2343, %v2375, %v2327
    %v2394 = vsel %vm2344, %v2375, %v2328
    %v2395 = vsel %vm2343, %v2378, %v2329
    %v2396 = vsel %vm2344, %v2378, %v2330
    %v2397 = vsel %vm2343, %v2381, %v2331
    %v2398 = vsel %vm2344, %v2381, %v2332
    %v2399 = vsel %vm2343, %v2384, %v2333
    %v2400 = vsel %vm2344, %v2384, %v2334
    %vm2401 = vcmp.ge.s32.totalorder %v1541, 143
    %vm2402 = vcmp.ge.s32.totalorder %v1542, 143
    %vm2403 = vcmp.lt.s32.totalorder %v1541, 154
    %vm2404 = vcmp.lt.s32.totalorder %v1542, 154
    %vm2405 = vmand %vm2401, %vm2403
    %vm2406 = vmand %vm2402, %vm2404
    %v2407 = vsel %vm2405, 1, 0
    %v2408 = vsel %vm2406, 1, 0
    %vm2409 = vcmp.eq.s32.totalorder %v2407, 1
    %vm2410 = vcmp.eq.s32.totalorder %v2408, 1
    %v2411 = vsel %vm2409, %v1494, -1e+30
    %v2412 = vsel %vm2410, %v1496, -1e+30
    %v2413 = vsel %vm2409, %v1500, -1e+30
    %v2414 = vsel %vm2410, %v1502, -1e+30
    %v2415 = vsel %vm2409, %v1506, -1e+30
    %v2416 = vsel %vm2410, %v1508, -1e+30
    %v2417 = vsel %vm2409, %v1512, -1e+30
    %v2418 = vsel %vm2410, %v1514, -1e+30
    %v2419 = vsel %vm2409, %v1518, -1e+30
    %v2420 = vsel %vm2410, %v1520, -1e+30
    %v2421 = vsel %vm2409, %v1524, -1e+30
    %v2422 = vsel %vm2410, %v1526, -1e+30
    %v2423 = vsel %vm2409, %v1530, -1e+30
    %v2424 = vsel %vm2410, %v1532, -1e+30
    %v2425 = vsel %vm2409, %v1536, -1e+30
    %v2426 = vsel %vm2410, %v1538, -1e+30
    %v2427 = vmax.f32 %v2411, %v2412
    %2428 = vmax.xlane.f32.xlu0 %v2427
    %v2429 = vpop.xlane.xlu0 %2428
    %v2430 = vmax.f32 %v2413, %v2414
    %2431 = vmax.xlane.f32.xlu0 %v2430
    %v2432 = vpop.xlane.xlu0 %2431
    %v2433 = vmax.f32 %v2415, %v2416
    %2434 = vmax.xlane.f32.xlu0 %v2433
    %v2435 = vpop.xlane.xlu0 %2434
    %v2436 = vmax.f32 %v2417, %v2418
    %2437 = vmax.xlane.f32.xlu0 %v2436
    %v2438 = vpop.xlane.xlu0 %2437
    %v2439 = vmax.f32 %v2419, %v2420
    %2440 = vmax.xlane.f32.xlu0 %v2439
    %v2441 = vpop.xlane.xlu0 %2440
    %v2442 = vmax.f32 %v2421, %v2422
    %2443 = vmax.xlane.f32.xlu0 %v2442
    %v2444 = vpop.xlane.xlu0 %2443
    %v2445 = vmax.f32 %v2423, %v2424
    %2446 = vmax.xlane.f32.xlu0 %v2445
    %v2447 = vpop.xlane.xlu0 %2446
    %v2448 = vmax.f32 %v2425, %v2426
    %2449 = vmax.xlane.f32.xlu0 %v2448
    %v2450 = vpop.xlane.xlu0 %2449
    %v2451 = vsel %vm2409, %v2429, %v2385
    %v2452 = vsel %vm2410, %v2429, %v2386
    %v2453 = vsel %vm2409, %v2432, %v2387
    %v2454 = vsel %vm2410, %v2432, %v2388
    %v2455 = vsel %vm2409, %v2435, %v2389
    %v2456 = vsel %vm2410, %v2435, %v2390
    %v2457 = vsel %vm2409, %v2438, %v2391
    %v2458 = vsel %vm2410, %v2438, %v2392
    %v2459 = vsel %vm2409, %v2441, %v2393
    %v2460 = vsel %vm2410, %v2441, %v2394
    %v2461 = vsel %vm2409, %v2444, %v2395
    %v2462 = vsel %vm2410, %v2444, %v2396
    %v2463 = vsel %vm2409, %v2447, %v2397
    %v2464 = vsel %vm2410, %v2447, %v2398
    %v2465 = vsel %vm2409, %v2450, %v2399
    %v2466 = vsel %vm2410, %v2450, %v2400
    %vm2467 = vcmp.ge.s32.totalorder %v1541, 154
    %vm2468 = vcmp.ge.s32.totalorder %v1542, 154
    %vm2469 = vcmp.lt.s32.totalorder %v1541, 165
    %vm2470 = vcmp.lt.s32.totalorder %v1542, 165
    %vm2471 = vmand %vm2467, %vm2469
    %vm2472 = vmand %vm2468, %vm2470
    %v2473 = vsel %vm2471, 1, 0
    %v2474 = vsel %vm2472, 1, 0
    %vm2475 = vcmp.eq.s32.totalorder %v2473, 1
    %vm2476 = vcmp.eq.s32.totalorder %v2474, 1
    %v2477 = vsel %vm2475, %v1494, -1e+30
    %v2478 = vsel %vm2476, %v1496, -1e+30
    %v2479 = vsel %vm2475, %v1500, -1e+30
    %v2480 = vsel %vm2476, %v1502, -1e+30
    %v2481 = vsel %vm2475, %v1506, -1e+30
    %v2482 = vsel %vm2476, %v1508, -1e+30
    %v2483 = vsel %vm2475, %v1512, -1e+30
    %v2484 = vsel %vm2476, %v1514, -1e+30
    %v2485 = vsel %vm2475, %v1518, -1e+30
    %v2486 = vsel %vm2476, %v1520, -1e+30
    %v2487 = vsel %vm2475, %v1524, -1e+30
    %v2488 = vsel %vm2476, %v1526, -1e+30
    %v2489 = vsel %vm2475, %v1530, -1e+30
    %v2490 = vsel %vm2476, %v1532, -1e+30
    %v2491 = vsel %vm2475, %v1536, -1e+30
    %v2492 = vsel %vm2476, %v1538, -1e+30
    %v2493 = vmax.f32 %v2477, %v2478
    %2494 = vmax.xlane.f32.xlu0 %v2493
    %v2495 = vpop.xlane.xlu0 %2494
    %v2496 = vmax.f32 %v2479, %v2480
    %2497 = vmax.xlane.f32.xlu0 %v2496
    %v2498 = vpop.xlane.xlu0 %2497
    %v2499 = vmax.f32 %v2481, %v2482
    %2500 = vmax.xlane.f32.xlu0 %v2499
    %v2501 = vpop.xlane.xlu0 %2500
    %v2502 = vmax.f32 %v2483, %v2484
    %2503 = vmax.xlane.f32.xlu0 %v2502
    %v2504 = vpop.xlane.xlu0 %2503
    %v2505 = vmax.f32 %v2485, %v2486
    %2506 = vmax.xlane.f32.xlu0 %v2505
    %v2507 = vpop.xlane.xlu0 %2506
    %v2508 = vmax.f32 %v2487, %v2488
    %2509 = vmax.xlane.f32.xlu0 %v2508
    %v2510 = vpop.xlane.xlu0 %2509
    %v2511 = vmax.f32 %v2489, %v2490
    %2512 = vmax.xlane.f32.xlu0 %v2511
    %v2513 = vpop.xlane.xlu0 %2512
    %v2514 = vmax.f32 %v2491, %v2492
    %2515 = vmax.xlane.f32.xlu0 %v2514
    %v2516 = vpop.xlane.xlu0 %2515
    %v2517 = vsel %vm2475, %v2495, %v2451
    %v2518 = vsel %vm2476, %v2495, %v2452
    %v2519 = vsel %vm2475, %v2498, %v2453
    %v2520 = vsel %vm2476, %v2498, %v2454
    %v2521 = vsel %vm2475, %v2501, %v2455
    %v2522 = vsel %vm2476, %v2501, %v2456
    %v2523 = vsel %vm2475, %v2504, %v2457
    %v2524 = vsel %vm2476, %v2504, %v2458
    %v2525 = vsel %vm2475, %v2507, %v2459
    %v2526 = vsel %vm2476, %v2507, %v2460
    %v2527 = vsel %vm2475, %v2510, %v2461
    %v2528 = vsel %vm2476, %v2510, %v2462
    %v2529 = vsel %vm2475, %v2513, %v2463
    %v2530 = vsel %vm2476, %v2513, %v2464
    %v2531 = vsel %vm2475, %v2516, %v2465
    %v2532 = vsel %vm2476, %v2516, %v2466
    %vm2533 = vcmp.ge.s32.totalorder %v1541, 165
    %vm2534 = vcmp.ge.s32.totalorder %v1542, 165
    %vm2535 = vcmp.lt.s32.totalorder %v1541, 176
    %vm2536 = vcmp.lt.s32.totalorder %v1542, 176
    %vm2537 = vmand %vm2533, %vm2535
    %vm2538 = vmand %vm2534, %vm2536
    %v2539 = vsel %vm2537, 1, 0
    %v2540 = vsel %vm2538, 1, 0
    %vm2541 = vcmp.eq.s32.totalorder %v2539, 1
    %vm2542 = vcmp.eq.s32.totalorder %v2540, 1
    %v2543 = vsel %vm2541, %v1494, -1e+30
    %v2544 = vsel %vm2542, %v1496, -1e+30
    %v2545 = vsel %vm2541, %v1500, -1e+30
    %v2546 = vsel %vm2542, %v1502, -1e+30
    %v2547 = vsel %vm2541, %v1506, -1e+30
    %v2548 = vsel %vm2542, %v1508, -1e+30
    %v2549 = vsel %vm2541, %v1512, -1e+30
    %v2550 = vsel %vm2542, %v1514, -1e+30
    %v2551 = vsel %vm2541, %v1518, -1e+30
    %v2552 = vsel %vm2542, %v1520, -1e+30
    %v2553 = vsel %vm2541, %v1524, -1e+30
    %v2554 = vsel %vm2542, %v1526, -1e+30
    %v2555 = vsel %vm2541, %v1530, -1e+30
    %v2556 = vsel %vm2542, %v1532, -1e+30
    %v2557 = vsel %vm2541, %v1536, -1e+30
    %v2558 = vsel %vm2542, %v1538, -1e+30
    %v2559 = vmax.f32 %v2543, %v2544
    %2560 = vmax.xlane.f32.xlu0 %v2559
    %v2561 = vpop.xlane.xlu0 %2560
    %v2562 = vmax.f32 %v2545, %v2546
    %2563 = vmax.xlane.f32.xlu0 %v2562
    %v2564 = vpop.xlane.xlu0 %2563
    %v2565 = vmax.f32 %v2547, %v2548
    %2566 = vmax.xlane.f32.xlu0 %v2565
    %v2567 = vpop.xlane.xlu0 %2566
    %v2568 = vmax.f32 %v2549, %v2550
    %2569 = vmax.xlane.f32.xlu0 %v2568
    %v2570 = vpop.xlane.xlu0 %2569
    %v2571 = vmax.f32 %v2551, %v2552
    %2572 = vmax.xlane.f32.xlu0 %v2571
    %v2573 = vpop.xlane.xlu0 %2572
    %v2574 = vmax.f32 %v2553, %v2554
    %2575 = vmax.xlane.f32.xlu0 %v2574
    %v2576 = vpop.xlane.xlu0 %2575
    %v2577 = vmax.f32 %v2555, %v2556
    %2578 = vmax.xlane.f32.xlu0 %v2577
    %v2579 = vpop.xlane.xlu0 %2578
    %v2580 = vmax.f32 %v2557, %v2558
    %2581 = vmax.xlane.f32.xlu0 %v2580
    %v2582 = vpop.xlane.xlu0 %2581
    %v2583 = vsel %vm2541, %v2561, %v2517
    %v2584 = vsel %vm2542, %v2561, %v2518
    %v2585 = vsel %vm2541, %v2564, %v2519
    %v2586 = vsel %vm2542, %v2564, %v2520
    %v2587 = vsel %vm2541, %v2567, %v2521
    %v2588 = vsel %vm2542, %v2567, %v2522
    %v2589 = vsel %vm2541, %v2570, %v2523
    %v2590 = vsel %vm2542, %v2570, %v2524
    %v2591 = vsel %vm2541, %v2573, %v2525
    %v2592 = vsel %vm2542, %v2573, %v2526
    %v2593 = vsel %vm2541, %v2576, %v2527
    %v2594 = vsel %vm2542, %v2576, %v2528
    %v2595 = vsel %vm2541, %v2579, %v2529
    %v2596 = vsel %vm2542, %v2579, %v2530
    %v2597 = vsel %vm2541, %v2582, %v2531
    %v2598 = vsel %vm2542, %v2582, %v2532
    %vm2599 = vcmp.ge.s32.totalorder %v1541, 176
    %vm2600 = vcmp.ge.s32.totalorder %v1542, 176
    %vm2601 = vcmp.lt.s32.totalorder %v1541, 187
    %vm2602 = vcmp.lt.s32.totalorder %v1542, 187
    %vm2603 = vmand %vm2599, %vm2601
    %vm2604 = vmand %vm2600, %vm2602
    %v2605 = vsel %vm2603, 1, 0
    %v2606 = vsel %vm2604, 1, 0
    %vm2607 = vcmp.eq.s32.totalorder %v2605, 1
    %vm2608 = vcmp.eq.s32.totalorder %v2606, 1
    %v2609 = vsel %vm2607, %v1494, -1e+30
    %v2610 = vsel %vm2608, %v1496, -1e+30
    %v2611 = vsel %vm2607, %v1500, -1e+30
    %v2612 = vsel %vm2608, %v1502, -1e+30
    %v2613 = vsel %vm2607, %v1506, -1e+30
    %v2614 = vsel %vm2608, %v1508, -1e+30
    %v2615 = vsel %vm2607, %v1512, -1e+30
    %v2616 = vsel %vm2608, %v1514, -1e+30
    %v2617 = vsel %vm2607, %v1518, -1e+30
    %v2618 = vsel %vm2608, %v1520, -1e+30
    %v2619 = vsel %vm2607, %v1524, -1e+30
    %v2620 = vsel %vm2608, %v1526, -1e+30
    %v2621 = vsel %vm2607, %v1530, -1e+30
    %v2622 = vsel %vm2608, %v1532, -1e+30
    %v2623 = vsel %vm2607, %v1536, -1e+30
    %v2624 = vsel %vm2608, %v1538, -1e+30
    %v2625 = vmax.f32 %v2609, %v2610
    %2626 = vmax.xlane.f32.xlu0 %v2625
    %v2627 = vpop.xlane.xlu0 %2626
    %v2628 = vmax.f32 %v2611, %v2612
    %2629 = vmax.xlane.f32.xlu0 %v2628
    %v2630 = vpop.xlane.xlu0 %2629
    %v2631 = vmax.f32 %v2613, %v2614
    %2632 = vmax.xlane.f32.xlu0 %v2631
    %v2633 = vpop.xlane.xlu0 %2632
    %v2634 = vmax.f32 %v2615, %v2616
    %2635 = vmax.xlane.f32.xlu0 %v2634
    %v2636 = vpop.xlane.xlu0 %2635
    %v2637 = vmax.f32 %v2617, %v2618
    %2638 = vmax.xlane.f32.xlu0 %v2637
    %v2639 = vpop.xlane.xlu0 %2638
    %v2640 = vmax.f32 %v2619, %v2620
    %2641 = vmax.xlane.f32.xlu0 %v2640
    %v2642 = vpop.xlane.xlu0 %2641
    %v2643 = vmax.f32 %v2621, %v2622
    %2644 = vmax.xlane.f32.xlu0 %v2643
    %v2645 = vpop.xlane.xlu0 %2644
    %v2646 = vmax.f32 %v2623, %v2624
    %2647 = vmax.xlane.f32.xlu0 %v2646
    %v2648 = vpop.xlane.xlu0 %2647
    %v2649 = vsel %vm2607, %v2627, %v2583
    %v2650 = vsel %vm2608, %v2627, %v2584
    %v2651 = vsel %vm2607, %v2630, %v2585
    %v2652 = vsel %vm2608, %v2630, %v2586
    %v2653 = vsel %vm2607, %v2633, %v2587
    %v2654 = vsel %vm2608, %v2633, %v2588
    %v2655 = vsel %vm2607, %v2636, %v2589
    %v2656 = vsel %vm2608, %v2636, %v2590
    %v2657 = vsel %vm2607, %v2639, %v2591
    %v2658 = vsel %vm2608, %v2639, %v2592
    %v2659 = vsel %vm2607, %v2642, %v2593
    %v2660 = vsel %vm2608, %v2642, %v2594
    %v2661 = vsel %vm2607, %v2645, %v2595
    %v2662 = vsel %vm2608, %v2645, %v2596
    %v2663 = vsel %vm2607, %v2648, %v2597
    %v2664 = vsel %vm2608, %v2648, %v2598
    %vm2665 = vcmp.ge.s32.totalorder %v1541, 187
    %vm2666 = vcmp.ge.s32.totalorder %v1542, 187
    %vm2667 = vcmp.lt.s32.totalorder %v1541, 198
    %vm2668 = vcmp.lt.s32.totalorder %v1542, 198
    %vm2669 = vmand %vm2665, %vm2667
    %vm2670 = vmand %vm2666, %vm2668
    %v2671 = vsel %vm2669, 1, 0
    %v2672 = vsel %vm2670, 1, 0
    %vm2673 = vcmp.eq.s32.totalorder %v2671, 1
    %vm2674 = vcmp.eq.s32.totalorder %v2672, 1
    %v2675 = vsel %vm2673, %v1494, -1e+30
    %v2676 = vsel %vm2674, %v1496, -1e+30
    %v2677 = vsel %vm2673, %v1500, -1e+30
    %v2678 = vsel %vm2674, %v1502, -1e+30
    %v2679 = vsel %vm2673, %v1506, -1e+30
    %v2680 = vsel %vm2674, %v1508, -1e+30
    %v2681 = vsel %vm2673, %v1512, -1e+30
    %v2682 = vsel %vm2674, %v1514, -1e+30
    %v2683 = vsel %vm2673, %v1518, -1e+30
    %v2684 = vsel %vm2674, %v1520, -1e+30
    %v2685 = vsel %vm2673, %v1524, -1e+30
    %v2686 = vsel %vm2674, %v1526, -1e+30
    %v2687 = vsel %vm2673, %v1530, -1e+30
    %v2688 = vsel %vm2674, %v1532, -1e+30
    %v2689 = vsel %vm2673, %v1536, -1e+30
    %v2690 = vsel %vm2674, %v1538, -1e+30
    %v2691 = vmax.f32 %v2675, %v2676
    %2692 = vmax.xlane.f32.xlu0 %v2691
    %v2693 = vpop.xlane.xlu0 %2692
    %v2694 = vmax.f32 %v2677, %v2678
    %2695 = vmax.xlane.f32.xlu0 %v2694
    %v2696 = vpop.xlane.xlu0 %2695
    %v2697 = vmax.f32 %v2679, %v2680
    %2698 = vmax.xlane.f32.xlu0 %v2697
    %v2699 = vpop.xlane.xlu0 %2698
    %v2700 = vmax.f32 %v2681, %v2682
    %2701 = vmax.xlane.f32.xlu0 %v2700
    %v2702 = vpop.xlane.xlu0 %2701
    %v2703 = vmax.f32 %v2683, %v2684
    %2704 = vmax.xlane.f32.xlu0 %v2703
    %v2705 = vpop.xlane.xlu0 %2704
    %v2706 = vmax.f32 %v2685, %v2686
    %2707 = vmax.xlane.f32.xlu0 %v2706
    %v2708 = vpop.xlane.xlu0 %2707
    %v2709 = vmax.f32 %v2687, %v2688
    %2710 = vmax.xlane.f32.xlu0 %v2709
    %v2711 = vpop.xlane.xlu0 %2710
    %v2712 = vmax.f32 %v2689, %v2690
    %2713 = vmax.xlane.f32.xlu0 %v2712
    %v2714 = vpop.xlane.xlu0 %2713
    %v2715 = vsel %vm2673, %v2693, %v2649
    %v2716 = vsel %vm2674, %v2693, %v2650
    %v2717 = vsel %vm2673, %v2696, %v2651
    %v2718 = vsel %vm2674, %v2696, %v2652
    %v2719 = vsel %vm2673, %v2699, %v2653
    %v2720 = vsel %vm2674, %v2699, %v2654
    %v2721 = vsel %vm2673, %v2702, %v2655
    %v2722 = vsel %vm2674, %v2702, %v2656
    %v2723 = vsel %vm2673, %v2705, %v2657
    %v2724 = vsel %vm2674, %v2705, %v2658
    %v2725 = vsel %vm2673, %v2708, %v2659
    %v2726 = vsel %vm2674, %v2708, %v2660
    %v2727 = vsel %vm2673, %v2711, %v2661
    %v2728 = vsel %vm2674, %v2711, %v2662
    %v2729 = vsel %vm2673, %v2714, %v2663
    %v2730 = vsel %vm2674, %v2714, %v2664
    %vm2731 = vcmp.ge.s32.totalorder %v1541, 198
    %vm2732 = vcmp.ge.s32.totalorder %v1542, 198
    %vm2733 = vcmp.lt.s32.totalorder %v1541, 209
    %vm2734 = vcmp.lt.s32.totalorder %v1542, 209
    %vm2735 = vmand %vm2731, %vm2733
    %vm2736 = vmand %vm2732, %vm2734
    %v2737 = vsel %vm2735, 1, 0
    %v2738 = vsel %vm2736, 1, 0
    %vm2739 = vcmp.eq.s32.totalorder %v2737, 1
    %vm2740 = vcmp.eq.s32.totalorder %v2738, 1
    %v2741 = vsel %vm2739, %v1494, -1e+30
    %v2742 = vsel %vm2740, %v1496, -1e+30
    %v2743 = vsel %vm2739, %v1500, -1e+30
    %v2744 = vsel %vm2740, %v1502, -1e+30
    %v2745 = vsel %vm2739, %v1506, -1e+30
    %v2746 = vsel %vm2740, %v1508, -1e+30
    %v2747 = vsel %vm2739, %v1512, -1e+30
    %v2748 = vsel %vm2740, %v1514, -1e+30
    %v2749 = vsel %vm2739, %v1518, -1e+30
    %v2750 = vsel %vm2740, %v1520, -1e+30
    %v2751 = vsel %vm2739, %v1524, -1e+30
    %v2752 = vsel %vm2740, %v1526, -1e+30
    %v2753 = vsel %vm2739, %v1530, -1e+30
    %v2754 = vsel %vm2740, %v1532, -1e+30
    %v2755 = vsel %vm2739, %v1536, -1e+30
    %v2756 = vsel %vm2740, %v1538, -1e+30
    %v2757 = vmax.f32 %v2741, %v2742
    %2758 = vmax.xlane.f32.xlu0 %v2757
    %v2759 = vpop.xlane.xlu0 %2758
    %v2760 = vmax.f32 %v2743, %v2744
    %2761 = vmax.xlane.f32.xlu0 %v2760
    %v2762 = vpop.xlane.xlu0 %2761
    %v2763 = vmax.f32 %v2745, %v2746
    %2764 = vmax.xlane.f32.xlu0 %v2763
    %v2765 = vpop.xlane.xlu0 %2764
    %v2766 = vmax.f32 %v2747, %v2748
    %2767 = vmax.xlane.f32.xlu0 %v2766
    %v2768 = vpop.xlane.xlu0 %2767
    %v2769 = vmax.f32 %v2749, %v2750
    %2770 = vmax.xlane.f32.xlu0 %v2769
    %v2771 = vpop.xlane.xlu0 %2770
    %v2772 = vmax.f32 %v2751, %v2752
    %2773 = vmax.xlane.f32.xlu0 %v2772
    %v2774 = vpop.xlane.xlu0 %2773
    %v2775 = vmax.f32 %v2753, %v2754
    %2776 = vmax.xlane.f32.xlu0 %v2775
    %v2777 = vpop.xlane.xlu0 %2776
    %v2778 = vmax.f32 %v2755, %v2756
    %2779 = vmax.xlane.f32.xlu0 %v2778
    %v2780 = vpop.xlane.xlu0 %2779
    %v2781 = vsel %vm2739, %v2759, %v2715
    %v2782 = vsel %vm2740, %v2759, %v2716
    %v2783 = vsel %vm2739, %v2762, %v2717
    %v2784 = vsel %vm2740, %v2762, %v2718
    %v2785 = vsel %vm2739, %v2765, %v2719
    %v2786 = vsel %vm2740, %v2765, %v2720
    %v2787 = vsel %vm2739, %v2768, %v2721
    %v2788 = vsel %vm2740, %v2768, %v2722
    %v2789 = vsel %vm2739, %v2771, %v2723
    %v2790 = vsel %vm2740, %v2771, %v2724
    %v2791 = vsel %vm2739, %v2774, %v2725
    %v2792 = vsel %vm2740, %v2774, %v2726
    %v2793 = vsel %vm2739, %v2777, %v2727
    %v2794 = vsel %vm2740, %v2777, %v2728
    %v2795 = vsel %vm2739, %v2780, %v2729
    %v2796 = vsel %vm2740, %v2780, %v2730
    %vm2797 = vcmp.ge.s32.totalorder %v1541, 209
    %vm2798 = vcmp.ge.s32.totalorder %v1542, 209
    %vm2799 = vcmp.lt.s32.totalorder %v1541, 220
    %vm2800 = vcmp.lt.s32.totalorder %v1542, 220
    %vm2801 = vmand %vm2797, %vm2799
    %vm2802 = vmand %vm2798, %vm2800
    %v2803 = vsel %vm2801, 1, 0
    %v2804 = vsel %vm2802, 1, 0
    %vm2805 = vcmp.eq.s32.totalorder %v2803, 1
    %vm2806 = vcmp.eq.s32.totalorder %v2804, 1
    %v2807 = vsel %vm2805, %v1494, -1e+30
    %v2808 = vsel %vm2806, %v1496, -1e+30
    %v2809 = vsel %vm2805, %v1500, -1e+30
    %v2810 = vsel %vm2806, %v1502, -1e+30
    %v2811 = vsel %vm2805, %v1506, -1e+30
    %v2812 = vsel %vm2806, %v1508, -1e+30
    %v2813 = vsel %vm2805, %v1512, -1e+30
    %v2814 = vsel %vm2806, %v1514, -1e+30
    %v2815 = vsel %vm2805, %v1518, -1e+30
    %v2816 = vsel %vm2806, %v1520, -1e+30
    %v2817 = vsel %vm2805, %v1524, -1e+30
    %v2818 = vsel %vm2806, %v1526, -1e+30
    %v2819 = vsel %vm2805, %v1530, -1e+30
    %v2820 = vsel %vm2806, %v1532, -1e+30
    %v2821 = vsel %vm2805, %v1536, -1e+30
    %v2822 = vsel %vm2806, %v1538, -1e+30
    %v2823 = vmax.f32 %v2807, %v2808
    %2824 = vmax.xlane.f32.xlu0 %v2823
    %v2825 = vpop.xlane.xlu0 %2824
    %v2826 = vmax.f32 %v2809, %v2810
    %2827 = vmax.xlane.f32.xlu0 %v2826
    %v2828 = vpop.xlane.xlu0 %2827
    %v2829 = vmax.f32 %v2811, %v2812
    %2830 = vmax.xlane.f32.xlu0 %v2829
    %v2831 = vpop.xlane.xlu0 %2830
    %v2832 = vmax.f32 %v2813, %v2814
    %2833 = vmax.xlane.f32.xlu0 %v2832
    %v2834 = vpop.xlane.xlu0 %2833
    %v2835 = vmax.f32 %v2815, %v2816
    %2836 = vmax.xlane.f32.xlu0 %v2835
    %v2837 = vpop.xlane.xlu0 %2836
    %v2838 = vmax.f32 %v2817, %v2818
    %2839 = vmax.xlane.f32.xlu0 %v2838
    %v2840 = vpop.xlane.xlu0 %2839
    %v2841 = vmax.f32 %v2819, %v2820
    %2842 = vmax.xlane.f32.xlu0 %v2841
    %v2843 = vpop.xlane.xlu0 %2842
    %v2844 = vmax.f32 %v2821, %v2822
    %2845 = vmax.xlane.f32.xlu0 %v2844
    %v2846 = vpop.xlane.xlu0 %2845
    %v2847 = vsel %vm2805, %v2825, %v2781
    %v2848 = vsel %vm2806, %v2825, %v2782
    %v2849 = vsel %vm2805, %v2828, %v2783
    %v2850 = vsel %vm2806, %v2828, %v2784
    %v2851 = vsel %vm2805, %v2831, %v2785
    %v2852 = vsel %vm2806, %v2831, %v2786
    %v2853 = vsel %vm2805, %v2834, %v2787
    %v2854 = vsel %vm2806, %v2834, %v2788
    %v2855 = vsel %vm2805, %v2837, %v2789
    %v2856 = vsel %vm2806, %v2837, %v2790
    %v2857 = vsel %vm2805, %v2840, %v2791
    %v2858 = vsel %vm2806, %v2840, %v2792
    %v2859 = vsel %vm2805, %v2843, %v2793
    %v2860 = vsel %vm2806, %v2843, %v2794
    %v2861 = vsel %vm2805, %v2846, %v2795
    %v2862 = vsel %vm2806, %v2846, %v2796
    %v2863 = vsub.f32 %v1494, %v2847
    %v2864 = vsub.f32 %v1496, %v2848
    %v2865 = vsub.f32 %v1500, %v2849
    %v2866 = vsub.f32 %v1502, %v2850
    %v2867 = vsub.f32 %v1506, %v2851
    %v2868 = vsub.f32 %v1508, %v2852
    %v2869 = vsub.f32 %v1512, %v2853
    %v2870 = vsub.f32 %v1514, %v2854
    %v2871 = vsub.f32 %v1518, %v2855
    %v2872 = vsub.f32 %v1520, %v2856
    %v2873 = vsub.f32 %v1524, %v2857
    %v2874 = vsub.f32 %v1526, %v2858
    %v2875 = vsub.f32 %v1530, %v2859
    %v2876 = vsub.f32 %v1532, %v2860
    %v2877 = vsub.f32 %v1536, %v2861
    %v2878 = vsub.f32 %v1538, %v2862
    %v2879 = vmul.f32 %v2863, 1.442695
    %v2880 = vpow.pop %v2879
    %v2881 = vmul.f32 %v2864, 1.442695
    %v2882 = vpow.pop %v2881
    %v2883 = vmul.f32 %v2865, 1.442695
    %v2884 = vpow.pop %v2883
    %v2885 = vmul.f32 %v2866, 1.442695
    %v2886 = vpow.pop %v2885
    %v2887 = vmul.f32 %v2867, 1.442695
    %v2888 = vpow.pop %v2887
    %v2889 = vmul.f32 %v2868, 1.442695
    %v2890 = vpow.pop %v2889
    %v2891 = vmul.f32 %v2869, 1.442695
    %v2892 = vpow.pop %v2891
    %v2893 = vmul.f32 %v2870, 1.442695
    %v2894 = vpow.pop %v2893
    %v2895 = vmul.f32 %v2871, 1.442695
    %v2896 = vpow.pop %v2895
    %v2897 = vmul.f32 %v2872, 1.442695
    %v2898 = vpow.pop %v2897
    %v2899 = vmul.f32 %v2873, 1.442695
    %v2900 = vpow.pop %v2899
    %v2901 = vmul.f32 %v2874, 1.442695
    %v2902 = vpow.pop %v2901
    %v2903 = vmul.f32 %v2875, 1.442695
    %v2904 = vpow.pop %v2903
    %v2905 = vmul.f32 %v2876, 1.442695
    %v2906 = vpow.pop %v2905
    %v2907 = vmul.f32 %v2877, 1.442695
    %v2908 = vpow.pop %v2907
    %v2909 = vmul.f32 %v2878, 1.442695
    %v2910 = vpow.pop %v2909
    %v2911 = vsel %vm1551, %v2880, 0.0
    %v2912 = vsel %vm1552, %v2882, 0.0
    %v2913 = vsel %vm1551, %v2884, 0.0
    %v2914 = vsel %vm1552, %v2886, 0.0
    %v2915 = vsel %vm1551, %v2888, 0.0
    %v2916 = vsel %vm1552, %v2890, 0.0
    %v2917 = vsel %vm1551, %v2892, 0.0
    %v2918 = vsel %vm1552, %v2894, 0.0
    %v2919 = vsel %vm1551, %v2896, 0.0
    %v2920 = vsel %vm1552, %v2898, 0.0
    %v2921 = vsel %vm1551, %v2900, 0.0
    %v2922 = vsel %vm1552, %v2902, 0.0
    %v2923 = vsel %vm1551, %v2904, 0.0
    %v2924 = vsel %vm1552, %v2906, 0.0
    %v2925 = vsel %vm1551, %v2908, 0.0
    %v2926 = vsel %vm1552, %v2910, 0.0
    %v2927 = vadd.f32 %v2911, %v2912
    %2928 = vadd.xlane.f32.xlu0 %v2927
    %v2929 = vpop.xlane.xlu0 %2928
    %v2930 = vadd.f32 %v2913, %v2914
    %2931 = vadd.xlane.f32.xlu0 %v2930
    %v2932 = vpop.xlane.xlu0 %2931
    %v2933 = vadd.f32 %v2915, %v2916
    %2934 = vadd.xlane.f32.xlu0 %v2933
    %v2935 = vpop.xlane.xlu0 %2934
    %v2936 = vadd.f32 %v2917, %v2918
    %2937 = vadd.xlane.f32.xlu0 %v2936
    %v2938 = vpop.xlane.xlu0 %2937
    %v2939 = vadd.f32 %v2919, %v2920
    %2940 = vadd.xlane.f32.xlu0 %v2939
    %v2941 = vpop.xlane.xlu0 %2940
    %v2942 = vadd.f32 %v2921, %v2922
    %2943 = vadd.xlane.f32.xlu0 %v2942
    %v2944 = vpop.xlane.xlu0 %2943
    %v2945 = vadd.f32 %v2923, %v2924
    %2946 = vadd.xlane.f32.xlu0 %v2945
    %v2947 = vpop.xlane.xlu0 %2946
    %v2948 = vadd.f32 %v2925, %v2926
    %2949 = vadd.xlane.f32.xlu0 %v2948
    %v2950 = vpop.xlane.xlu0 %2949
    %v2951 = vsel %vm1551, %v2929, 0.0
    %v2952 = vsel %vm1552, %v2929, 0.0
    %v2953 = vsel %vm1551, %v2932, 0.0
    %v2954 = vsel %vm1552, %v2932, 0.0
    %v2955 = vsel %vm1551, %v2935, 0.0
    %v2956 = vsel %vm1552, %v2935, 0.0
    %v2957 = vsel %vm1551, %v2938, 0.0
    %v2958 = vsel %vm1552, %v2938, 0.0
    %v2959 = vsel %vm1551, %v2941, 0.0
    %v2960 = vsel %vm1552, %v2941, 0.0
    %v2961 = vsel %vm1551, %v2944, 0.0
    %v2962 = vsel %vm1552, %v2944, 0.0
    %v2963 = vsel %vm1551, %v2947, 0.0
    %v2964 = vsel %vm1552, %v2947, 0.0
    %v2965 = vsel %vm1551, %v2950, 0.0
    %v2966 = vsel %vm1552, %v2950, 0.0
    %v2967 = vsel %vm1617, %v2880, 0.0
    %v2968 = vsel %vm1618, %v2882, 0.0
    %v2969 = vsel %vm1617, %v2884, 0.0
    %v2970 = vsel %vm1618, %v2886, 0.0
    %v2971 = vsel %vm1617, %v2888, 0.0
    %v2972 = vsel %vm1618, %v2890, 0.0
    %v2973 = vsel %vm1617, %v2892, 0.0
    %v2974 = vsel %vm1618, %v2894, 0.0
    %v2975 = vsel %vm1617, %v2896, 0.0
    %v2976 = vsel %vm1618, %v2898, 0.0
    %v2977 = vsel %vm1617, %v2900, 0.0
    %v2978 = vsel %vm1618, %v2902, 0.0
    %v2979 = vsel %vm1617, %v2904, 0.0
    %v2980 = vsel %vm1618, %v2906, 0.0
    %v2981 = vsel %vm1617, %v2908, 0.0
    %v2982 = vsel %vm1618, %v2910, 0.0
    %v2983 = vadd.f32 %v2967, %v2968
    %2984 = vadd.xlane.f32.xlu0 %v2983
    %v2985 = vpop.xlane.xlu0 %2984
    %v2986 = vadd.f32 %v2969, %v2970
    %2987 = vadd.xlane.f32.xlu0 %v2986
    %v2988 = vpop.xlane.xlu0 %2987
    %v2989 = vadd.f32 %v2971, %v2972
    %2990 = vadd.xlane.f32.xlu0 %v2989
    %v2991 = vpop.xlane.xlu0 %2990
    %v2992 = vadd.f32 %v2973, %v2974
    %2993 = vadd.xlane.f32.xlu0 %v2992
    %v2994 = vpop.xlane.xlu0 %2993
    %v2995 = vadd.f32 %v2975, %v2976
    %2996 = vadd.xlane.f32.xlu0 %v2995
    %v2997 = vpop.xlane.xlu0 %2996
    %v2998 = vadd.f32 %v2977, %v2978
    %2999 = vadd.xlane.f32.xlu0 %v2998
    %v3000 = vpop.xlane.xlu0 %2999
    %v3001 = vadd.f32 %v2979, %v2980
    %3002 = vadd.xlane.f32.xlu0 %v3001
    %v3003 = vpop.xlane.xlu0 %3002
    %v3004 = vadd.f32 %v2981, %v2982
    %3005 = vadd.xlane.f32.xlu0 %v3004
    %v3006 = vpop.xlane.xlu0 %3005
    %v3007 = vsel %vm1617, %v2985, %v2951
    %v3008 = vsel %vm1618, %v2985, %v2952
    %v3009 = vsel %vm1617, %v2988, %v2953
    %v3010 = vsel %vm1618, %v2988, %v2954
    %v3011 = vsel %vm1617, %v2991, %v2955
    %v3012 = vsel %vm1618, %v2991, %v2956
    %v3013 = vsel %vm1617, %v2994, %v2957
    %v3014 = vsel %vm1618, %v2994, %v2958
    %v3015 = vsel %vm1617, %v2997, %v2959
    %v3016 = vsel %vm1618, %v2997, %v2960
    %v3017 = vsel %vm1617, %v3000, %v2961
    %v3018 = vsel %vm1618, %v3000, %v2962
    %v3019 = vsel %vm1617, %v3003, %v2963
    %v3020 = vsel %vm1618, %v3003, %v2964
    %v3021 = vsel %vm1617, %v3006, %v2965
    %v3022 = vsel %vm1618, %v3006, %v2966
    %v3023 = vsel %vm1683, %v2880, 0.0
    %v3024 = vsel %vm1684, %v2882, 0.0
    %v3025 = vsel %vm1683, %v2884, 0.0
    %v3026 = vsel %vm1684, %v2886, 0.0
    %v3027 = vsel %vm1683, %v2888, 0.0
    %v3028 = vsel %vm1684, %v2890, 0.0
    %v3029 = vsel %vm1683, %v2892, 0.0
    %v3030 = vsel %vm1684, %v2894, 0.0
    %v3031 = vsel %vm1683, %v2896, 0.0
    %v3032 = vsel %vm1684, %v2898, 0.0
    %v3033 = vsel %vm1683, %v2900, 0.0
    %v3034 = vsel %vm1684, %v2902, 0.0
    %v3035 = vsel %vm1683, %v2904, 0.0
    %v3036 = vsel %vm1684, %v2906, 0.0
    %v3037 = vsel %vm1683, %v2908, 0.0
    %v3038 = vsel %vm1684, %v2910, 0.0
    %v3039 = vadd.f32 %v3023, %v3024
    %3040 = vadd.xlane.f32.xlu0 %v3039
    %v3041 = vpop.xlane.xlu0 %3040
    %v3042 = vadd.f32 %v3025, %v3026
    %3043 = vadd.xlane.f32.xlu0 %v3042
    %v3044 = vpop.xlane.xlu0 %3043
    %v3045 = vadd.f32 %v3027, %v3028
    %3046 = vadd.xlane.f32.xlu0 %v3045
    %v3047 = vpop.xlane.xlu0 %3046
    %v3048 = vadd.f32 %v3029, %v3030
    %3049 = vadd.xlane.f32.xlu0 %v3048
    %v3050 = vpop.xlane.xlu0 %3049
    %v3051 = vadd.f32 %v3031, %v3032
    %3052 = vadd.xlane.f32.xlu0 %v3051
    %v3053 = vpop.xlane.xlu0 %3052
    %v3054 = vadd.f32 %v3033, %v3034
    %3055 = vadd.xlane.f32.xlu0 %v3054
    %v3056 = vpop.xlane.xlu0 %3055
    %v3057 = vadd.f32 %v3035, %v3036
    %3058 = vadd.xlane.f32.xlu0 %v3057
    %v3059 = vpop.xlane.xlu0 %3058
    %v3060 = vadd.f32 %v3037, %v3038
    %3061 = vadd.xlane.f32.xlu0 %v3060
    %v3062 = vpop.xlane.xlu0 %3061
    %v3063 = vsel %vm1683, %v3041, %v3007
    %v3064 = vsel %vm1684, %v3041, %v3008
    %v3065 = vsel %vm1683, %v3044, %v3009
    %v3066 = vsel %vm1684, %v3044, %v3010
    %v3067 = vsel %vm1683, %v3047, %v3011
    %v3068 = vsel %vm1684, %v3047, %v3012
    %v3069 = vsel %vm1683, %v3050, %v3013
    %v3070 = vsel %vm1684, %v3050, %v3014
    %v3071 = vsel %vm1683, %v3053, %v3015
    %v3072 = vsel %vm1684, %v3053, %v3016
    %v3073 = vsel %vm1683, %v3056, %v3017
    %v3074 = vsel %vm1684, %v3056, %v3018
    %v3075 = vsel %vm1683, %v3059, %v3019
    %v3076 = vsel %vm1684, %v3059, %v3020
    %v3077 = vsel %vm1683, %v3062, %v3021
    %v3078 = vsel %vm1684, %v3062, %v3022
    %v3079 = vsel %vm1749, %v2880, 0.0
    %v3080 = vsel %vm1750, %v2882, 0.0
    %v3081 = vsel %vm1749, %v2884, 0.0
    %v3082 = vsel %vm1750, %v2886, 0.0
    %v3083 = vsel %vm1749, %v2888, 0.0
    %v3084 = vsel %vm1750, %v2890, 0.0
    %v3085 = vsel %vm1749, %v2892, 0.0
    %v3086 = vsel %vm1750, %v2894, 0.0
    %v3087 = vsel %vm1749, %v2896, 0.0
    %v3088 = vsel %vm1750, %v2898, 0.0
    %v3089 = vsel %vm1749, %v2900, 0.0
    %v3090 = vsel %vm1750, %v2902, 0.0
    %v3091 = vsel %vm1749, %v2904, 0.0
    %v3092 = vsel %vm1750, %v2906, 0.0
    %v3093 = vsel %vm1749, %v2908, 0.0
    %v3094 = vsel %vm1750, %v2910, 0.0
    %v3095 = vadd.f32 %v3079, %v3080
    %3096 = vadd.xlane.f32.xlu0 %v3095
    %v3097 = vpop.xlane.xlu0 %3096
    %v3098 = vadd.f32 %v3081, %v3082
    %3099 = vadd.xlane.f32.xlu0 %v3098
    %v3100 = vpop.xlane.xlu0 %3099
    %v3101 = vadd.f32 %v3083, %v3084
    %3102 = vadd.xlane.f32.xlu0 %v3101
    %v3103 = vpop.xlane.xlu0 %3102
    %v3104 = vadd.f32 %v3085, %v3086
    %3105 = vadd.xlane.f32.xlu0 %v3104
    %v3106 = vpop.xlane.xlu0 %3105
    %v3107 = vadd.f32 %v3087, %v3088
    %3108 = vadd.xlane.f32.xlu0 %v3107
    %v3109 = vpop.xlane.xlu0 %3108
    %v3110 = vadd.f32 %v3089, %v3090
    %3111 = vadd.xlane.f32.xlu0 %v3110
    %v3112 = vpop.xlane.xlu0 %3111
    %v3113 = vadd.f32 %v3091, %v3092
    %3114 = vadd.xlane.f32.xlu0 %v3113
    %v3115 = vpop.xlane.xlu0 %3114
    %v3116 = vadd.f32 %v3093, %v3094
    %3117 = vadd.xlane.f32.xlu0 %v3116
    %v3118 = vpop.xlane.xlu0 %3117
    %v3119 = vsel %vm1749, %v3097, %v3063
    %v3120 = vsel %vm1750, %v3097, %v3064
    %v3121 = vsel %vm1749, %v3100, %v3065
    %v3122 = vsel %vm1750, %v3100, %v3066
    %v3123 = vsel %vm1749, %v3103, %v3067
    %v3124 = vsel %vm1750, %v3103, %v3068
    %v3125 = vsel %vm1749, %v3106, %v3069
    %v3126 = vsel %vm1750, %v3106, %v3070
    %v3127 = vsel %vm1749, %v3109, %v3071
    %v3128 = vsel %vm1750, %v3109, %v3072
    %v3129 = vsel %vm1749, %v3112, %v3073
    %v3130 = vsel %vm1750, %v3112, %v3074
    %v3131 = vsel %vm1749, %v3115, %v3075
    %v3132 = vsel %vm1750, %v3115, %v3076
    %v3133 = vsel %vm1749, %v3118, %v3077
    %v3134 = vsel %vm1750, %v3118, %v3078
    %v3135 = vsel %vm1815, %v2880, 0.0
    %v3136 = vsel %vm1816, %v2882, 0.0
    %v3137 = vsel %vm1815, %v2884, 0.0
    %v3138 = vsel %vm1816, %v2886, 0.0
    %v3139 = vsel %vm1815, %v2888, 0.0
    %v3140 = vsel %vm1816, %v2890, 0.0
    %v3141 = vsel %vm1815, %v2892, 0.0
    %v3142 = vsel %vm1816, %v2894, 0.0
    %v3143 = vsel %vm1815, %v2896, 0.0
    %v3144 = vsel %vm1816, %v2898, 0.0
    %v3145 = vsel %vm1815, %v2900, 0.0
    %v3146 = vsel %vm1816, %v2902, 0.0
    %v3147 = vsel %vm1815, %v2904, 0.0
    %v3148 = vsel %vm1816, %v2906, 0.0
    %v3149 = vsel %vm1815, %v2908, 0.0
    %v3150 = vsel %vm1816, %v2910, 0.0
    %v3151 = vadd.f32 %v3135, %v3136
    %3152 = vadd.xlane.f32.xlu0 %v3151
    %v3153 = vpop.xlane.xlu0 %3152
    %v3154 = vadd.f32 %v3137, %v3138
    %3155 = vadd.xlane.f32.xlu0 %v3154
    %v3156 = vpop.xlane.xlu0 %3155
    %v3157 = vadd.f32 %v3139, %v3140
    %3158 = vadd.xlane.f32.xlu0 %v3157
    %v3159 = vpop.xlane.xlu0 %3158
    %v3160 = vadd.f32 %v3141, %v3142
    %3161 = vadd.xlane.f32.xlu0 %v3160
    %v3162 = vpop.xlane.xlu0 %3161
    %v3163 = vadd.f32 %v3143, %v3144
    %3164 = vadd.xlane.f32.xlu0 %v3163
    %v3165 = vpop.xlane.xlu0 %3164
    %v3166 = vadd.f32 %v3145, %v3146
    %3167 = vadd.xlane.f32.xlu0 %v3166
    %v3168 = vpop.xlane.xlu0 %3167
    %v3169 = vadd.f32 %v3147, %v3148
    %3170 = vadd.xlane.f32.xlu0 %v3169
    %v3171 = vpop.xlane.xlu0 %3170
    %v3172 = vadd.f32 %v3149, %v3150
    %3173 = vadd.xlane.f32.xlu0 %v3172
    %v3174 = vpop.xlane.xlu0 %3173
    %v3175 = vsel %vm1815, %v3153, %v3119
    %v3176 = vsel %vm1816, %v3153, %v3120
    %v3177 = vsel %vm1815, %v3156, %v3121
    %v3178 = vsel %vm1816, %v3156, %v3122
    %v3179 = vsel %vm1815, %v3159, %v3123
    %v3180 = vsel %vm1816, %v3159, %v3124
    %v3181 = vsel %vm1815, %v3162, %v3125
    %v3182 = vsel %vm1816, %v3162, %v3126
    %v3183 = vsel %vm1815, %v3165, %v3127
    %v3184 = vsel %vm1816, %v3165, %v3128
    %v3185 = vsel %vm1815, %v3168, %v3129
    %v3186 = vsel %vm1816, %v3168, %v3130
    %v3187 = vsel %vm1815, %v3171, %v3131
    %v3188 = vsel %vm1816, %v3171, %v3132
    %v3189 = vsel %vm1815, %v3174, %v3133
    %v3190 = vsel %vm1816, %v3174, %v3134
    %v3191 = vsel %vm1881, %v2880, 0.0
    %v3192 = vsel %vm1882, %v2882, 0.0
    %v3193 = vsel %vm1881, %v2884, 0.0
    %v3194 = vsel %vm1882, %v2886, 0.0
    %v3195 = vsel %vm1881, %v2888, 0.0
    %v3196 = vsel %vm1882, %v2890, 0.0
    %v3197 = vsel %vm1881, %v2892, 0.0
    %v3198 = vsel %vm1882, %v2894, 0.0
    %v3199 = vsel %vm1881, %v2896, 0.0
    %v3200 = vsel %vm1882, %v2898, 0.0
    %v3201 = vsel %vm1881, %v2900, 0.0
    %v3202 = vsel %vm1882, %v2902, 0.0
    %v3203 = vsel %vm1881, %v2904, 0.0
    %v3204 = vsel %vm1882, %v2906, 0.0
    %v3205 = vsel %vm1881, %v2908, 0.0
    %v3206 = vsel %vm1882, %v2910, 0.0
    %v3207 = vadd.f32 %v3191, %v3192
    %3208 = vadd.xlane.f32.xlu0 %v3207
    %v3209 = vpop.xlane.xlu0 %3208
    %v3210 = vadd.f32 %v3193, %v3194
    %3211 = vadd.xlane.f32.xlu0 %v3210
    %v3212 = vpop.xlane.xlu0 %3211
    %v3213 = vadd.f32 %v3195, %v3196
    %3214 = vadd.xlane.f32.xlu0 %v3213
    %v3215 = vpop.xlane.xlu0 %3214
    %v3216 = vadd.f32 %v3197, %v3198
    %3217 = vadd.xlane.f32.xlu0 %v3216
    %v3218 = vpop.xlane.xlu0 %3217
    %v3219 = vadd.f32 %v3199, %v3200
    %3220 = vadd.xlane.f32.xlu0 %v3219
    %v3221 = vpop.xlane.xlu0 %3220
    %v3222 = vadd.f32 %v3201, %v3202
    %3223 = vadd.xlane.f32.xlu0 %v3222
    %v3224 = vpop.xlane.xlu0 %3223
    %v3225 = vadd.f32 %v3203, %v3204
    %3226 = vadd.xlane.f32.xlu0 %v3225
    %v3227 = vpop.xlane.xlu0 %3226
    %v3228 = vadd.f32 %v3205, %v3206
    %3229 = vadd.xlane.f32.xlu0 %v3228
    %v3230 = vpop.xlane.xlu0 %3229
    %v3231 = vsel %vm1881, %v3209, %v3175
    %v3232 = vsel %vm1882, %v3209, %v3176
    %v3233 = vsel %vm1881, %v3212, %v3177
    %v3234 = vsel %vm1882, %v3212, %v3178
    %v3235 = vsel %vm1881, %v3215, %v3179
    %v3236 = vsel %vm1882, %v3215, %v3180
    %v3237 = vsel %vm1881, %v3218, %v3181
    %v3238 = vsel %vm1882, %v3218, %v3182
    %v3239 = vsel %vm1881, %v3221, %v3183
    %v3240 = vsel %vm1882, %v3221, %v3184
    %v3241 = vsel %vm1881, %v3224, %v3185
    %v3242 = vsel %vm1882, %v3224, %v3186
    %v3243 = vsel %vm1881, %v3227, %v3187
    %v3244 = vsel %vm1882, %v3227, %v3188
    %v3245 = vsel %vm1881, %v3230, %v3189
    %v3246 = vsel %vm1882, %v3230, %v3190
    %v3247 = vsel %vm1947, %v2880, 0.0
    %v3248 = vsel %vm1948, %v2882, 0.0
    %v3249 = vsel %vm1947, %v2884, 0.0
    %v3250 = vsel %vm1948, %v2886, 0.0
    %v3251 = vsel %vm1947, %v2888, 0.0
    %v3252 = vsel %vm1948, %v2890, 0.0
    %v3253 = vsel %vm1947, %v2892, 0.0
    %v3254 = vsel %vm1948, %v2894, 0.0
    %v3255 = vsel %vm1947, %v2896, 0.0
    %v3256 = vsel %vm1948, %v2898, 0.0
    %v3257 = vsel %vm1947, %v2900, 0.0
    %v3258 = vsel %vm1948, %v2902, 0.0
    %v3259 = vsel %vm1947, %v2904, 0.0
    %v3260 = vsel %vm1948, %v2906, 0.0
    %v3261 = vsel %vm1947, %v2908, 0.0
    %v3262 = vsel %vm1948, %v2910, 0.0
    %v3263 = vadd.f32 %v3247, %v3248
    %3264 = vadd.xlane.f32.xlu0 %v3263
    %v3265 = vpop.xlane.xlu0 %3264
    %v3266 = vadd.f32 %v3249, %v3250
    %3267 = vadd.xlane.f32.xlu0 %v3266
    %v3268 = vpop.xlane.xlu0 %3267
    %v3269 = vadd.f32 %v3251, %v3252
    %3270 = vadd.xlane.f32.xlu0 %v3269
    %v3271 = vpop.xlane.xlu0 %3270
    %v3272 = vadd.f32 %v3253, %v3254
    %3273 = vadd.xlane.f32.xlu0 %v3272
    %v3274 = vpop.xlane.xlu0 %3273
    %v3275 = vadd.f32 %v3255, %v3256
    %3276 = vadd.xlane.f32.xlu0 %v3275
    %v3277 = vpop.xlane.xlu0 %3276
    %v3278 = vadd.f32 %v3257, %v3258
    %3279 = vadd.xlane.f32.xlu0 %v3278
    %v3280 = vpop.xlane.xlu0 %3279
    %v3281 = vadd.f32 %v3259, %v3260
    %3282 = vadd.xlane.f32.xlu0 %v3281
    %v3283 = vpop.xlane.xlu0 %3282
    %v3284 = vadd.f32 %v3261, %v3262
    %3285 = vadd.xlane.f32.xlu0 %v3284
    %v3286 = vpop.xlane.xlu0 %3285
    %v3287 = vsel %vm1947, %v3265, %v3231
    %v3288 = vsel %vm1948, %v3265, %v3232
    %v3289 = vsel %vm1947, %v3268, %v3233
    %v3290 = vsel %vm1948, %v3268, %v3234
    %v3291 = vsel %vm1947, %v3271, %v3235
    %v3292 = vsel %vm1948, %v3271, %v3236
    %v3293 = vsel %vm1947, %v3274, %v3237
    %v3294 = vsel %vm1948, %v3274, %v3238
    %v3295 = vsel %vm1947, %v3277, %v3239
    %v3296 = vsel %vm1948, %v3277, %v3240
    %v3297 = vsel %vm1947, %v3280, %v3241
    %v3298 = vsel %vm1948, %v3280, %v3242
    %v3299 = vsel %vm1947, %v3283, %v3243
    %v3300 = vsel %vm1948, %v3283, %v3244
    %v3301 = vsel %vm1947, %v3286, %v3245
    %v3302 = vsel %vm1948, %v3286, %v3246
    %v3303 = vsel %vm2013, %v2880, 0.0
    %v3304 = vsel %vm2014, %v2882, 0.0
    %v3305 = vsel %vm2013, %v2884, 0.0
    %v3306 = vsel %vm2014, %v2886, 0.0
    %v3307 = vsel %vm2013, %v2888, 0.0
    %v3308 = vsel %vm2014, %v2890, 0.0
    %v3309 = vsel %vm2013, %v2892, 0.0
    %v3310 = vsel %vm2014, %v2894, 0.0
    %v3311 = vsel %vm2013, %v2896, 0.0
    %v3312 = vsel %vm2014, %v2898, 0.0
    %v3313 = vsel %vm2013, %v2900, 0.0
    %v3314 = vsel %vm2014, %v2902, 0.0
    %v3315 = vsel %vm2013, %v2904, 0.0
    %v3316 = vsel %vm2014, %v2906, 0.0
    %v3317 = vsel %vm2013, %v2908, 0.0
    %v3318 = vsel %vm2014, %v2910, 0.0
    %v3319 = vadd.f32 %v3303, %v3304
    %3320 = vadd.xlane.f32.xlu0 %v3319
    %v3321 = vpop.xlane.xlu0 %3320
    %v3322 = vadd.f32 %v3305, %v3306
    %3323 = vadd.xlane.f32.xlu0 %v3322
    %v3324 = vpop.xlane.xlu0 %3323
    %v3325 = vadd.f32 %v3307, %v3308
    %3326 = vadd.xlane.f32.xlu0 %v3325
    %v3327 = vpop.xlane.xlu0 %3326
    %v3328 = vadd.f32 %v3309, %v3310
    %3329 = vadd.xlane.f32.xlu0 %v3328
    %v3330 = vpop.xlane.xlu0 %3329
    %v3331 = vadd.f32 %v3311, %v3312
    %3332 = vadd.xlane.f32.xlu0 %v3331
    %v3333 = vpop.xlane.xlu0 %3332
    %v3334 = vadd.f32 %v3313, %v3314
    %3335 = vadd.xlane.f32.xlu0 %v3334
    %v3336 = vpop.xlane.xlu0 %3335
    %v3337 = vadd.f32 %v3315, %v3316
    %3338 = vadd.xlane.f32.xlu0 %v3337
    %v3339 = vpop.xlane.xlu0 %3338
    %v3340 = vadd.f32 %v3317, %v3318
    %3341 = vadd.xlane.f32.xlu0 %v3340
    %v3342 = vpop.xlane.xlu0 %3341
    %v3343 = vsel %vm2013, %v3321, %v3287
    %v3344 = vsel %vm2014, %v3321, %v3288
    %v3345 = vsel %vm2013, %v3324, %v3289
    %v3346 = vsel %vm2014, %v3324, %v3290
    %v3347 = vsel %vm2013, %v3327, %v3291
    %v3348 = vsel %vm2014, %v3327, %v3292
    %v3349 = vsel %vm2013, %v3330, %v3293
    %v3350 = vsel %vm2014, %v3330, %v3294
    %v3351 = vsel %vm2013, %v3333, %v3295
    %v3352 = vsel %vm2014, %v3333, %v3296
    %v3353 = vsel %vm2013, %v3336, %v3297
    %v3354 = vsel %vm2014, %v3336, %v3298
    %v3355 = vsel %vm2013, %v3339, %v3299
    %v3356 = vsel %vm2014, %v3339, %v3300
    %v3357 = vsel %vm2013, %v3342, %v3301
    %v3358 = vsel %vm2014, %v3342, %v3302
    %v3359 = vsel %vm2079, %v2880, 0.0
    %v3360 = vsel %vm2080, %v2882, 0.0
    %v3361 = vsel %vm2079, %v2884, 0.0
    %v3362 = vsel %vm2080, %v2886, 0.0
    %v3363 = vsel %vm2079, %v2888, 0.0
    %v3364 = vsel %vm2080, %v2890, 0.0
    %v3365 = vsel %vm2079, %v2892, 0.0
    %v3366 = vsel %vm2080, %v2894, 0.0
    %v3367 = vsel %vm2079, %v2896, 0.0
    %v3368 = vsel %vm2080, %v2898, 0.0
    %v3369 = vsel %vm2079, %v2900, 0.0
    %v3370 = vsel %vm2080, %v2902, 0.0
    %v3371 = vsel %vm2079, %v2904, 0.0
    %v3372 = vsel %vm2080, %v2906, 0.0
    %v3373 = vsel %vm2079, %v2908, 0.0
    %v3374 = vsel %vm2080, %v2910, 0.0
    %v3375 = vadd.f32 %v3359, %v3360
    %3376 = vadd.xlane.f32.xlu0 %v3375
    %v3377 = vpop.xlane.xlu0 %3376
    %v3378 = vadd.f32 %v3361, %v3362
    %3379 = vadd.xlane.f32.xlu0 %v3378
    %v3380 = vpop.xlane.xlu0 %3379
    %v3381 = vadd.f32 %v3363, %v3364
    %3382 = vadd.xlane.f32.xlu0 %v3381
    %v3383 = vpop.xlane.xlu0 %3382
    %v3384 = vadd.f32 %v3365, %v3366
    %3385 = vadd.xlane.f32.xlu0 %v3384
    %v3386 = vpop.xlane.xlu0 %3385
    %v3387 = vadd.f32 %v3367, %v3368
    %3388 = vadd.xlane.f32.xlu0 %v3387
    %v3389 = vpop.xlane.xlu0 %3388
    %v3390 = vadd.f32 %v3369, %v3370
    %3391 = vadd.xlane.f32.xlu0 %v3390
    %v3392 = vpop.xlane.xlu0 %3391
    %v3393 = vadd.f32 %v3371, %v3372
    %3394 = vadd.xlane.f32.xlu0 %v3393
    %v3395 = vpop.xlane.xlu0 %3394
    %v3396 = vadd.f32 %v3373, %v3374
    %3397 = vadd.xlane.f32.xlu0 %v3396
    %v3398 = vpop.xlane.xlu0 %3397
    %v3399 = vsel %vm2079, %v3377, %v3343
    %v3400 = vsel %vm2080, %v3377, %v3344
    %v3401 = vsel %vm2079, %v3380, %v3345
    %v3402 = vsel %vm2080, %v3380, %v3346
    %v3403 = vsel %vm2079, %v3383, %v3347
    %v3404 = vsel %vm2080, %v3383, %v3348
    %v3405 = vsel %vm2079, %v3386, %v3349
    %v3406 = vsel %vm2080, %v3386, %v3350
    %v3407 = vsel %vm2079, %v3389, %v3351
    %v3408 = vsel %vm2080, %v3389, %v3352
    %v3409 = vsel %vm2079, %v3392, %v3353
    %v3410 = vsel %vm2080, %v3392, %v3354
    %v3411 = vsel %vm2079, %v3395, %v3355
    %v3412 = vsel %vm2080, %v3395, %v3356
    %v3413 = vsel %vm2079, %v3398, %v3357
    %v3414 = vsel %vm2080, %v3398, %v3358
    %v3415 = vsel %vm2145, %v2880, 0.0
    %v3416 = vsel %vm2146, %v2882, 0.0
    %v3417 = vsel %vm2145, %v2884, 0.0
    %v3418 = vsel %vm2146, %v2886, 0.0
    %v3419 = vsel %vm2145, %v2888, 0.0
    %v3420 = vsel %vm2146, %v2890, 0.0
    %v3421 = vsel %vm2145, %v2892, 0.0
    %v3422 = vsel %vm2146, %v2894, 0.0
    %v3423 = vsel %vm2145, %v2896, 0.0
    %v3424 = vsel %vm2146, %v2898, 0.0
    %v3425 = vsel %vm2145, %v2900, 0.0
    %v3426 = vsel %vm2146, %v2902, 0.0
    %v3427 = vsel %vm2145, %v2904, 0.0
    %v3428 = vsel %vm2146, %v2906, 0.0
    %v3429 = vsel %vm2145, %v2908, 0.0
    %v3430 = vsel %vm2146, %v2910, 0.0
    %v3431 = vadd.f32 %v3415, %v3416
    %3432 = vadd.xlane.f32.xlu0 %v3431
    %v3433 = vpop.xlane.xlu0 %3432
    %v3434 = vadd.f32 %v3417, %v3418
    %3435 = vadd.xlane.f32.xlu0 %v3434
    %v3436 = vpop.xlane.xlu0 %3435
    %v3437 = vadd.f32 %v3419, %v3420
    %3438 = vadd.xlane.f32.xlu0 %v3437
    %v3439 = vpop.xlane.xlu0 %3438
    %v3440 = vadd.f32 %v3421, %v3422
    %3441 = vadd.xlane.f32.xlu0 %v3440
    %v3442 = vpop.xlane.xlu0 %3441
    %v3443 = vadd.f32 %v3423, %v3424
    %3444 = vadd.xlane.f32.xlu0 %v3443
    %v3445 = vpop.xlane.xlu0 %3444
    %v3446 = vadd.f32 %v3425, %v3426
    %3447 = vadd.xlane.f32.xlu0 %v3446
    %v3448 = vpop.xlane.xlu0 %3447
    %v3449 = vadd.f32 %v3427, %v3428
    %3450 = vadd.xlane.f32.xlu0 %v3449
    %v3451 = vpop.xlane.xlu0 %3450
    %v3452 = vadd.f32 %v3429, %v3430
    %3453 = vadd.xlane.f32.xlu0 %v3452
    %v3454 = vpop.xlane.xlu0 %3453
    %v3455 = vsel %vm2145, %v3433, %v3399
    %v3456 = vsel %vm2146, %v3433, %v3400
    %v3457 = vsel %vm2145, %v3436, %v3401
    %v3458 = vsel %vm2146, %v3436, %v3402
    %v3459 = vsel %vm2145, %v3439, %v3403
    %v3460 = vsel %vm2146, %v3439, %v3404
    %v3461 = vsel %vm2145, %v3442, %v3405
    %v3462 = vsel %vm2146, %v3442, %v3406
    %v3463 = vsel %vm2145, %v3445, %v3407
    %v3464 = vsel %vm2146, %v3445, %v3408
    %v3465 = vsel %vm2145, %v3448, %v3409
    %v3466 = vsel %vm2146, %v3448, %v3410
    %v3467 = vsel %vm2145, %v3451, %v3411
    %v3468 = vsel %vm2146, %v3451, %v3412
    %v3469 = vsel %vm2145, %v3454, %v3413
    %v3470 = vsel %vm2146, %v3454, %v3414
    %v3471 = vsel %vm2211, %v2880, 0.0
    %v3472 = vsel %vm2212, %v2882, 0.0
    %v3473 = vsel %vm2211, %v2884, 0.0
    %v3474 = vsel %vm2212, %v2886, 0.0
    %v3475 = vsel %vm2211, %v2888, 0.0
    %v3476 = vsel %vm2212, %v2890, 0.0
    %v3477 = vsel %vm2211, %v2892, 0.0
    %v3478 = vsel %vm2212, %v2894, 0.0
    %v3479 = vsel %vm2211, %v2896, 0.0
    %v3480 = vsel %vm2212, %v2898, 0.0
    %v3481 = vsel %vm2211, %v2900, 0.0
    %v3482 = vsel %vm2212, %v2902, 0.0
    %v3483 = vsel %vm2211, %v2904, 0.0
    %v3484 = vsel %vm2212, %v2906, 0.0
    %v3485 = vsel %vm2211, %v2908, 0.0
    %v3486 = vsel %vm2212, %v2910, 0.0
    %v3487 = vadd.f32 %v3471, %v3472
    %3488 = vadd.xlane.f32.xlu0 %v3487
    %v3489 = vpop.xlane.xlu0 %3488
    %v3490 = vadd.f32 %v3473, %v3474
    %3491 = vadd.xlane.f32.xlu0 %v3490
    %v3492 = vpop.xlane.xlu0 %3491
    %v3493 = vadd.f32 %v3475, %v3476
    %3494 = vadd.xlane.f32.xlu0 %v3493
    %v3495 = vpop.xlane.xlu0 %3494
    %v3496 = vadd.f32 %v3477, %v3478
    %3497 = vadd.xlane.f32.xlu0 %v3496
    %v3498 = vpop.xlane.xlu0 %3497
    %v3499 = vadd.f32 %v3479, %v3480
    %3500 = vadd.xlane.f32.xlu0 %v3499
    %v3501 = vpop.xlane.xlu0 %3500
    %v3502 = vadd.f32 %v3481, %v3482
    %3503 = vadd.xlane.f32.xlu0 %v3502
    %v3504 = vpop.xlane.xlu0 %3503
    %v3505 = vadd.f32 %v3483, %v3484
    %3506 = vadd.xlane.f32.xlu0 %v3505
    %v3507 = vpop.xlane.xlu0 %3506
    %v3508 = vadd.f32 %v3485, %v3486
    %3509 = vadd.xlane.f32.xlu0 %v3508
    %v3510 = vpop.xlane.xlu0 %3509
    %v3511 = vsel %vm2211, %v3489, %v3455
    %v3512 = vsel %vm2212, %v3489, %v3456
    %v3513 = vsel %vm2211, %v3492, %v3457
    %v3514 = vsel %vm2212, %v3492, %v3458
    %v3515 = vsel %vm2211, %v3495, %v3459
    %v3516 = vsel %vm2212, %v3495, %v3460
    %v3517 = vsel %vm2211, %v3498, %v3461
    %v3518 = vsel %vm2212, %v3498, %v3462
    %v3519 = vsel %vm2211, %v3501, %v3463
    %v3520 = vsel %vm2212, %v3501, %v3464
    %v3521 = vsel %vm2211, %v3504, %v3465
    %v3522 = vsel %vm2212, %v3504, %v3466
    %v3523 = vsel %vm2211, %v3507, %v3467
    %v3524 = vsel %vm2212, %v3507, %v3468
    %v3525 = vsel %vm2211, %v3510, %v3469
    %v3526 = vsel %vm2212, %v3510, %v3470
    %v3527 = vsel %vm2277, %v2880, 0.0
    %v3528 = vsel %vm2278, %v2882, 0.0
    %v3529 = vsel %vm2277, %v2884, 0.0
    %v3530 = vsel %vm2278, %v2886, 0.0
    %v3531 = vsel %vm2277, %v2888, 0.0
    %v3532 = vsel %vm2278, %v2890, 0.0
    %v3533 = vsel %vm2277, %v2892, 0.0
    %v3534 = vsel %vm2278, %v2894, 0.0
    %v3535 = vsel %vm2277, %v2896, 0.0
    %v3536 = vsel %vm2278, %v2898, 0.0
    %v3537 = vsel %vm2277, %v2900, 0.0
    %v3538 = vsel %vm2278, %v2902, 0.0
    %v3539 = vsel %vm2277, %v2904, 0.0
    %v3540 = vsel %vm2278, %v2906, 0.0
    %v3541 = vsel %vm2277, %v2908, 0.0
    %v3542 = vsel %vm2278, %v2910, 0.0
    %v3543 = vadd.f32 %v3527, %v3528
    %3544 = vadd.xlane.f32.xlu0 %v3543
    %v3545 = vpop.xlane.xlu0 %3544
    %v3546 = vadd.f32 %v3529, %v3530
    %3547 = vadd.xlane.f32.xlu0 %v3546
    %v3548 = vpop.xlane.xlu0 %3547
    %v3549 = vadd.f32 %v3531, %v3532
    %3550 = vadd.xlane.f32.xlu0 %v3549
    %v3551 = vpop.xlane.xlu0 %3550
    %v3552 = vadd.f32 %v3533, %v3534
    %3553 = vadd.xlane.f32.xlu0 %v3552
    %v3554 = vpop.xlane.xlu0 %3553
    %v3555 = vadd.f32 %v3535, %v3536
    %3556 = vadd.xlane.f32.xlu0 %v3555
    %v3557 = vpop.xlane.xlu0 %3556
    %v3558 = vadd.f32 %v3537, %v3538
    %3559 = vadd.xlane.f32.xlu0 %v3558
    %v3560 = vpop.xlane.xlu0 %3559
    %v3561 = vadd.f32 %v3539, %v3540
    %3562 = vadd.xlane.f32.xlu0 %v3561
    %v3563 = vpop.xlane.xlu0 %3562
    %v3564 = vadd.f32 %v3541, %v3542
    %3565 = vadd.xlane.f32.xlu0 %v3564
    %v3566 = vpop.xlane.xlu0 %3565
    %v3567 = vsel %vm2277, %v3545, %v3511
    %v3568 = vsel %vm2278, %v3545, %v3512
    %v3569 = vsel %vm2277, %v3548, %v3513
    %v3570 = vsel %vm2278, %v3548, %v3514
    %v3571 = vsel %vm2277, %v3551, %v3515
    %v3572 = vsel %vm2278, %v3551, %v3516
    %v3573 = vsel %vm2277, %v3554, %v3517
    %v3574 = vsel %vm2278, %v3554, %v3518
    %v3575 = vsel %vm2277, %v3557, %v3519
    %v3576 = vsel %vm2278, %v3557, %v3520
    %v3577 = vsel %vm2277, %v3560, %v3521
    %v3578 = vsel %vm2278, %v3560, %v3522
    %v3579 = vsel %vm2277, %v3563, %v3523
    %v3580 = vsel %vm2278, %v3563, %v3524
    %v3581 = vsel %vm2277, %v3566, %v3525
    %v3582 = vsel %vm2278, %v3566, %v3526
    %v3583 = vsel %vm2343, %v2880, 0.0
    %v3584 = vsel %vm2344, %v2882, 0.0
    %v3585 = vsel %vm2343, %v2884, 0.0
    %v3586 = vsel %vm2344, %v2886, 0.0
    %v3587 = vsel %vm2343, %v2888, 0.0
    %v3588 = vsel %vm2344, %v2890, 0.0
    %v3589 = vsel %vm2343, %v2892, 0.0
    %v3590 = vsel %vm2344, %v2894, 0.0
    %v3591 = vsel %vm2343, %v2896, 0.0
    %v3592 = vsel %vm2344, %v2898, 0.0
    %v3593 = vsel %vm2343, %v2900, 0.0
    %v3594 = vsel %vm2344, %v2902, 0.0
    %v3595 = vsel %vm2343, %v2904, 0.0
    %v3596 = vsel %vm2344, %v2906, 0.0
    %v3597 = vsel %vm2343, %v2908, 0.0
    %v3598 = vsel %vm2344, %v2910, 0.0
    %v3599 = vadd.f32 %v3583, %v3584
    %3600 = vadd.xlane.f32.xlu0 %v3599
    %v3601 = vpop.xlane.xlu0 %3600
    %v3602 = vadd.f32 %v3585, %v3586
    %3603 = vadd.xlane.f32.xlu0 %v3602
    %v3604 = vpop.xlane.xlu0 %3603
    %v3605 = vadd.f32 %v3587, %v3588
    %3606 = vadd.xlane.f32.xlu0 %v3605
    %v3607 = vpop.xlane.xlu0 %3606
    %v3608 = vadd.f32 %v3589, %v3590
    %3609 = vadd.xlane.f32.xlu0 %v3608
    %v3610 = vpop.xlane.xlu0 %3609
    %v3611 = vadd.f32 %v3591, %v3592
    %3612 = vadd.xlane.f32.xlu0 %v3611
    %v3613 = vpop.xlane.xlu0 %3612
    %v3614 = vadd.f32 %v3593, %v3594
    %3615 = vadd.xlane.f32.xlu0 %v3614
    %v3616 = vpop.xlane.xlu0 %3615
    %v3617 = vadd.f32 %v3595, %v3596
    %3618 = vadd.xlane.f32.xlu0 %v3617
    %v3619 = vpop.xlane.xlu0 %3618
    %v3620 = vadd.f32 %v3597, %v3598
    %3621 = vadd.xlane.f32.xlu0 %v3620
    %v3622 = vpop.xlane.xlu0 %3621
    %v3623 = vsel %vm2343, %v3601, %v3567
    %v3624 = vsel %vm2344, %v3601, %v3568
    %v3625 = vsel %vm2343, %v3604, %v3569
    %v3626 = vsel %vm2344, %v3604, %v3570
    %v3627 = vsel %vm2343, %v3607, %v3571
    %v3628 = vsel %vm2344, %v3607, %v3572
    %v3629 = vsel %vm2343, %v3610, %v3573
    %v3630 = vsel %vm2344, %v3610, %v3574
    %v3631 = vsel %vm2343, %v3613, %v3575
    %v3632 = vsel %vm2344, %v3613, %v3576
    %v3633 = vsel %vm2343, %v3616, %v3577
    %v3634 = vsel %vm2344, %v3616, %v3578
    %v3635 = vsel %vm2343, %v3619, %v3579
    %v3636 = vsel %vm2344, %v3619, %v3580
    %v3637 = vsel %vm2343, %v3622, %v3581
    %v3638 = vsel %vm2344, %v3622, %v3582
    %v3639 = vsel %vm2409, %v2880, 0.0
    %v3640 = vsel %vm2410, %v2882, 0.0
    %v3641 = vsel %vm2409, %v2884, 0.0
    %v3642 = vsel %vm2410, %v2886, 0.0
    %v3643 = vsel %vm2409, %v2888, 0.0
    %v3644 = vsel %vm2410, %v2890, 0.0
    %v3645 = vsel %vm2409, %v2892, 0.0
    %v3646 = vsel %vm2410, %v2894, 0.0
    %v3647 = vsel %vm2409, %v2896, 0.0
    %v3648 = vsel %vm2410, %v2898, 0.0
    %v3649 = vsel %vm2409, %v2900, 0.0
    %v3650 = vsel %vm2410, %v2902, 0.0
    %v3651 = vsel %vm2409, %v2904, 0.0
    %v3652 = vsel %vm2410, %v2906, 0.0
    %v3653 = vsel %vm2409, %v2908, 0.0
    %v3654 = vsel %vm2410, %v2910, 0.0
    %v3655 = vadd.f32 %v3639, %v3640
    %3656 = vadd.xlane.f32.xlu0 %v3655
    %v3657 = vpop.xlane.xlu0 %3656
    %v3658 = vadd.f32 %v3641, %v3642
    %3659 = vadd.xlane.f32.xlu0 %v3658
    %v3660 = vpop.xlane.xlu0 %3659
    %v3661 = vadd.f32 %v3643, %v3644
    %3662 = vadd.xlane.f32.xlu0 %v3661
    %v3663 = vpop.xlane.xlu0 %3662
    %v3664 = vadd.f32 %v3645, %v3646
    %3665 = vadd.xlane.f32.xlu0 %v3664
    %v3666 = vpop.xlane.xlu0 %3665
    %v3667 = vadd.f32 %v3647, %v3648
    %3668 = vadd.xlane.f32.xlu0 %v3667
    %v3669 = vpop.xlane.xlu0 %3668
    %v3670 = vadd.f32 %v3649, %v3650
    %3671 = vadd.xlane.f32.xlu0 %v3670
    %v3672 = vpop.xlane.xlu0 %3671
    %v3673 = vadd.f32 %v3651, %v3652
    %3674 = vadd.xlane.f32.xlu0 %v3673
    %v3675 = vpop.xlane.xlu0 %3674
    %v3676 = vadd.f32 %v3653, %v3654
    %3677 = vadd.xlane.f32.xlu0 %v3676
    %v3678 = vpop.xlane.xlu0 %3677
    %v3679 = vsel %vm2409, %v3657, %v3623
    %v3680 = vsel %vm2410, %v3657, %v3624
    %v3681 = vsel %vm2409, %v3660, %v3625
    %v3682 = vsel %vm2410, %v3660, %v3626
    %v3683 = vsel %vm2409, %v3663, %v3627
    %v3684 = vsel %vm2410, %v3663, %v3628
    %v3685 = vsel %vm2409, %v3666, %v3629
    %v3686 = vsel %vm2410, %v3666, %v3630
    %v3687 = vsel %vm2409, %v3669, %v3631
    %v3688 = vsel %vm2410, %v3669, %v3632
    %v3689 = vsel %vm2409, %v3672, %v3633
    %v3690 = vsel %vm2410, %v3672, %v3634
    %v3691 = vsel %vm2409, %v3675, %v3635
    %v3692 = vsel %vm2410, %v3675, %v3636
    %v3693 = vsel %vm2409, %v3678, %v3637
    %v3694 = vsel %vm2410, %v3678, %v3638
    %v3695 = vsel %vm2475, %v2880, 0.0
    %v3696 = vsel %vm2476, %v2882, 0.0
    %v3697 = vsel %vm2475, %v2884, 0.0
    %v3698 = vsel %vm2476, %v2886, 0.0
    %v3699 = vsel %vm2475, %v2888, 0.0
    %v3700 = vsel %vm2476, %v2890, 0.0
    %v3701 = vsel %vm2475, %v2892, 0.0
    %v3702 = vsel %vm2476, %v2894, 0.0
    %v3703 = vsel %vm2475, %v2896, 0.0
    %v3704 = vsel %vm2476, %v2898, 0.0
    %v3705 = vsel %vm2475, %v2900, 0.0
    %v3706 = vsel %vm2476, %v2902, 0.0
    %v3707 = vsel %vm2475, %v2904, 0.0
    %v3708 = vsel %vm2476, %v2906, 0.0
    %v3709 = vsel %vm2475, %v2908, 0.0
    %v3710 = vsel %vm2476, %v2910, 0.0
    %v3711 = vadd.f32 %v3695, %v3696
    %3712 = vadd.xlane.f32.xlu0 %v3711
    %v3713 = vpop.xlane.xlu0 %3712
    %v3714 = vadd.f32 %v3697, %v3698
    %3715 = vadd.xlane.f32.xlu0 %v3714
    %v3716 = vpop.xlane.xlu0 %3715
    %v3717 = vadd.f32 %v3699, %v3700
    %3718 = vadd.xlane.f32.xlu0 %v3717
    %v3719 = vpop.xlane.xlu0 %3718
    %v3720 = vadd.f32 %v3701, %v3702
    %3721 = vadd.xlane.f32.xlu0 %v3720
    %v3722 = vpop.xlane.xlu0 %3721
    %v3723 = vadd.f32 %v3703, %v3704
    %3724 = vadd.xlane.f32.xlu0 %v3723
    %v3725 = vpop.xlane.xlu0 %3724
    %v3726 = vadd.f32 %v3705, %v3706
    %3727 = vadd.xlane.f32.xlu0 %v3726
    %v3728 = vpop.xlane.xlu0 %3727
    %v3729 = vadd.f32 %v3707, %v3708
    %3730 = vadd.xlane.f32.xlu0 %v3729
    %v3731 = vpop.xlane.xlu0 %3730
    %v3732 = vadd.f32 %v3709, %v3710
    %3733 = vadd.xlane.f32.xlu0 %v3732
    %v3734 = vpop.xlane.xlu0 %3733
    %v3735 = vsel %vm2475, %v3713, %v3679
    %v3736 = vsel %vm2476, %v3713, %v3680
    %v3737 = vsel %vm2475, %v3716, %v3681
    %v3738 = vsel %vm2476, %v3716, %v3682
    %v3739 = vsel %vm2475, %v3719, %v3683
    %v3740 = vsel %vm2476, %v3719, %v3684
    %v3741 = vsel %vm2475, %v3722, %v3685
    %v3742 = vsel %vm2476, %v3722, %v3686
    %v3743 = vsel %vm2475, %v3725, %v3687
    %v3744 = vsel %vm2476, %v3725, %v3688
    %v3745 = vsel %vm2475, %v3728, %v3689
    %v3746 = vsel %vm2476, %v3728, %v3690
    %v3747 = vsel %vm2475, %v3731, %v3691
    %v3748 = vsel %vm2476, %v3731, %v3692
    %v3749 = vsel %vm2475, %v3734, %v3693
    %v3750 = vsel %vm2476, %v3734, %v3694
    %v3751 = vsel %vm2541, %v2880, 0.0
    %v3752 = vsel %vm2542, %v2882, 0.0
    %v3753 = vsel %vm2541, %v2884, 0.0
    %v3754 = vsel %vm2542, %v2886, 0.0
    %v3755 = vsel %vm2541, %v2888, 0.0
    %v3756 = vsel %vm2542, %v2890, 0.0
    %v3757 = vsel %vm2541, %v2892, 0.0
    %v3758 = vsel %vm2542, %v2894, 0.0
    %v3759 = vsel %vm2541, %v2896, 0.0
    %v3760 = vsel %vm2542, %v2898, 0.0
    %v3761 = vsel %vm2541, %v2900, 0.0
    %v3762 = vsel %vm2542, %v2902, 0.0
    %v3763 = vsel %vm2541, %v2904, 0.0
    %v3764 = vsel %vm2542, %v2906, 0.0
    %v3765 = vsel %vm2541, %v2908, 0.0
    %v3766 = vsel %vm2542, %v2910, 0.0
    %v3767 = vadd.f32 %v3751, %v3752
    %3768 = vadd.xlane.f32.xlu0 %v3767
    %v3769 = vpop.xlane.xlu0 %3768
    %v3770 = vadd.f32 %v3753, %v3754
    %3771 = vadd.xlane.f32.xlu0 %v3770
    %v3772 = vpop.xlane.xlu0 %3771
    %v3773 = vadd.f32 %v3755, %v3756
    %3774 = vadd.xlane.f32.xlu0 %v3773
    %v3775 = vpop.xlane.xlu0 %3774
    %v3776 = vadd.f32 %v3757, %v3758
    %3777 = vadd.xlane.f32.xlu0 %v3776
    %v3778 = vpop.xlane.xlu0 %3777
    %v3779 = vadd.f32 %v3759, %v3760
    %3780 = vadd.xlane.f32.xlu0 %v3779
    %v3781 = vpop.xlane.xlu0 %3780
    %v3782 = vadd.f32 %v3761, %v3762
    %3783 = vadd.xlane.f32.xlu0 %v3782
    %v3784 = vpop.xlane.xlu0 %3783
    %v3785 = vadd.f32 %v3763, %v3764
    %3786 = vadd.xlane.f32.xlu0 %v3785
    %v3787 = vpop.xlane.xlu0 %3786
    %v3788 = vadd.f32 %v3765, %v3766
    %3789 = vadd.xlane.f32.xlu0 %v3788
    %v3790 = vpop.xlane.xlu0 %3789
    %v3791 = vsel %vm2541, %v3769, %v3735
    %v3792 = vsel %vm2542, %v3769, %v3736
    %v3793 = vsel %vm2541, %v3772, %v3737
    %v3794 = vsel %vm2542, %v3772, %v3738
    %v3795 = vsel %vm2541, %v3775, %v3739
    %v3796 = vsel %vm2542, %v3775, %v3740
    %v3797 = vsel %vm2541, %v3778, %v3741
    %v3798 = vsel %vm2542, %v3778, %v3742
    %v3799 = vsel %vm2541, %v3781, %v3743
    %v3800 = vsel %vm2542, %v3781, %v3744
    %v3801 = vsel %vm2541, %v3784, %v3745
    %v3802 = vsel %vm2542, %v3784, %v3746
    %v3803 = vsel %vm2541, %v3787, %v3747
    %v3804 = vsel %vm2542, %v3787, %v3748
    %v3805 = vsel %vm2541, %v3790, %v3749
    %v3806 = vsel %vm2542, %v3790, %v3750
    %v3807 = vsel %vm2607, %v2880, 0.0
    %v3808 = vsel %vm2608, %v2882, 0.0
    %v3809 = vsel %vm2607, %v2884, 0.0
    %v3810 = vsel %vm2608, %v2886, 0.0
    %v3811 = vsel %vm2607, %v2888, 0.0
    %v3812 = vsel %vm2608, %v2890, 0.0
    %v3813 = vsel %vm2607, %v2892, 0.0
    %v3814 = vsel %vm2608, %v2894, 0.0
    %v3815 = vsel %vm2607, %v2896, 0.0
    %v3816 = vsel %vm2608, %v2898, 0.0
    %v3817 = vsel %vm2607, %v2900, 0.0
    %v3818 = vsel %vm2608, %v2902, 0.0
    %v3819 = vsel %vm2607, %v2904, 0.0
    %v3820 = vsel %vm2608, %v2906, 0.0
    %v3821 = vsel %vm2607, %v2908, 0.0
    %v3822 = vsel %vm2608, %v2910, 0.0
    %v3823 = vadd.f32 %v3807, %v3808
    %3824 = vadd.xlane.f32.xlu0 %v3823
    %v3825 = vpop.xlane.xlu0 %3824
    %v3826 = vadd.f32 %v3809, %v3810
    %3827 = vadd.xlane.f32.xlu0 %v3826
    %v3828 = vpop.xlane.xlu0 %3827
    %v3829 = vadd.f32 %v3811, %v3812
    %3830 = vadd.xlane.f32.xlu0 %v3829
    %v3831 = vpop.xlane.xlu0 %3830
    %v3832 = vadd.f32 %v3813, %v3814
    %3833 = vadd.xlane.f32.xlu0 %v3832
    %v3834 = vpop.xlane.xlu0 %3833
    %v3835 = vadd.f32 %v3815, %v3816
    %3836 = vadd.xlane.f32.xlu0 %v3835
    %v3837 = vpop.xlane.xlu0 %3836
    %v3838 = vadd.f32 %v3817, %v3818
    %3839 = vadd.xlane.f32.xlu0 %v3838
    %v3840 = vpop.xlane.xlu0 %3839
    %v3841 = vadd.f32 %v3819, %v3820
    %3842 = vadd.xlane.f32.xlu0 %v3841
    %v3843 = vpop.xlane.xlu0 %3842
    %v3844 = vadd.f32 %v3821, %v3822
    %3845 = vadd.xlane.f32.xlu0 %v3844
    %v3846 = vpop.xlane.xlu0 %3845
    %v3847 = vsel %vm2607, %v3825, %v3791
    %v3848 = vsel %vm2608, %v3825, %v3792
    %v3849 = vsel %vm2607, %v3828, %v3793
    %v3850 = vsel %vm2608, %v3828, %v3794
    %v3851 = vsel %vm2607, %v3831, %v3795
    %v3852 = vsel %vm2608, %v3831, %v3796
    %v3853 = vsel %vm2607, %v3834, %v3797
    %v3854 = vsel %vm2608, %v3834, %v3798
    %v3855 = vsel %vm2607, %v3837, %v3799
    %v3856 = vsel %vm2608, %v3837, %v3800
    %v3857 = vsel %vm2607, %v3840, %v3801
    %v3858 = vsel %vm2608, %v3840, %v3802
    %v3859 = vsel %vm2607, %v3843, %v3803
    %v3860 = vsel %vm2608, %v3843, %v3804
    %v3861 = vsel %vm2607, %v3846, %v3805
    %v3862 = vsel %vm2608, %v3846, %v3806
    %v3863 = vsel %vm2673, %v2880, 0.0
    %v3864 = vsel %vm2674, %v2882, 0.0
    %v3865 = vsel %vm2673, %v2884, 0.0
    %v3866 = vsel %vm2674, %v2886, 0.0
    %v3867 = vsel %vm2673, %v2888, 0.0
    %v3868 = vsel %vm2674, %v2890, 0.0
    %v3869 = vsel %vm2673, %v2892, 0.0
    %v3870 = vsel %vm2674, %v2894, 0.0
    %v3871 = vsel %vm2673, %v2896, 0.0
    %v3872 = vsel %vm2674, %v2898, 0.0
    %v3873 = vsel %vm2673, %v2900, 0.0
    %v3874 = vsel %vm2674, %v2902, 0.0
    %v3875 = vsel %vm2673, %v2904, 0.0
    %v3876 = vsel %vm2674, %v2906, 0.0
    %v3877 = vsel %vm2673, %v2908, 0.0
    %v3878 = vsel %vm2674, %v2910, 0.0
    %v3879 = vadd.f32 %v3863, %v3864
    %3880 = vadd.xlane.f32.xlu0 %v3879
    %v3881 = vpop.xlane.xlu0 %3880
    %v3882 = vadd.f32 %v3865, %v3866
    %3883 = vadd.xlane.f32.xlu0 %v3882
    %v3884 = vpop.xlane.xlu0 %3883
    %v3885 = vadd.f32 %v3867, %v3868
    %3886 = vadd.xlane.f32.xlu0 %v3885
    %v3887 = vpop.xlane.xlu0 %3886
    %v3888 = vadd.f32 %v3869, %v3870
    %3889 = vadd.xlane.f32.xlu0 %v3888
    %v3890 = vpop.xlane.xlu0 %3889
    %v3891 = vadd.f32 %v3871, %v3872
    %3892 = vadd.xlane.f32.xlu0 %v3891
    %v3893 = vpop.xlane.xlu0 %3892
    %v3894 = vadd.f32 %v3873, %v3874
    %3895 = vadd.xlane.f32.xlu0 %v3894
    %v3896 = vpop.xlane.xlu0 %3895
    %v3897 = vadd.f32 %v3875, %v3876
    %3898 = vadd.xlane.f32.xlu0 %v3897
    %v3899 = vpop.xlane.xlu0 %3898
    %v3900 = vadd.f32 %v3877, %v3878
    %3901 = vadd.xlane.f32.xlu0 %v3900
    %v3902 = vpop.xlane.xlu0 %3901
    %v3903 = vsel %vm2673, %v3881, %v3847
    %v3904 = vsel %vm2674, %v3881, %v3848
    %v3905 = vsel %vm2673, %v3884, %v3849
    %v3906 = vsel %vm2674, %v3884, %v3850
    %v3907 = vsel %vm2673, %v3887, %v3851
    %v3908 = vsel %vm2674, %v3887, %v3852
    %v3909 = vsel %vm2673, %v3890, %v3853
    %v3910 = vsel %vm2674, %v3890, %v3854
    %v3911 = vsel %vm2673, %v3893, %v3855
    %v3912 = vsel %vm2674, %v3893, %v3856
    %v3913 = vsel %vm2673, %v3896, %v3857
    %v3914 = vsel %vm2674, %v3896, %v3858
    %v3915 = vsel %vm2673, %v3899, %v3859
    %v3916 = vsel %vm2674, %v3899, %v3860
    %v3917 = vsel %vm2673, %v3902, %v3861
    %v3918 = vsel %vm2674, %v3902, %v3862
    %v3919 = vsel %vm2739, %v2880, 0.0
    %v3920 = vsel %vm2740, %v2882, 0.0
    %v3921 = vsel %vm2739, %v2884, 0.0
    %v3922 = vsel %vm2740, %v2886, 0.0
    %v3923 = vsel %vm2739, %v2888, 0.0
    %v3924 = vsel %vm2740, %v2890, 0.0
    %v3925 = vsel %vm2739, %v2892, 0.0
    %v3926 = vsel %vm2740, %v2894, 0.0
    %v3927 = vsel %vm2739, %v2896, 0.0
    %v3928 = vsel %vm2740, %v2898, 0.0
    %v3929 = vsel %vm2739, %v2900, 0.0
    %v3930 = vsel %vm2740, %v2902, 0.0
    %v3931 = vsel %vm2739, %v2904, 0.0
    %v3932 = vsel %vm2740, %v2906, 0.0
    %v3933 = vsel %vm2739, %v2908, 0.0
    %v3934 = vsel %vm2740, %v2910, 0.0
    %v3935 = vadd.f32 %v3919, %v3920
    %3936 = vadd.xlane.f32.xlu0 %v3935
    %v3937 = vpop.xlane.xlu0 %3936
    %v3938 = vadd.f32 %v3921, %v3922
    %3939 = vadd.xlane.f32.xlu0 %v3938
    %v3940 = vpop.xlane.xlu0 %3939
    %v3941 = vadd.f32 %v3923, %v3924
    %3942 = vadd.xlane.f32.xlu0 %v3941
    %v3943 = vpop.xlane.xlu0 %3942
    %v3944 = vadd.f32 %v3925, %v3926
    %3945 = vadd.xlane.f32.xlu0 %v3944
    %v3946 = vpop.xlane.xlu0 %3945
    %v3947 = vadd.f32 %v3927, %v3928
    %3948 = vadd.xlane.f32.xlu0 %v3947
    %v3949 = vpop.xlane.xlu0 %3948
    %v3950 = vadd.f32 %v3929, %v3930
    %3951 = vadd.xlane.f32.xlu0 %v3950
    %v3952 = vpop.xlane.xlu0 %3951
    %v3953 = vadd.f32 %v3931, %v3932
    %3954 = vadd.xlane.f32.xlu0 %v3953
    %v3955 = vpop.xlane.xlu0 %3954
    %v3956 = vadd.f32 %v3933, %v3934
    %3957 = vadd.xlane.f32.xlu0 %v3956
    %v3958 = vpop.xlane.xlu0 %3957
    %v3959 = vsel %vm2739, %v3937, %v3903
    %v3960 = vsel %vm2740, %v3937, %v3904
    %v3961 = vsel %vm2739, %v3940, %v3905
    %v3962 = vsel %vm2740, %v3940, %v3906
    %v3963 = vsel %vm2739, %v3943, %v3907
    %v3964 = vsel %vm2740, %v3943, %v3908
    %v3965 = vsel %vm2739, %v3946, %v3909
    %v3966 = vsel %vm2740, %v3946, %v3910
    %v3967 = vsel %vm2739, %v3949, %v3911
    %v3968 = vsel %vm2740, %v3949, %v3912
    %v3969 = vsel %vm2739, %v3952, %v3913
    %v3970 = vsel %vm2740, %v3952, %v3914
    %v3971 = vsel %vm2739, %v3955, %v3915
    %v3972 = vsel %vm2740, %v3955, %v3916
    %v3973 = vsel %vm2739, %v3958, %v3917
    %v3974 = vsel %vm2740, %v3958, %v3918
    %v3975 = vsel %vm2805, %v2880, 0.0
    %v3976 = vsel %vm2806, %v2882, 0.0
    %v3977 = vsel %vm2805, %v2884, 0.0
    %v3978 = vsel %vm2806, %v2886, 0.0
    %v3979 = vsel %vm2805, %v2888, 0.0
    %v3980 = vsel %vm2806, %v2890, 0.0
    %v3981 = vsel %vm2805, %v2892, 0.0
    %v3982 = vsel %vm2806, %v2894, 0.0
    %v3983 = vsel %vm2805, %v2896, 0.0
    %v3984 = vsel %vm2806, %v2898, 0.0
    %v3985 = vsel %vm2805, %v2900, 0.0
    %v3986 = vsel %vm2806, %v2902, 0.0
    %v3987 = vsel %vm2805, %v2904, 0.0
    %v3988 = vsel %vm2806, %v2906, 0.0
    %v3989 = vsel %vm2805, %v2908, 0.0
    %v3990 = vsel %vm2806, %v2910, 0.0
    %v3991 = vadd.f32 %v3975, %v3976
    %3992 = vadd.xlane.f32.xlu0 %v3991
    %v3993 = vpop.xlane.xlu0 %3992
    %v3994 = vadd.f32 %v3977, %v3978
    %3995 = vadd.xlane.f32.xlu0 %v3994
    %v3996 = vpop.xlane.xlu0 %3995
    %v3997 = vadd.f32 %v3979, %v3980
    %3998 = vadd.xlane.f32.xlu0 %v3997
    %v3999 = vpop.xlane.xlu0 %3998
    %v4000 = vadd.f32 %v3981, %v3982
    %4001 = vadd.xlane.f32.xlu0 %v4000
    %v4002 = vpop.xlane.xlu0 %4001
    %v4003 = vadd.f32 %v3983, %v3984
    %4004 = vadd.xlane.f32.xlu0 %v4003
    %v4005 = vpop.xlane.xlu0 %4004
    %v4006 = vadd.f32 %v3985, %v3986
    %4007 = vadd.xlane.f32.xlu0 %v4006
    %v4008 = vpop.xlane.xlu0 %4007
    %v4009 = vadd.f32 %v3987, %v3988
    %4010 = vadd.xlane.f32.xlu0 %v4009
    %v4011 = vpop.xlane.xlu0 %4010
    %v4012 = vadd.f32 %v3989, %v3990
    %4013 = vadd.xlane.f32.xlu0 %v4012
    %v4014 = vpop.xlane.xlu0 %4013
    %v4015 = vsel %vm2805, %v3993, %v3959
    %v4016 = vsel %vm2806, %v3993, %v3960
    %v4017 = vsel %vm2805, %v3996, %v3961
    %v4018 = vsel %vm2806, %v3996, %v3962
    %v4019 = vsel %vm2805, %v3999, %v3963
    %v4020 = vsel %vm2806, %v3999, %v3964
    %v4021 = vsel %vm2805, %v4002, %v3965
    %v4022 = vsel %vm2806, %v4002, %v3966
    %v4023 = vsel %vm2805, %v4005, %v3967
    %v4024 = vsel %vm2806, %v4005, %v3968
    %v4025 = vsel %vm2805, %v4008, %v3969
    %v4026 = vsel %vm2806, %v4008, %v3970
    %v4027 = vsel %vm2805, %v4011, %v3971
    %v4028 = vsel %vm2806, %v4011, %v3972
    %v4029 = vsel %vm2805, %v4014, %v3973
    %v4030 = vsel %vm2806, %v4014, %v3974
    %vm4031 = vcmp.gt.f32.partialorder %v4015, 0.0
    %vm4032 = vcmp.gt.f32.partialorder %v4016, 0.0
    %vm4033 = vcmp.gt.f32.partialorder %v4017, 0.0
    %vm4034 = vcmp.gt.f32.partialorder %v4018, 0.0
    %vm4035 = vcmp.gt.f32.partialorder %v4019, 0.0
    %vm4036 = vcmp.gt.f32.partialorder %v4020, 0.0
    %vm4037 = vcmp.gt.f32.partialorder %v4021, 0.0
    %vm4038 = vcmp.gt.f32.partialorder %v4022, 0.0
    %vm4039 = vcmp.gt.f32.partialorder %v4023, 0.0
    %vm4040 = vcmp.gt.f32.partialorder %v4024, 0.0
    %vm4041 = vcmp.gt.f32.partialorder %v4025, 0.0
    %vm4042 = vcmp.gt.f32.partialorder %v4026, 0.0
    %vm4043 = vcmp.gt.f32.partialorder %v4027, 0.0
    %vm4044 = vcmp.gt.f32.partialorder %v4028, 0.0
    %vm4045 = vcmp.gt.f32.partialorder %v4029, 0.0
    %vm4046 = vcmp.gt.f32.partialorder %v4030, 0.0
    %v4047 = vsel %vm4031, %v4015, 1.0
    %v4048 = vsel %vm4032, %v4016, 1.0
    %v4049 = vsel %vm4033, %v4017, 1.0
    %v4050 = vsel %vm4034, %v4018, 1.0
    %v4051 = vsel %vm4035, %v4019, 1.0
    %v4052 = vsel %vm4036, %v4020, 1.0
    %v4053 = vsel %vm4037, %v4021, 1.0
    %v4054 = vsel %vm4038, %v4022, 1.0
    %v4055 = vsel %vm4039, %v4023, 1.0
    %v4056 = vsel %vm4040, %v4024, 1.0
    %v4057 = vsel %vm4041, %v4025, 1.0
    %v4058 = vsel %vm4042, %v4026, 1.0
    %v4059 = vsel %vm4043, %v4027, 1.0
    %v4060 = vsel %vm4044, %v4028, 1.0
    %v4061 = vsel %vm4045, %v4029, 1.0
    %v4062 = vsel %vm4046, %v4030, 1.0
    %v4063 = vrcp.pop %v4047
    %v4064 = vrcp.pop %v4048
    %v4065 = vrcp.pop %v4049
    %v4066 = vrcp.pop %v4050
    %v4067 = vrcp.pop %v4051
    %v4068 = vrcp.pop %v4052
    %v4069 = vrcp.pop %v4053
    %v4070 = vrcp.pop %v4054
    %v4071 = vrcp.pop %v4055
    %v4072 = vrcp.pop %v4056
    %v4073 = vrcp.pop %v4057
    %v4074 = vrcp.pop %v4058
    %v4075 = vrcp.pop %v4059
    %v4076 = vrcp.pop %v4060
    %v4077 = vrcp.pop %v4061
    %v4078 = vrcp.pop %v4062
    %v4079 = vmul.f32 %v2880, %v4063
    %v4080 = vmul.f32 %v2882, %v4064
    %v4081 = vmul.f32 %v2884, %v4065
    %v4082 = vmul.f32 %v2886, %v4066
    %v4083 = vmul.f32 %v2888, %v4067
    %v4084 = vmul.f32 %v2890, %v4068
    %v4085 = vmul.f32 %v2892, %v4069
    %v4086 = vmul.f32 %v2894, %v4070
    %v4087 = vmul.f32 %v2896, %v4071
    %v4088 = vmul.f32 %v2898, %v4072
    %v4089 = vmul.f32 %v2900, %v4073
    %v4090 = vmul.f32 %v2902, %v4074
    %v4091 = vmul.f32 %v2904, %v4075
    %v4092 = vmul.f32 %v2906, %v4076
    %v4093 = vmul.f32 %v2908, %v4077
    %v4094 = vmul.f32 %v2910, %v4078
    %4095 = vst [vmem:[#allocation13] sm:$0xff] %v4079
    %4096 = vst [vmem:[#allocation13 + $0x8] sm:$0xff] %v4080
    %4097 = vst [vmem:[#allocation13 + $0x10] sm:$0xff] %v4081
    %4098 = vst [vmem:[#allocation13 + $0x18] sm:$0xff] %v4082
    %4099 = vst [vmem:[#allocation13 + $0x20] sm:$0xff] %v4083
    %4100 = vst [vmem:[#allocation13 + $0x28] sm:$0xff] %v4084
    %4101 = vst [vmem:[#allocation13 + $0x30] sm:$0xff] %v4085
    %4102 = vst [vmem:[#allocation13 + $0x38] sm:$0xff] %v4086
    %4103 = vst [vmem:[#allocation13 + $0x40] sm:$0xff] %v4087
    %4104 = vst [vmem:[#allocation13 + $0x48] sm:$0xff] %v4088
    %4105 = vst [vmem:[#allocation13 + $0x50] sm:$0xff] %v4089
    %4106 = vst [vmem:[#allocation13 + $0x58] sm:$0xff] %v4090
    %4107 = vst [vmem:[#allocation13 + $0x60] sm:$0xff] %v4091
    %4108 = vst [vmem:[#allocation13 + $0x68] sm:$0xff] %v4092
    %4109 = vst [vmem:[#allocation13 + $0x70] sm:$0xff] %v4093
    %4110 = vst [vmem:[#allocation13 + $0x78] sm:$0xff] %v4094
    // Predicated region
    $region70: #{tpu_custom_call.1} parent=1 // pred_check
      _
    $region71: #{tpu_custom_call.1} parent=1 // pred_check_branch
      %4112 = sbr.rel (0) target = $region73
    $region72: #{tpu_custom_call.1} parent=1 // pred_region
      %s4114 = ssub.s32 2048, 2048
      %4115 = vsyncadd [#allocation6], %s4114
      %s4116 = sshll.u32 [#allocation13], 4
      %s4117 = int_to_ptr.vmem [resolvable:$true] %s4116
      %4122 = dma.vmem_to_hbm [thread:$0]  %s4117, 2048, %s12, [#allocation6], 256, 256, 16
    $region73: #{tpu_custom_call.1} parent=1 // pred_fallthru
      _
    // Predicated region
    $region74: #{tpu_custom_call.1} parent=1 // pred_check
      _
    $region75: #{tpu_custom_call.1} parent=1 // pred_check_branch
      %4124 = sbr.rel (0) target = $region77
    $region76: #{tpu_custom_call.1} parent=1 // pred_region
      %s4126 = ssub.s32 128, 128
      %4127 = vsyncadd [#allocation15], %s4126
      %s4129 = sshll.u32 [#allocation14], 4
      %s4130 = int_to_ptr.vmem [resolvable:$true] %s4129
      %4132 = dma.vmem_to_hbm [thread:$0]  %s4130, 128, %s13, [#allocation15]
    $region77: #{tpu_custom_call.1} parent=1 // pred_fallthru
      _
    // Predicated region
    $region78: #{tpu_custom_call.1} parent=1 // pred_check
      _
    $region79: #{tpu_custom_call.1} parent=1 // pred_check_branch
      %4134 = sbr.rel (0) target = $region81
    $region80: #{tpu_custom_call.1} parent=1 // pred_region
      %s4136 = ssub.s32 128, 128
      %4137 = vsyncadd [#allocation15], %s4136
      %s4139 = sshll.u32 [#allocation16], 4
      %s4140 = int_to_ptr.vmem [resolvable:$true] %s4139
      %4142 = dma.vmem_to_hbm [thread:$0]  %s4140, 128, %s14, [#allocation15]
    $region81: #{tpu_custom_call.1} parent=1 // pred_fallthru
      _
    // Predicated region
    $region82: #{tpu_custom_call.1} parent=1 // pred_check
      _
    $region83: #{tpu_custom_call.1} parent=1 // pred_check_branch
      %4144 = sbr.rel (0) target = $region85
    $region84: #{tpu_custom_call.1} parent=1 // pred_region
      %4145 = dma.done [#allocation6], 2048
    $region85: #{tpu_custom_call.1} parent=1 // pred_fallthru
      _
    // Predicated region
    $region86: #{tpu_custom_call.1} parent=1 // pred_check
      _
    $region87: #{tpu_custom_call.1} parent=1 // pred_check_branch
      %4147 = sbr.rel (0) target = $region89
    $region88: #{tpu_custom_call.1} parent=1 // pred_region
      %4148 = dma.done [#allocation15], 128
    $region89: #{tpu_custom_call.1} parent=1 // pred_fallthru
      _
    // Predicated region
    $region90: #{tpu_custom_call.1} parent=1 // pred_check
      _
    $region91: #{tpu_custom_call.1} parent=1 // pred_check_branch
      %4150 = sbr.rel (0) target = $region93
    $region92: #{tpu_custom_call.1} parent=1 // pred_region
      %4151 = dma.done [#allocation15], 128
    $region93: #{tpu_custom_call.1} parent=1 // pred_fallthru
      _
    %4152 = vsyncpa [#allocation5], 1
    %4153 = vsyncpa [#allocation8], 1
    %4154 = vsyncpa [#allocation11], 1
    %4155 = vsyncpa [#allocation6], 1
    %4156 = vsyncpa [#allocation15], 1

</llo_original>
